<compile_context>
chip_gen: v5e
topology: v5e:2x2
jax: 0.10.0
libtpu: 0.0.40
codegen_flags: <defaults>
</compile_context>

<pallas_src>
import functools

import jax
import jax.numpy as jnp
from jax.experimental import pallas as pl
from jax.experimental.pallas import tpu as pltpu

LANE = 128
NEG_INF = -1e9


def _round_up(v, m):
    return ((v + m - 1) // m) * m


def choose_layout(num_nodes, *, tm_max=1024, tk_max=2048):
    """Pick padded node count and (row tile tm, reduction tile tk) for the A stream.

    tk (A's column / reduction tile) is as large as possible (capped at tk_max) so
    each DMA'd A-tile row is a multi-KiB contiguous burst; tm is capped at tm_max so
    accumulators stay small and large graphs keep >=2 row blocks for the 'parallel'
    axis (v7x 2 TCs).  Small graphs collapse to a single-step grid (tile == Np).
    """
    if num_nodes > tk_max:
        tk = tk_max
    else:
        tk = _round_up(num_nodes, 256)
    n_padded = _round_up(num_nodes, tk)
    if tk <= tm_max:
        tm = tk
    else:
        tm = 256
        for cand in (tm_max, 512, 256):
            if tk % cand == 0:
                tm = cand
                break
    return n_padded, tm, tk


# -------- layer 1 (fused epilogue): M2 = dinv * (ReLU(dinv*(S@M1) + b1) @ W2) --------
def _gcn_layer1_kernel(a_ref, m1_ref, w2_ref, b1_ref, dinv_ref, g_ref, acc_ref, *, tk):
    k = pl.program_id(1)

    @pl.when(k == 0)
    def _():
        acc_ref[...] = jnp.zeros_like(acc_ref)

    row0 = pl.multiple_of(k * tk, tk)
    a_bf16 = a_ref[...].astype(jnp.float32).astype(jnp.bfloat16)  # int8 -> bf16 in-register
    acc_ref[...] += jnp.dot(a_bf16, m1_ref[pl.ds(row0, tk), :],
                            preferred_element_type=jnp.float32)

    @pl.when(k == pl.num_programs(1) - 1)
    def _():
        dinv = dinv_ref[...]                                   # (tm, 1) f32
        h = jnp.maximum(dinv * acc_ref[...] + b1_ref[...], 0.0)
        # TODO(synk): training-mode dropout mask would be applied to `h` here.
        g = jnp.dot(h.astype(jnp.bfloat16), w2_ref[...],
                    preferred_element_type=jnp.float32)
        g_ref[...] = (dinv * g).astype(g_ref.dtype)            # pre-scaled for layer 2


# -------------------- layer 2: OUT = log_softmax(dinv*(S@M2) + b2) --------------------
def _gcn_layer2_kernel(a_ref, m2_ref, b2_ref, dinv_ref, out_ref, acc_ref, *, tk):
    k = pl.program_id(1)

    @pl.when(k == 0)
    def _():
        acc_ref[...] = jnp.zeros_like(acc_ref)

    row0 = pl.multiple_of(k * tk, tk)
    a_bf16 = a_ref[...].astype(jnp.float32).astype(jnp.bfloat16)
    acc_ref[...] += jnp.dot(a_bf16, m2_ref[pl.ds(row0, tk), :],
                            preferred_element_type=jnp.float32)

    @pl.when(k == pl.num_programs(1) - 1)
    def _():
        z = dinv_ref[...] * acc_ref[...] + b2_ref[...]         # padded class cols ~ -1e9
        m = jnp.max(z, axis=1, keepdims=True)
        s = z - m
        lse = jnp.log(jnp.sum(jnp.exp(s), axis=1, keepdims=True))
        out_ref[...] = (s - lse).astype(out_ref.dtype)


def prepare_adjacency(edge_index, num_nodes, n_padded):
    """Build (once, reused every forward) the padded structural adjacency S = A + I
    as int8 and the padded D^{-1/2} vector. Padded rows/cols are zero."""
    src, dst = edge_index[0], edge_index[1]
    s = jnp.zeros((num_nodes, num_nodes), jnp.float32).at[dst, src].set(1.0)
    s = s + jnp.eye(num_nodes, dtype=jnp.float32)
    deg = jnp.sum(s, axis=1)
    dinv = jnp.where(deg > 0, 1.0 / jnp.sqrt(deg), 0.0)
    s_p = jnp.zeros((n_padded, n_padded), jnp.int8)
    s_p = s_p.at[:num_nodes, :num_nodes].set(s.astype(jnp.int8))
    dinv_p = jnp.zeros((n_padded, 1), jnp.float32).at[:num_nodes, 0].set(dinv)
    return s_p, dinv_p


def gcn_base_forward(x, s_adj, dinv, w1, b1, w2, b2, *, tm, tk):
    """GCNbase eval forward: log_softmax(A_norm @ ReLU(A_norm @ (X W1) + b1) @ W2 + b2),
    with A_norm = D^{-1/2}(A+I)D^{-1/2} factored as dinv * (S @ (dinv * .))."""
    N, _ = x.shape
    Np = s_adj.shape[0]
    H = w1.shape[1]
    C = w2.shape[1]
    Hp = _round_up(H, LANE)
    Cp = _round_up(C, LANE)
    assert Np % tm == 0 and Np % tk == 0

    # Small dense operands (padded; computed in f32, stored bf16 where they hit the MXU).
    x_p = jnp.zeros((Np, x.shape[1]), jnp.float32).at[:N, :].set(x.astype(jnp.float32))
    w1_p = jnp.zeros((x.shape[1], Hp), jnp.float32).at[:, :H].set(w1.astype(jnp.float32))
    b1_p = jnp.zeros((1, Hp), jnp.float32).at[:, :H].set(
        b1.reshape(1, -1).astype(jnp.float32))
    w2_p = jnp.zeros((Hp, Cp), jnp.bfloat16).at[:H, :C].set(w2.astype(jnp.bfloat16))
    b2_p = jnp.full((1, Cp), NEG_INF, jnp.float32).at[:, :C].set(
        b2.reshape(1, -1).astype(jnp.float32))

    # Layer-1 dense operand, pre-scaled by D^{-1/2}: M1 = dinv * (X @ W1). VMEM-resident.
    m1 = (dinv * jnp.dot(x_p, w1_p)).astype(jnp.bfloat16)

    grid = (Np // tm, Np // tk)

    vmem_est = (
        2 * tm * tk * 1            # int8 A tiles, double-buffered
        + 2 * Np * Hp * 2          # resident M1 / M2 (worst-case double-buffered)
        + 2 * Hp * Cp * 2          # resident W2
        + 2 * tm * Cp * 4          # output tiles
        + tm * max(Hp, Cp) * 4     # f32 accumulator
        + 4 * tm * 4 + 4 * Cp * 4  # dinv / bias tiles
    )
    vmem_limit = int(min(48 * 1024 * 1024, max(32 * 1024 * 1024, 2 * vmem_est)))
    cparams = pltpu.CompilerParams(
        dimension_semantics=("parallel", "arbitrary"),
        vmem_limit_bytes=vmem_limit,
    )

    # ---- layer 1 ----
    m2 = pl.pallas_call(
        functools.partial(_gcn_layer1_kernel, tk=tk),
        out_shape=jax.ShapeDtypeStruct((Np, Cp), jnp.bfloat16),
        grid_spec=pltpu.PrefetchScalarGridSpec(
            num_scalar_prefetch=0,
            grid=grid,
            in_specs=[
                pl.BlockSpec((tm, tk), lambda i, k: (i, k)),    # S tile (streamed, int8)
                pl.BlockSpec((Np, Hp), lambda i, k: (0, 0)),    # M1 (fully VMEM-resident)
                pl.BlockSpec((Hp, Cp), lambda i, k: (0, 0)),    # W2 resident
                pl.BlockSpec((1, Hp), lambda i, k: (0, 0)),     # b1 resident
                pl.BlockSpec((tm, 1), lambda i, k: (i, 0)),     # dinv rows for block i
            ],
            out_specs=pl.BlockSpec((tm, Cp), lambda i, k: (i, 0)),
            scratch_shapes=[pltpu.VMEM((tm, Hp), jnp.float32)],
        ),
        compiler_params=cparams,
    )(s_adj, m1, w2_p, b1_p, dinv)

    # ---- layer 2 ----
    out_p = pl.pallas_call(
        functools.partial(_gcn_layer2_kernel, tk=tk),
        out_shape=jax.ShapeDtypeStruct((Np, Cp), jnp.float32),
        grid_spec=pltpu.PrefetchScalarGridSpec(
            num_scalar_prefetch=0,
            grid=grid,
            in_specs=[
                pl.BlockSpec((tm, tk), lambda i, k: (i, k)),    # S tile (streamed, int8)
                pl.BlockSpec((Np, Cp), lambda i, k: (0, 0)),    # M2 (fully VMEM-resident)
                pl.BlockSpec((1, Cp), lambda i, k: (0, 0)),     # b2 resident
                pl.BlockSpec((tm, 1), lambda i, k: (i, 0)),     # dinv rows for block i
            ],
            out_specs=pl.BlockSpec((tm, Cp), lambda i, k: (i, 0)),
            scratch_shapes=[pltpu.VMEM((tm, Cp), jnp.float32)],
        ),
        compiler_params=cparams,
    )(s_adj, m2, b2_p, dinv)

    return out_p[:N, :C]


# ------------------------------- reference / test utils -------------------------------
def build_normalized_adj(edge_index, num_nodes):
    """Dense D^{-1/2} (A + I) D^{-1/2} matching GCNConv's symmetric normalization."""
    src, dst = edge_index[0], edge_index[1]
    A = jnp.zeros((num_nodes, num_nodes), jnp.float32).at[dst, src].set(1.0)
    A = A + jnp.eye(num_nodes, dtype=jnp.float32)
    deg = jnp.sum(A, axis=1)
    dinv = jnp.where(deg > 0, 1.0 / jnp.sqrt(deg), 0.0)
    return A * dinv[:, None] * dinv[None, :]


def glorot(key, shape):
    fan_in, fan_out = shape
    limit = jnp.sqrt(6.0 / (fan_in + fan_out))
    return jax.random.uniform(key, shape, jnp.float32, -limit, limit)


def gcn_reference(x, adj, w1, b1, w2, b2):
    h = jnp.maximum(adj @ (x @ w1) + b1, 0.0)
    z = adj @ (h @ w2) + b2
    return jax.nn.log_softmax(z, axis=1)


def _ring_graph(n, offsets=(1, 7)):
    idx = jnp.arange(n, dtype=jnp.int32)
    srcs, dsts = [], []
    for off in offsets:
        srcs += [idx, (idx + off) % n]
        dsts += [(idx + off) % n, idx]
    return jnp.stack([jnp.concatenate(srcs), jnp.concatenate(dsts)], axis=0)


if __name__ == "__main__":
    # Small shapes consistent with the module (graph of a few hundred nodes).
    N = 300           # nodes (pads to 512 -> single-step (1, 1) grid)
    F_IN = 8          # args.num_features
    HID = 32          # args.hidden
    NUM_CLASSES = 8   # args.num_classes

    key = jax.random.PRNGKey(0)
    k_x, k_w1, k_w2 = jax.random.split(key, 3)

    x = jax.random.normal(k_x, (N, F_IN), jnp.float32)
    edge_index = _ring_graph(N)

    w1 = glorot(k_w1, (F_IN, HID))
    b1 = jnp.zeros((1, HID), jnp.float32)
    w2 = glorot(k_w2, (HID, NUM_CLASSES))
    b2 = jnp.zeros((1, NUM_CLASSES), jnp.float32)

    Np, tm, tk = choose_layout(N)
    s_p, dinv_p = prepare_adjacency(edge_index, N, Np)   # built once, reused per forward

    out = gcn_base_forward(x, s_p, dinv_p, w1, b1, w2, b2, tm=tm, tk=tk)
    out = jax.block_until_ready(out)

    adj_ref = build_normalized_adj(edge_index, N)
    ref = gcn_reference(x, adj_ref, w1, b1, w2, b2)

    assert out.shape == (N, NUM_CLASSES)
    row_sums = jnp.sum(jnp.exp(out), axis=1)
    assert bool(jnp.all(jnp.abs(row_sums - 1.0) < 1e-3))
    err = float(jnp.max(jnp.abs(out - ref)))
    assert err < 5e-2, err

    # Tiny-graph smoke test (N << 256): exercises node padding + single-step grid.
    N2 = 16
    x2 = jax.random.normal(jax.random.PRNGKey(1), (N2, F_IN), jnp.float32)
    ei2 = _ring_graph(N2, offsets=(1,))
    Np2, tm2, tk2 = choose_layout(N2)
    s2, dinv2 = prepare_adjacency(ei2, N2, Np2)
    out2 = jax.block_until_ready(
        gcn_base_forward(x2, s2, dinv2, w1, b1, w2, b2, tm=tm2, tk=tk2))
    ref2 = gcn_reference(x2, build_normalized_adj(ei2, N2), w1, b1, w2, b2)
    assert out2.shape == (N2, NUM_CLASSES)
    assert bool(jnp.max(jnp.abs(out2 - ref2)) < 5e-2)

    print("KERNEL_OK")
</pallas_src>

<mosaic_0001>
module attributes {stable_mosaic.version = 11 : i64} {
  func.func @_gcn_layer1_kernel(%arg0: i32, %arg1: i32, %arg2: memref<512x512xi8, #tpu.memory_space<vmem>>, %arg3: memref<512x128xbf16, #tpu.memory_space<vmem>>, %arg4: memref<128x128xbf16, #tpu.memory_space<vmem>>, %arg5: memref<1x128xf32, #tpu.memory_space<vmem>>, %arg6: memref<512x1xf32, #tpu.memory_space<vmem>>, %arg7: memref<512x128xbf16, #tpu.memory_space<vmem>>, %arg8: memref<512x128xf32, #tpu.memory_space<vmem>>) attributes {dimension_semantics = [#tpu.dimension_semantics<parallel>, #tpu.dimension_semantics<arbitrary>], iteration_bounds = array<i64: 1, 1>, scalar_prefetch = 0 : i64, scratch_operands = 1 : i64, tpu.core_type = #tpu.core_type<tc>, window_params = [{transform_indices = @transform_0, window_bounds = array<i64: 512, 512>}, {pipeline_mode = #tpu.pipeline_mode<synchronous>, transform_indices = @transform_1, window_bounds = array<i64: 512, 128>}, {pipeline_mode = #tpu.pipeline_mode<synchronous>, transform_indices = @transform_2, window_bounds = array<i64: 128, 128>}, {pipeline_mode = #tpu.pipeline_mode<synchronous>, transform_indices = @transform_3, window_bounds = array<i64: 1, 128>}, {transform_indices = @transform_4, window_bounds = array<i64: 512, 1>}, {transform_indices = @transform_5, window_bounds = array<i64: 512, 128>}]} {
    %c0_i32 = arith.constant 0 : i32
    %0 = arith.cmpi eq, %arg1, %c0_i32 : i32
    %1 = arith.extui %0 : i1 to i32
    %c0_i32_0 = arith.constant 0 : i32
    %2 = arith.cmpi ne, %1, %c0_i32_0 : i32
    scf.if %2 {
      %cst_9 = arith.constant 0.000000e+00 : f32
      %17 = vector.broadcast %cst_9 : f32 to vector<512x128xf32>
      %c0_10 = arith.constant 0 : index
      %c0_11 = arith.constant 0 : index
      %18 = vector.load %arg8[%c0_10, %c0_11] : memref<512x128xf32, #tpu.memory_space<vmem>>, vector<512x128xf32>
      tpu.vector_store %arg8[%c0_10, %c0_11], %17 {strides = array<i32>} : memref<512x128xf32, #tpu.memory_space<vmem>>, vector<512x128xf32>,
    } else {
    }
    %c512_i32 = arith.constant 512 : i32
    %3 = arith.muli %arg1, %c512_i32 : i32
    %4 = tpu.assume_multiple %3, 512 : i32
    %c0 = arith.constant 0 : index
    %c0_1 = arith.constant 0 : index
    %5 = vector.load %arg2[%c0, %c0_1] : memref<512x512xi8, #tpu.memory_space<vmem>>, vector<512x512xi8>
    %6 = arith.sitofp %5 : vector<512x512xi8> to vector<512x512xf32>
    %7 = arith.truncf %6 : vector<512x512xf32> to vector<512x512xbf16>
    %c0_2 = arith.constant 0 : index
    %c0_3 = arith.constant 0 : index
    %8 = vector.load %arg8[%c0_2, %c0_3] : memref<512x128xf32, #tpu.memory_space<vmem>>, vector<512x128xf32>
    %9 = arith.index_cast %4 : i32 to index
    %c0_4 = arith.constant 0 : index
    %10 = vector.load %arg3[%9, %c0_4] : memref<512x128xbf16, #tpu.memory_space<vmem>>, vector<512x128xbf16>
    %cst = arith.constant dense<0.000000e+00> : vector<512x128xf32>
    %11 = tpu.matmul %7, %10, %cst {dimension_numbers = #tpu.dot_dimension_numbers<[1], [0], [0], [1], [0, 0, 1, 1], [], []>} : vector<512x512xbf16>, vector<512x128xbf16>, vector<512x128xf32> -> vector<512x128xf32>
    %12 = arith.addf %8, %11 : vector<512x128xf32>
    %c0_5 = arith.constant 0 : index
    %c0_6 = arith.constant 0 : index
    %13 = vector.load %arg8[%c0_5, %c0_6] : memref<512x128xf32, #tpu.memory_space<vmem>>, vector<512x128xf32>
    tpu.vector_store %arg8[%c0_5, %c0_6], %12 {strides = array<i32>} : memref<512x128xf32, #tpu.memory_space<vmem>>, vector<512x128xf32>,
    %c0_i32_7 = arith.constant 0 : i32
    %14 = arith.cmpi eq, %arg1, %c0_i32_7 : i32
    %15 = arith.extui %14 : i1 to i32
    %c0_i32_8 = arith.constant 0 : i32
    %16 = arith.cmpi ne, %15, %c0_i32_8 : i32
    scf.if %16 {
      %c0_9 = arith.constant 0 : index
      %c0_10 = arith.constant 0 : index
      %17 = vector.load %arg6[%c0_9, %c0_10] : memref<512x1xf32, #tpu.memory_space<vmem>>, vector<512x1xf32>
      %c0_11 = arith.constant 0 : index
      %c0_12 = arith.constant 0 : index
      %18 = vector.load %arg8[%c0_11, %c0_12] : memref<512x128xf32, #tpu.memory_space<vmem>>, vector<512x128xf32>
      %19 = vector.broadcast %17 : vector<512x1xf32> to vector<512x128xf32>
      %20 = arith.mulf %19, %18 : vector<512x128xf32>
      %c0_13 = arith.constant 0 : index
      %c0_14 = arith.constant 0 : index
      %21 = vector.load %arg5[%c0_13, %c0_14] : memref<1x128xf32, #tpu.memory_space<vmem>>, vector<1x128xf32>
      %22 = vector.broadcast %21 : vector<1x128xf32> to vector<512x128xf32>
      %23 = arith.addf %20, %22 : vector<512x128xf32>
      %cst_15 = arith.constant 0.000000e+00 : f32
      %24 = vector.broadcast %cst_15 : f32 to vector<512x128xf32>
      %25 = arith.maximumf %23, %24 : vector<512x128xf32>
      %26 = arith.truncf %25 : vector<512x128xf32> to vector<512x128xbf16>
      %c0_16 = arith.constant 0 : index
      %c0_17 = arith.constant 0 : index
      %27 = vector.load %arg4[%c0_16, %c0_17] : memref<128x128xbf16, #tpu.memory_space<vmem>>, vector<128x128xbf16>
      %cst_18 = arith.constant dense<0.000000e+00> : vector<512x128xf32>
      %28 = tpu.matmul %26, %27, %cst_18 {dimension_numbers = #tpu.dot_dimension_numbers<[1], [0], [0], [1], [0, 0, 1, 1], [], []>} : vector<512x128xbf16>, vector<128x128xbf16>, vector<512x128xf32> -> vector<512x128xf32>
      %29 = vector.broadcast %17 : vector<512x1xf32> to vector<512x128xf32>
      %30 = arith.mulf %29, %28 : vector<512x128xf32>
      %31 = arith.truncf %30 : vector<512x128xf32> to vector<512x128xbf16>
      %c0_19 = arith.constant 0 : index
      %c0_20 = arith.constant 0 : index
      %32 = vector.load %arg7[%c0_19, %c0_20] : memref<512x128xbf16, #tpu.memory_space<vmem>>, vector<512x128xbf16>
      tpu.vector_store %arg7[%c0_19, %c0_20], %31 {strides = array<i32>} : memref<512x128xbf16, #tpu.memory_space<vmem>>, vector<512x128xbf16>,
    } else {
    }
    return
  }
  func.func @transform_0(%arg0: i32, %arg1: i32) -> (i32, i32) {
    %c0_i32 = arith.constant 0 : i32
    return %arg0, %arg1 : i32, i32
  }
  func.func @transform_1(%arg0: i32, %arg1: i32) -> (i32, i32) {
    %c0_i32 = arith.constant 0 : i32
    %c0_i32_0 = arith.constant 0 : i32
    %c0_i32_1 = arith.constant 0 : i32
    return %c0_i32, %c0_i32_0 : i32, i32
  }
  func.func @transform_2(%arg0: i32, %arg1: i32) -> (i32, i32) {
    %c0_i32 = arith.constant 0 : i32
    %c0_i32_0 = arith.constant 0 : i32
    %c0_i32_1 = arith.constant 0 : i32
    return %c0_i32, %c0_i32_0 : i32, i32
  }
  func.func @transform_3(%arg0: i32, %arg1: i32) -> (i32, i32) {
    %c0_i32 = arith.constant 0 : i32
    %c0_i32_0 = arith.constant 0 : i32
    %c0_i32_1 = arith.constant 0 : i32
    return %c0_i32, %c0_i32_0 : i32, i32
  }
  func.func @transform_4(%arg0: i32, %arg1: i32) -> (i32, i32) {
    %c0_i32 = arith.constant 0 : i32
    %c0_i32_0 = arith.constant 0 : i32
    return %arg0, %c0_i32 : i32, i32
  }
  func.func @transform_5(%arg0: i32, %arg1: i32) -> (i32, i32) {
    %c0_i32 = arith.constant 0 : i32
    %c0_i32_0 = arith.constant 0 : i32
    return %arg0, %c0_i32 : i32, i32
  }
}

</mosaic_0001>

<llo_original>
// kernel: tpu_custom_call.1
$region0: #{tpu_custom_call.1}
  #allocation0 [shape = 'u32[]', space=smem, size = 0x4, offset = 0x4, fixed_abs, tag = 'smem constant byte address 0x4 - core index']
  #allocation1 [shape = 'u32[72,128]{1,0:T(1,128)}', space=vmem, size = 0x9000, scoped, tag = 'internal scratch']
  #allocation2 [shape = 'f32[512,128]{1,0:T(8,128)}', space=vmem, size = 0x40000, scoped, tag = 'scratch operand']
  %s0 = inlined_call_operand.vmem [shape: s8[512,512], index: 0, kind: input, shape index: {}]
  %s1 = inlined_call_operand.hbm [shape: bf16[512,128], index: 1, kind: input, shape index: {}]
  %s2 = inlined_call_operand.hbm [shape: bf16[128,128], index: 2, kind: input, shape index: {}]
  %s3 = inlined_call_operand.vmem [shape: f32[1,128], index: 3, kind: input, shape index: {}]
  %s4 = inlined_call_operand.vmem [shape: f32[512,1], index: 4, kind: input, shape index: {}]
  %s5 = inlined_call_operand.hbm [shape: bf16[512,128], index: 5, kind: output, shape index: {}]
  %s6 = sld [smem:[#allocation0]]
  $region46: #{tpu_custom_call.1} parent=0
    _
  %s8 = ssub.s32 1, %s6
  %s9 = scalar_select 0, %s8, %s6
  $region1: #{tpu_custom_call.1} parent=0
    #allocation3 [shape = 'u8[131072]{0}', space=vmem, size = 0x20000, scoped, tag = 'input window, operand 1, single buffered']
    #allocation4 [shape = 's32[1]{0}', space=sflag, size = 0x4, scoped, tag = 'scoped memory for tpu_custom_call.1']
    #allocation5 [shape = 's32[1]{0}', space=sflag, size = 0x4, scoped, tag = 'scoped memory for tpu_custom_call.1']
    #allocation6 [shape = 'u8[32768]{0}', space=vmem, size = 0x8000, scoped, tag = 'input window, operand 2, single buffered']
    #allocation7 [shape = 's32[1]{0}', space=sflag, size = 0x4, scoped, tag = 'scoped memory for tpu_custom_call.1']
    #allocation8 [shape = 'u8[131072]{0}', space=vmem, size = 0x20000, scoped, tag = 'output window, operand 0, single buffered']
    %10 = vsyncpa [#allocation4], 0
    %11 = vsyncpa [#allocation7], 0
    %12 = vsyncpa [#allocation5], 0
    // Predicated region
    $region2: #{tpu_custom_call.1} parent=1 // pred_check
      _
    $region3: #{tpu_custom_call.1} parent=1 // pred_check_branch
      %14 = sbr.rel (0) target = $region5
    $region4: #{tpu_custom_call.1} parent=1 // pred_region
      _
    $region5: #{tpu_custom_call.1} parent=1 // pred_fallthru
      _
    // Predicated region
    $region6: #{tpu_custom_call.1} parent=1 // pred_check
      _
    $region7: #{tpu_custom_call.1} parent=1 // pred_check_branch
      %16 = sbr.rel (0) target = $region9
    $region8: #{tpu_custom_call.1} parent=1 // pred_region
      %18 = vsyncadd [#allocation4], 0
      %s19 = sshll.u32 %s1, 4
      %s20 = int_to_ptr.hbm [resolvable:$true] %s19
      %s21 = sshll.u32 [#allocation3], 4
      %s22 = int_to_ptr.vmem [resolvable:$true] %s21
      %27 = dma.hbm_to_vmem [thread:$0]  %s20, 4096, %s22, [#allocation4], 64, 64, 4
    $region9: #{tpu_custom_call.1} parent=1 // pred_fallthru
      _
    // Predicated region
    $region10: #{tpu_custom_call.1} parent=1 // pred_check
      _
    $region11: #{tpu_custom_call.1} parent=1 // pred_check_branch
      %29 = sbr.rel (0) target = $region13
    $region12: #{tpu_custom_call.1} parent=1 // pred_region
      %31 = vsyncadd [#allocation7], 0
      %s32 = sshll.u32 %s2, 4
      %s33 = int_to_ptr.hbm [resolvable:$true] %s32
      %s34 = sshll.u32 [#allocation6], 4
      %s35 = int_to_ptr.vmem [resolvable:$true] %s34
      %40 = dma.hbm_to_vmem [thread:$0]  %s33, 1024, %s35, [#allocation7], 64, 64, 4
    $region13: #{tpu_custom_call.1} parent=1 // pred_fallthru
      _
    // Predicated region
    $region14: #{tpu_custom_call.1} parent=1 // pred_check
      _
    $region15: #{tpu_custom_call.1} parent=1 // pred_check_branch
      %42 = sbr.rel (0) target = $region17
    $region16: #{tpu_custom_call.1} parent=1 // pred_region
      _
    $region17: #{tpu_custom_call.1} parent=1 // pred_fallthru
      _
    // Predicated region
    $region18: #{tpu_custom_call.1} parent=1 // pred_check
      _
    $region19: #{tpu_custom_call.1} parent=1 // pred_check_branch
      %44 = sbr.rel (0) target = $region21
    $region20: #{tpu_custom_call.1} parent=1 // pred_region
      _
    $region21: #{tpu_custom_call.1} parent=1 // pred_fallthru
      _
    // Predicated region
    $region22: #{tpu_custom_call.1} parent=1 // pred_check
      _
    $region23: #{tpu_custom_call.1} parent=1 // pred_check_branch
      %46 = sbr.rel (0) target = $region25
    $region24: #{tpu_custom_call.1} parent=1 // pred_region
      %48 = dma.done [#allocation4], 4096
    $region25: #{tpu_custom_call.1} parent=1 // pred_fallthru
      _
    // Predicated region
    $region26: #{tpu_custom_call.1} parent=1 // pred_check
      _
    $region27: #{tpu_custom_call.1} parent=1 // pred_check_branch
      %50 = sbr.rel (0) target = $region29
    $region28: #{tpu_custom_call.1} parent=1 // pred_region
      %52 = dma.done [#allocation7], 1024
    $region29: #{tpu_custom_call.1} parent=1 // pred_fallthru
      _
    %p53 = scmp.eq.s32.totalorder 0, 0
    // Predicated region
    $region30: #{tpu_custom_call.1} parent=1 // pred_check
      %p54 = pneg %p53
    $region31: #{tpu_custom_call.1} parent=1 // pred_check_branch
      %56 = sbr.rel (%p54) target = $region33
    $region32: #{tpu_custom_call.1} parent=1 // pred_region
      %57 = vst [vmem:[#allocation2] sm:$0xff] 0.0
      %58 = vst [vmem:[#allocation2 + $0x8] sm:$0xff] 0.0
      %59 = vst [vmem:[#allocation2 + $0x10] sm:$0xff] 0.0
      %60 = vst [vmem:[#allocation2 + $0x18] sm:$0xff] 0.0
      %61 = vst [vmem:[#allocation2 + $0x20] sm:$0xff] 0.0
      %62 = vst [vmem:[#allocation2 + $0x28] sm:$0xff] 0.0
      %63 = vst [vmem:[#allocation2 + $0x30] sm:$0xff] 0.0
      %64 = vst [vmem:[#allocation2 + $0x38] sm:$0xff] 0.0
      %65 = vst [vmem:[#allocation2 + $0x40] sm:$0xff] 0.0
      %66 = vst [vmem:[#allocation2 + $0x48] sm:$0xff] 0.0
      %67 = vst [vmem:[#allocation2 + $0x50] sm:$0xff] 0.0
      %68 = vst [vmem:[#allocation2 + $0x58] sm:$0xff] 0.0
      %69 = vst [vmem:[#allocation2 + $0x60] sm:$0xff] 0.0
      %70 = vst [vmem:[#allocation2 + $0x68] sm:$0xff] 0.0
      %71 = vst [vmem:[#allocation2 + $0x70] sm:$0xff] 0.0
      %72 = vst [vmem:[#allocation2 + $0x78] sm:$0xff] 0.0
      %73 = vst [vmem:[#allocation2 + $0x80] sm:$0xff] 0.0
      %74 = vst [vmem:[#allocation2 + $0x88] sm:$0xff] 0.0
      %75 = vst [vmem:[#allocation2 + $0x90] sm:$0xff] 0.0
      %76 = vst [vmem:[#allocation2 + $0x98] sm:$0xff] 0.0
      %77 = vst [vmem:[#allocation2 + $0xa0] sm:$0xff] 0.0
      %78 = vst [vmem:[#allocation2 + $0xa8] sm:$0xff] 0.0
      %79 = vst [vmem:[#allocation2 + $0xb0] sm:$0xff] 0.0
      %80 = vst [vmem:[#allocation2 + $0xb8] sm:$0xff] 0.0
      %81 = vst [vmem:[#allocation2 + $0xc0] sm:$0xff] 0.0
      %82 = vst [vmem:[#allocation2 + $0xc8] sm:$0xff] 0.0
      %83 = vst [vmem:[#allocation2 + $0xd0] sm:$0xff] 0.0
      %84 = vst [vmem:[#allocation2 + $0xd8] sm:$0xff] 0.0
      %85 = vst [vmem:[#allocation2 + $0xe0] sm:$0xff] 0.0
      %86 = vst [vmem:[#allocation2 + $0xe8] sm:$0xff] 0.0
      %87 = vst [vmem:[#allocation2 + $0xf0] sm:$0xff] 0.0
      %88 = vst [vmem:[#allocation2 + $0xf8] sm:$0xff] 0.0
      %89 = vst [vmem:[#allocation2 + $0x100] sm:$0xff] 0.0
      %90 = vst [vmem:[#allocation2 + $0x108] sm:$0xff] 0.0
      %91 = vst [vmem:[#allocation2 + $0x110] sm:$0xff] 0.0
      %92 = vst [vmem:[#allocation2 + $0x118] sm:$0xff] 0.0
      %93 = vst [vmem:[#allocation2 + $0x120] sm:$0xff] 0.0
      %94 = vst [vmem:[#allocation2 + $0x128] sm:$0xff] 0.0
      %95 = vst [vmem:[#allocation2 + $0x130] sm:$0xff] 0.0
      %96 = vst [vmem:[#allocation2 + $0x138] sm:$0xff] 0.0
      %97 = vst [vmem:[#allocation2 + $0x140] sm:$0xff] 0.0
      %98 = vst [vmem:[#allocation2 + $0x148] sm:$0xff] 0.0
      %99 = vst [vmem:[#allocation2 + $0x150] sm:$0xff] 0.0
      %100 = vst [vmem:[#allocation2 + $0x158] sm:$0xff] 0.0
      %101 = vst [vmem:[#allocation2 + $0x160] sm:$0xff] 0.0
      %102 = vst [vmem:[#allocation2 + $0x168] sm:$0xff] 0.0
      %103 = vst [vmem:[#allocation2 + $0x170] sm:$0xff] 0.0
      %104 = vst [vmem:[#allocation2 + $0x178] sm:$0xff] 0.0
      %105 = vst [vmem:[#allocation2 + $0x180] sm:$0xff] 0.0
      %106 = vst [vmem:[#allocation2 + $0x188] sm:$0xff] 0.0
      %107 = vst [vmem:[#allocation2 + $0x190] sm:$0xff] 0.0
      %108 = vst [vmem:[#allocation2 + $0x198] sm:$0xff] 0.0
      %109 = vst [vmem:[#allocation2 + $0x1a0] sm:$0xff] 0.0
      %110 = vst [vmem:[#allocation2 + $0x1a8] sm:$0xff] 0.0
      %111 = vst [vmem:[#allocation2 + $0x1b0] sm:$0xff] 0.0
      %112 = vst [vmem:[#allocation2 + $0x1b8] sm:$0xff] 0.0
      %113 = vst [vmem:[#allocation2 + $0x1c0] sm:$0xff] 0.0
      %114 = vst [vmem:[#allocation2 + $0x1c8] sm:$0xff] 0.0
      %115 = vst [vmem:[#allocation2 + $0x1d0] sm:$0xff] 0.0
      %116 = vst [vmem:[#allocation2 + $0x1d8] sm:$0xff] 0.0
      %117 = vst [vmem:[#allocation2 + $0x1e0] sm:$0xff] 0.0
      %118 = vst [vmem:[#allocation2 + $0x1e8] sm:$0xff] 0.0
      %119 = vst [vmem:[#allocation2 + $0x1f0] sm:$0xff] 0.0
      %120 = vst [vmem:[#allocation2 + $0x1f8] sm:$0xff] 0.0
    $region33: #{tpu_custom_call.1} parent=1 // pred_fallthru
      _
    %s121 = smul.u32 0, 512
    %v122 = vld [vmem:[%s0] sm:$0xff]
    %v123 = vld [vmem:[%s0 + $0x8] sm:$0xff]
    %v124 = vld [vmem:[%s0 + $0x10] sm:$0xff]
    %v125 = vld [vmem:[%s0 + $0x18] sm:$0xff]
    %v126 = vld [vmem:[%s0 + $0x20] sm:$0xff]
    %v127 = vld [vmem:[%s0 + $0x28] sm:$0xff]
    %v128 = vld [vmem:[%s0 + $0x30] sm:$0xff]
    %v129 = vld [vmem:[%s0 + $0x38] sm:$0xff]
    %v130 = vld [vmem:[%s0 + $0x40] sm:$0xff]
    %v131 = vld [vmem:[%s0 + $0x48] sm:$0xff]
    %v132 = vld [vmem:[%s0 + $0x50] sm:$0xff]
    %v133 = vld [vmem:[%s0 + $0x58] sm:$0xff]
    %v134 = vld [vmem:[%s0 + $0x60] sm:$0xff]
    %v135 = vld [vmem:[%s0 + $0x68] sm:$0xff]
    %v136 = vld [vmem:[%s0 + $0x70] sm:$0xff]
    %v137 = vld [vmem:[%s0 + $0x78] sm:$0xff]
    %v138 = vld [vmem:[%s0 + $0x80] sm:$0xff]
    %v139 = vld [vmem:[%s0 + $0x88] sm:$0xff]
    %v140 = vld [vmem:[%s0 + $0x90] sm:$0xff]
    %v141 = vld [vmem:[%s0 + $0x98] sm:$0xff]
    %v142 = vld [vmem:[%s0 + $0xa0] sm:$0xff]
    %v143 = vld [vmem:[%s0 + $0xa8] sm:$0xff]
    %v144 = vld [vmem:[%s0 + $0xb0] sm:$0xff]
    %v145 = vld [vmem:[%s0 + $0xb8] sm:$0xff]
    %v146 = vld [vmem:[%s0 + $0xc0] sm:$0xff]
    %v147 = vld [vmem:[%s0 + $0xc8] sm:$0xff]
    %v148 = vld [vmem:[%s0 + $0xd0] sm:$0xff]
    %v149 = vld [vmem:[%s0 + $0xd8] sm:$0xff]
    %v150 = vld [vmem:[%s0 + $0xe0] sm:$0xff]
    %v151 = vld [vmem:[%s0 + $0xe8] sm:$0xff]
    %v152 = vld [vmem:[%s0 + $0xf0] sm:$0xff]
    %v153 = vld [vmem:[%s0 + $0xf8] sm:$0xff]
    %v154 = vld [vmem:[%s0 + $0x100] sm:$0xff]
    %v155 = vld [vmem:[%s0 + $0x108] sm:$0xff]
    %v156 = vld [vmem:[%s0 + $0x110] sm:$0xff]
    %v157 = vld [vmem:[%s0 + $0x118] sm:$0xff]
    %v158 = vld [vmem:[%s0 + $0x120] sm:$0xff]
    %v159 = vld [vmem:[%s0 + $0x128] sm:$0xff]
    %v160 = vld [vmem:[%s0 + $0x130] sm:$0xff]
    %v161 = vld [vmem:[%s0 + $0x138] sm:$0xff]
    %v162 = vld [vmem:[%s0 + $0x140] sm:$0xff]
    %v163 = vld [vmem:[%s0 + $0x148] sm:$0xff]
    %v164 = vld [vmem:[%s0 + $0x150] sm:$0xff]
    %v165 = vld [vmem:[%s0 + $0x158] sm:$0xff]
    %v166 = vld [vmem:[%s0 + $0x160] sm:$0xff]
    %v167 = vld [vmem:[%s0 + $0x168] sm:$0xff]
    %v168 = vld [vmem:[%s0 + $0x170] sm:$0xff]
    %v169 = vld [vmem:[%s0 + $0x178] sm:$0xff]
    %v170 = vld [vmem:[%s0 + $0x180] sm:$0xff]
    %v171 = vld [vmem:[%s0 + $0x188] sm:$0xff]
    %v172 = vld [vmem:[%s0 + $0x190] sm:$0xff]
    %v173 = vld [vmem:[%s0 + $0x198] sm:$0xff]
    %v174 = vld [vmem:[%s0 + $0x1a0] sm:$0xff]
    %v175 = vld [vmem:[%s0 + $0x1a8] sm:$0xff]
    %v176 = vld [vmem:[%s0 + $0x1b0] sm:$0xff]
    %v177 = vld [vmem:[%s0 + $0x1b8] sm:$0xff]
    %v178 = vld [vmem:[%s0 + $0x1c0] sm:$0xff]
    %v179 = vld [vmem:[%s0 + $0x1c8] sm:$0xff]
    %v180 = vld [vmem:[%s0 + $0x1d0] sm:$0xff]
    %v181 = vld [vmem:[%s0 + $0x1d8] sm:$0xff]
    %v182 = vld [vmem:[%s0 + $0x1e0] sm:$0xff]
    %v183 = vld [vmem:[%s0 + $0x1e8] sm:$0xff]
    %v184 = vld [vmem:[%s0 + $0x1f0] sm:$0xff]
    %v185 = vld [vmem:[%s0 + $0x1f8] sm:$0xff]
    %v186 = vunpack.c.0.s8 %v122
    %v187 = vunpack.c.0.s8 %v123
    %v188 = vunpack.c.0.s8 %v124
    %v189 = vunpack.c.0.s8 %v125
    %v190 = vunpack.c.1.s8 %v122
    %v191 = vunpack.c.1.s8 %v123
    %v192 = vunpack.c.1.s8 %v124
    %v193 = vunpack.c.1.s8 %v125
    %v194 = vunpack.c.2.s8 %v122
    %v195 = vunpack.c.2.s8 %v123
    %v196 = vunpack.c.2.s8 %v124
    %v197 = vunpack.c.2.s8 %v125
    %v198 = vunpack.c.3.s8 %v122
    %v199 = vunpack.c.3.s8 %v123
    %v200 = vunpack.c.3.s8 %v124
    %v201 = vunpack.c.3.s8 %v125
    %v202 = vunpack.c.0.s8 %v126
    %v203 = vunpack.c.0.s8 %v127
    %v204 = vunpack.c.0.s8 %v128
    %v205 = vunpack.c.0.s8 %v129
    %v206 = vunpack.c.1.s8 %v126
    %v207 = vunpack.c.1.s8 %v127
    %v208 = vunpack.c.1.s8 %v128
    %v209 = vunpack.c.1.s8 %v129
    %v210 = vunpack.c.2.s8 %v126
    %v211 = vunpack.c.2.s8 %v127
    %v212 = vunpack.c.2.s8 %v128
    %v213 = vunpack.c.2.s8 %v129
    %v214 = vunpack.c.3.s8 %v126
    %v215 = vunpack.c.3.s8 %v127
    %v216 = vunpack.c.3.s8 %v128
    %v217 = vunpack.c.3.s8 %v129
    %v218 = vunpack.c.0.s8 %v130
    %v219 = vunpack.c.0.s8 %v131
    %v220 = vunpack.c.0.s8 %v132
    %v221 = vunpack.c.0.s8 %v133
    %v222 = vunpack.c.1.s8 %v130
    %v223 = vunpack.c.1.s8 %v131
    %v224 = vunpack.c.1.s8 %v132
    %v225 = vunpack.c.1.s8 %v133
    %v226 = vunpack.c.2.s8 %v130
    %v227 = vunpack.c.2.s8 %v131
    %v228 = vunpack.c.2.s8 %v132
    %v229 = vunpack.c.2.s8 %v133
    %v230 = vunpack.c.3.s8 %v130
    %v231 = vunpack.c.3.s8 %v131
    %v232 = vunpack.c.3.s8 %v132
    %v233 = vunpack.c.3.s8 %v133
    %v234 = vunpack.c.0.s8 %v134
    %v235 = vunpack.c.0.s8 %v135
    %v236 = vunpack.c.0.s8 %v136
    %v237 = vunpack.c.0.s8 %v137
    %v238 = vunpack.c.1.s8 %v134
    %v239 = vunpack.c.1.s8 %v135
    %v240 = vunpack.c.1.s8 %v136
    %v241 = vunpack.c.1.s8 %v137
    %v242 = vunpack.c.2.s8 %v134
    %v243 = vunpack.c.2.s8 %v135
    %v244 = vunpack.c.2.s8 %v136
    %v245 = vunpack.c.2.s8 %v137
    %v246 = vunpack.c.3.s8 %v134
    %v247 = vunpack.c.3.s8 %v135
    %v248 = vunpack.c.3.s8 %v136
    %v249 = vunpack.c.3.s8 %v137
    %v250 = vunpack.c.0.s8 %v138
    %v251 = vunpack.c.0.s8 %v139
    %v252 = vunpack.c.0.s8 %v140
    %v253 = vunpack.c.0.s8 %v141
    %v254 = vunpack.c.1.s8 %v138
    %v255 = vunpack.c.1.s8 %v139
    %v256 = vunpack.c.1.s8 %v140
    %v257 = vunpack.c.1.s8 %v141
    %v258 = vunpack.c.2.s8 %v138
    %v259 = vunpack.c.2.s8 %v139
    %v260 = vunpack.c.2.s8 %v140
    %v261 = vunpack.c.2.s8 %v141
    %v262 = vunpack.c.3.s8 %v138
    %v263 = vunpack.c.3.s8 %v139
    %v264 = vunpack.c.3.s8 %v140
    %v265 = vunpack.c.3.s8 %v141
    %v266 = vunpack.c.0.s8 %v142
    %v267 = vunpack.c.0.s8 %v143
    %v268 = vunpack.c.0.s8 %v144
    %v269 = vunpack.c.0.s8 %v145
    %v270 = vunpack.c.1.s8 %v142
    %v271 = vunpack.c.1.s8 %v143
    %v272 = vunpack.c.1.s8 %v144
    %v273 = vunpack.c.1.s8 %v145
    %v274 = vunpack.c.2.s8 %v142
    %v275 = vunpack.c.2.s8 %v143
    %v276 = vunpack.c.2.s8 %v144
    %v277 = vunpack.c.2.s8 %v145
    %v278 = vunpack.c.3.s8 %v142
    %v279 = vunpack.c.3.s8 %v143
    %v280 = vunpack.c.3.s8 %v144
    %v281 = vunpack.c.3.s8 %v145
    %v282 = vunpack.c.0.s8 %v146
    %v283 = vunpack.c.0.s8 %v147
    %v284 = vunpack.c.0.s8 %v148
    %v285 = vunpack.c.0.s8 %v149
    %v286 = vunpack.c.1.s8 %v146
    %v287 = vunpack.c.1.s8 %v147
    %v288 = vunpack.c.1.s8 %v148
    %v289 = vunpack.c.1.s8 %v149
    %v290 = vunpack.c.2.s8 %v146
    %v291 = vunpack.c.2.s8 %v147
    %v292 = vunpack.c.2.s8 %v148
    %v293 = vunpack.c.2.s8 %v149
    %v294 = vunpack.c.3.s8 %v146
    %v295 = vunpack.c.3.s8 %v147
    %v296 = vunpack.c.3.s8 %v148
    %v297 = vunpack.c.3.s8 %v149
    %v298 = vunpack.c.0.s8 %v150
    %v299 = vunpack.c.0.s8 %v151
    %v300 = vunpack.c.0.s8 %v152
    %v301 = vunpack.c.0.s8 %v153
    %v302 = vunpack.c.1.s8 %v150
    %v303 = vunpack.c.1.s8 %v151
    %v304 = vunpack.c.1.s8 %v152
    %v305 = vunpack.c.1.s8 %v153
    %v306 = vunpack.c.2.s8 %v150
    %v307 = vunpack.c.2.s8 %v151
    %v308 = vunpack.c.2.s8 %v152
    %v309 = vunpack.c.2.s8 %v153
    %v310 = vunpack.c.3.s8 %v150
    %v311 = vunpack.c.3.s8 %v151
    %v312 = vunpack.c.3.s8 %v152
    %v313 = vunpack.c.3.s8 %v153
    %v314 = vunpack.c.0.s8 %v154
    %v315 = vunpack.c.0.s8 %v155
    %v316 = vunpack.c.0.s8 %v156
    %v317 = vunpack.c.0.s8 %v157
    %v318 = vunpack.c.1.s8 %v154
    %v319 = vunpack.c.1.s8 %v155
    %v320 = vunpack.c.1.s8 %v156
    %v321 = vunpack.c.1.s8 %v157
    %v322 = vunpack.c.2.s8 %v154
    %v323 = vunpack.c.2.s8 %v155
    %v324 = vunpack.c.2.s8 %v156
    %v325 = vunpack.c.2.s8 %v157
    %v326 = vunpack.c.3.s8 %v154
    %v327 = vunpack.c.3.s8 %v155
    %v328 = vunpack.c.3.s8 %v156
    %v329 = vunpack.c.3.s8 %v157
    %v330 = vunpack.c.0.s8 %v158
    %v331 = vunpack.c.0.s8 %v159
    %v332 = vunpack.c.0.s8 %v160
    %v333 = vunpack.c.0.s8 %v161
    %v334 = vunpack.c.1.s8 %v158
    %v335 = vunpack.c.1.s8 %v159
    %v336 = vunpack.c.1.s8 %v160
    %v337 = vunpack.c.1.s8 %v161
    %v338 = vunpack.c.2.s8 %v158
    %v339 = vunpack.c.2.s8 %v159
    %v340 = vunpack.c.2.s8 %v160
    %v341 = vunpack.c.2.s8 %v161
    %v342 = vunpack.c.3.s8 %v158
    %v343 = vunpack.c.3.s8 %v159
    %v344 = vunpack.c.3.s8 %v160
    %v345 = vunpack.c.3.s8 %v161
    %v346 = vunpack.c.0.s8 %v162
    %v347 = vunpack.c.0.s8 %v163
    %v348 = vunpack.c.0.s8 %v164
    %v349 = vunpack.c.0.s8 %v165
    %v350 = vunpack.c.1.s8 %v162
    %v351 = vunpack.c.1.s8 %v163
    %v352 = vunpack.c.1.s8 %v164
    %v353 = vunpack.c.1.s8 %v165
    %v354 = vunpack.c.2.s8 %v162
    %v355 = vunpack.c.2.s8 %v163
    %v356 = vunpack.c.2.s8 %v164
    %v357 = vunpack.c.2.s8 %v165
    %v358 = vunpack.c.3.s8 %v162
    %v359 = vunpack.c.3.s8 %v163
    %v360 = vunpack.c.3.s8 %v164
    %v361 = vunpack.c.3.s8 %v165
    %v362 = vunpack.c.0.s8 %v166
    %v363 = vunpack.c.0.s8 %v167
    %v364 = vunpack.c.0.s8 %v168
    %v365 = vunpack.c.0.s8 %v169
    %v366 = vunpack.c.1.s8 %v166
    %v367 = vunpack.c.1.s8 %v167
    %v368 = vunpack.c.1.s8 %v168
    %v369 = vunpack.c.1.s8 %v169
    %v370 = vunpack.c.2.s8 %v166
    %v371 = vunpack.c.2.s8 %v167
    %v372 = vunpack.c.2.s8 %v168
    %v373 = vunpack.c.2.s8 %v169
    %v374 = vunpack.c.3.s8 %v166
    %v375 = vunpack.c.3.s8 %v167
    %v376 = vunpack.c.3.s8 %v168
    %v377 = vunpack.c.3.s8 %v169
    %v378 = vunpack.c.0.s8 %v170
    %v379 = vunpack.c.0.s8 %v171
    %v380 = vunpack.c.0.s8 %v172
    %v381 = vunpack.c.0.s8 %v173
    %v382 = vunpack.c.1.s8 %v170
    %v383 = vunpack.c.1.s8 %v171
    %v384 = vunpack.c.1.s8 %v172
    %v385 = vunpack.c.1.s8 %v173
    %v386 = vunpack.c.2.s8 %v170
    %v387 = vunpack.c.2.s8 %v171
    %v388 = vunpack.c.2.s8 %v172
    %v389 = vunpack.c.2.s8 %v173
    %v390 = vunpack.c.3.s8 %v170
    %v391 = vunpack.c.3.s8 %v171
    %v392 = vunpack.c.3.s8 %v172
    %v393 = vunpack.c.3.s8 %v173
    %v394 = vunpack.c.0.s8 %v174
    %v395 = vunpack.c.0.s8 %v175
    %v396 = vunpack.c.0.s8 %v176
    %v397 = vunpack.c.0.s8 %v177
    %v398 = vunpack.c.1.s8 %v174
    %v399 = vunpack.c.1.s8 %v175
    %v400 = vunpack.c.1.s8 %v176
    %v401 = vunpack.c.1.s8 %v177
    %v402 = vunpack.c.2.s8 %v174
    %v403 = vunpack.c.2.s8 %v175
    %v404 = vunpack.c.2.s8 %v176
    %v405 = vunpack.c.2.s8 %v177
    %v406 = vunpack.c.3.s8 %v174
    %v407 = vunpack.c.3.s8 %v175
    %v408 = vunpack.c.3.s8 %v176
    %v409 = vunpack.c.3.s8 %v177
    %v410 = vunpack.c.0.s8 %v178
    %v411 = vunpack.c.0.s8 %v179
    %v412 = vunpack.c.0.s8 %v180
    %v413 = vunpack.c.0.s8 %v181
    %v414 = vunpack.c.1.s8 %v178
    %v415 = vunpack.c.1.s8 %v179
    %v416 = vunpack.c.1.s8 %v180
    %v417 = vunpack.c.1.s8 %v181
    %v418 = vunpack.c.2.s8 %v178
    %v419 = vunpack.c.2.s8 %v179
    %v420 = vunpack.c.2.s8 %v180
    %v421 = vunpack.c.2.s8 %v181
    %v422 = vunpack.c.3.s8 %v178
    %v423 = vunpack.c.3.s8 %v179
    %v424 = vunpack.c.3.s8 %v180
    %v425 = vunpack.c.3.s8 %v181
    %v426 = vunpack.c.0.s8 %v182
    %v427 = vunpack.c.0.s8 %v183
    %v428 = vunpack.c.0.s8 %v184
    %v429 = vunpack.c.0.s8 %v185
    %v430 = vunpack.c.1.s8 %v182
    %v431 = vunpack.c.1.s8 %v183
    %v432 = vunpack.c.1.s8 %v184
    %v433 = vunpack.c.1.s8 %v185
    %v434 = vunpack.c.2.s8 %v182
    %v435 = vunpack.c.2.s8 %v183
    %v436 = vunpack.c.2.s8 %v184
    %v437 = vunpack.c.2.s8 %v185
    %v438 = vunpack.c.3.s8 %v182
    %v439 = vunpack.c.3.s8 %v183
    %v440 = vunpack.c.3.s8 %v184
    %v441 = vunpack.c.3.s8 %v185
    %v442 = vcvt.s32.f32 %v186
    %v443 = vcvt.s32.f32 %v187
    %v444 = vcvt.s32.f32 %v188
    %v445 = vcvt.s32.f32 %v189
    %v446 = vcvt.s32.f32 %v190
    %v447 = vcvt.s32.f32 %v191
    %v448 = vcvt.s32.f32 %v192
    %v449 = vcvt.s32.f32 %v193
    %v450 = vcvt.s32.f32 %v194
    %v451 = vcvt.s32.f32 %v195
    %v452 = vcvt.s32.f32 %v196
    %v453 = vcvt.s32.f32 %v197
    %v454 = vcvt.s32.f32 %v198
    %v455 = vcvt.s32.f32 %v199
    %v456 = vcvt.s32.f32 %v200
    %v457 = vcvt.s32.f32 %v201
    %v458 = vcvt.s32.f32 %v202
    %v459 = vcvt.s32.f32 %v203
    %v460 = vcvt.s32.f32 %v204
    %v461 = vcvt.s32.f32 %v205
    %v462 = vcvt.s32.f32 %v206
    %v463 = vcvt.s32.f32 %v207
    %v464 = vcvt.s32.f32 %v208
    %v465 = vcvt.s32.f32 %v209
    %v466 = vcvt.s32.f32 %v210
    %v467 = vcvt.s32.f32 %v211
    %v468 = vcvt.s32.f32 %v212
    %v469 = vcvt.s32.f32 %v213
    %v470 = vcvt.s32.f32 %v214
    %v471 = vcvt.s32.f32 %v215
    %v472 = vcvt.s32.f32 %v216
    %v473 = vcvt.s32.f32 %v217
    %v474 = vcvt.s32.f32 %v218
    %v475 = vcvt.s32.f32 %v219
    %v476 = vcvt.s32.f32 %v220
    %v477 = vcvt.s32.f32 %v221
    %v478 = vcvt.s32.f32 %v222
    %v479 = vcvt.s32.f32 %v223
    %v480 = vcvt.s32.f32 %v224
    %v481 = vcvt.s32.f32 %v225
    %v482 = vcvt.s32.f32 %v226
    %v483 = vcvt.s32.f32 %v227
    %v484 = vcvt.s32.f32 %v228
    %v485 = vcvt.s32.f32 %v229
    %v486 = vcvt.s32.f32 %v230
    %v487 = vcvt.s32.f32 %v231
    %v488 = vcvt.s32.f32 %v232
    %v489 = vcvt.s32.f32 %v233
    %v490 = vcvt.s32.f32 %v234
    %v491 = vcvt.s32.f32 %v235
    %v492 = vcvt.s32.f32 %v236
    %v493 = vcvt.s32.f32 %v237
    %v494 = vcvt.s32.f32 %v238
    %v495 = vcvt.s32.f32 %v239
    %v496 = vcvt.s32.f32 %v240
    %v497 = vcvt.s32.f32 %v241
    %v498 = vcvt.s32.f32 %v242
    %v499 = vcvt.s32.f32 %v243
    %v500 = vcvt.s32.f32 %v244
    %v501 = vcvt.s32.f32 %v245
    %v502 = vcvt.s32.f32 %v246
    %v503 = vcvt.s32.f32 %v247
    %v504 = vcvt.s32.f32 %v248
    %v505 = vcvt.s32.f32 %v249
    %v506 = vcvt.s32.f32 %v250
    %v507 = vcvt.s32.f32 %v251
    %v508 = vcvt.s32.f32 %v252
    %v509 = vcvt.s32.f32 %v253
    %v510 = vcvt.s32.f32 %v254
    %v511 = vcvt.s32.f32 %v255
    %v512 = vcvt.s32.f32 %v256
    %v513 = vcvt.s32.f32 %v257
    %v514 = vcvt.s32.f32 %v258
    %v515 = vcvt.s32.f32 %v259
    %v516 = vcvt.s32.f32 %v260
    %v517 = vcvt.s32.f32 %v261
    %v518 = vcvt.s32.f32 %v262
    %v519 = vcvt.s32.f32 %v263
    %v520 = vcvt.s32.f32 %v264
    %v521 = vcvt.s32.f32 %v265
    %v522 = vcvt.s32.f32 %v266
    %v523 = vcvt.s32.f32 %v267
    %v524 = vcvt.s32.f32 %v268
    %v525 = vcvt.s32.f32 %v269
    %v526 = vcvt.s32.f32 %v270
    %v527 = vcvt.s32.f32 %v271
    %v528 = vcvt.s32.f32 %v272
    %v529 = vcvt.s32.f32 %v273
    %v530 = vcvt.s32.f32 %v274
    %v531 = vcvt.s32.f32 %v275
    %v532 = vcvt.s32.f32 %v276
    %v533 = vcvt.s32.f32 %v277
    %v534 = vcvt.s32.f32 %v278
    %v535 = vcvt.s32.f32 %v279
    %v536 = vcvt.s32.f32 %v280
    %v537 = vcvt.s32.f32 %v281
    %v538 = vcvt.s32.f32 %v282
    %v539 = vcvt.s32.f32 %v283
    %v540 = vcvt.s32.f32 %v284
    %v541 = vcvt.s32.f32 %v285
    %v542 = vcvt.s32.f32 %v286
    %v543 = vcvt.s32.f32 %v287
    %v544 = vcvt.s32.f32 %v288
    %v545 = vcvt.s32.f32 %v289
    %v546 = vcvt.s32.f32 %v290
    %v547 = vcvt.s32.f32 %v291
    %v548 = vcvt.s32.f32 %v292
    %v549 = vcvt.s32.f32 %v293
    %v550 = vcvt.s32.f32 %v294
    %v551 = vcvt.s32.f32 %v295
    %v552 = vcvt.s32.f32 %v296
    %v553 = vcvt.s32.f32 %v297
    %v554 = vcvt.s32.f32 %v298
    %v555 = vcvt.s32.f32 %v299
    %v556 = vcvt.s32.f32 %v300
    %v557 = vcvt.s32.f32 %v301
    %v558 = vcvt.s32.f32 %v302
    %v559 = vcvt.s32.f32 %v303
    %v560 = vcvt.s32.f32 %v304
    %v561 = vcvt.s32.f32 %v305
    %v562 = vcvt.s32.f32 %v306
    %v563 = vcvt.s32.f32 %v307
    %v564 = vcvt.s32.f32 %v308
    %v565 = vcvt.s32.f32 %v309
    %v566 = vcvt.s32.f32 %v310
    %v567 = vcvt.s32.f32 %v311
    %v568 = vcvt.s32.f32 %v312
    %v569 = vcvt.s32.f32 %v313
    %v570 = vcvt.s32.f32 %v314
    %v571 = vcvt.s32.f32 %v315
    %v572 = vcvt.s32.f32 %v316
    %v573 = vcvt.s32.f32 %v317
    %v574 = vcvt.s32.f32 %v318
    %v575 = vcvt.s32.f32 %v319
    %v576 = vcvt.s32.f32 %v320
    %v577 = vcvt.s32.f32 %v321
    %v578 = vcvt.s32.f32 %v322
    %v579 = vcvt.s32.f32 %v323
    %v580 = vcvt.s32.f32 %v324
    %v581 = vcvt.s32.f32 %v325
    %v582 = vcvt.s32.f32 %v326
    %v583 = vcvt.s32.f32 %v327
    %v584 = vcvt.s32.f32 %v328
    %v585 = vcvt.s32.f32 %v329
    %v586 = vcvt.s32.f32 %v330
    %v587 = vcvt.s32.f32 %v331
    %v588 = vcvt.s32.f32 %v332
    %v589 = vcvt.s32.f32 %v333
    %v590 = vcvt.s32.f32 %v334
    %v591 = vcvt.s32.f32 %v335
    %v592 = vcvt.s32.f32 %v336
    %v593 = vcvt.s32.f32 %v337
    %v594 = vcvt.s32.f32 %v338
    %v595 = vcvt.s32.f32 %v339
    %v596 = vcvt.s32.f32 %v340
    %v597 = vcvt.s32.f32 %v341
    %v598 = vcvt.s32.f32 %v342
    %v599 = vcvt.s32.f32 %v343
    %v600 = vcvt.s32.f32 %v344
    %v601 = vcvt.s32.f32 %v345
    %v602 = vcvt.s32.f32 %v346
    %v603 = vcvt.s32.f32 %v347
    %v604 = vcvt.s32.f32 %v348
    %v605 = vcvt.s32.f32 %v349
    %v606 = vcvt.s32.f32 %v350
    %v607 = vcvt.s32.f32 %v351
    %v608 = vcvt.s32.f32 %v352
    %v609 = vcvt.s32.f32 %v353
    %v610 = vcvt.s32.f32 %v354
    %v611 = vcvt.s32.f32 %v355
    %v612 = vcvt.s32.f32 %v356
    %v613 = vcvt.s32.f32 %v357
    %v614 = vcvt.s32.f32 %v358
    %v615 = vcvt.s32.f32 %v359
    %v616 = vcvt.s32.f32 %v360
    %v617 = vcvt.s32.f32 %v361
    %v618 = vcvt.s32.f32 %v362
    %v619 = vcvt.s32.f32 %v363
    %v620 = vcvt.s32.f32 %v364
    %v621 = vcvt.s32.f32 %v365
    %v622 = vcvt.s32.f32 %v366
    %v623 = vcvt.s32.f32 %v367
    %v624 = vcvt.s32.f32 %v368
    %v625 = vcvt.s32.f32 %v369
    %v626 = vcvt.s32.f32 %v370
    %v627 = vcvt.s32.f32 %v371
    %v628 = vcvt.s32.f32 %v372
    %v629 = vcvt.s32.f32 %v373
    %v630 = vcvt.s32.f32 %v374
    %v631 = vcvt.s32.f32 %v375
    %v632 = vcvt.s32.f32 %v376
    %v633 = vcvt.s32.f32 %v377
    %v634 = vcvt.s32.f32 %v378
    %v635 = vcvt.s32.f32 %v379
    %v636 = vcvt.s32.f32 %v380
    %v637 = vcvt.s32.f32 %v381
    %v638 = vcvt.s32.f32 %v382
    %v639 = vcvt.s32.f32 %v383
    %v640 = vcvt.s32.f32 %v384
    %v641 = vcvt.s32.f32 %v385
    %v642 = vcvt.s32.f32 %v386
    %v643 = vcvt.s32.f32 %v387
    %v644 = vcvt.s32.f32 %v388
    %v645 = vcvt.s32.f32 %v389
    %v646 = vcvt.s32.f32 %v390
    %v647 = vcvt.s32.f32 %v391
    %v648 = vcvt.s32.f32 %v392
    %v649 = vcvt.s32.f32 %v393
    %v650 = vcvt.s32.f32 %v394
    %v651 = vcvt.s32.f32 %v395
    %v652 = vcvt.s32.f32 %v396
    %v653 = vcvt.s32.f32 %v397
    %v654 = vcvt.s32.f32 %v398
    %v655 = vcvt.s32.f32 %v399
    %v656 = vcvt.s32.f32 %v400
    %v657 = vcvt.s32.f32 %v401
    %v658 = vcvt.s32.f32 %v402
    %v659 = vcvt.s32.f32 %v403
    %v660 = vcvt.s32.f32 %v404
    %v661 = vcvt.s32.f32 %v405
    %v662 = vcvt.s32.f32 %v406
    %v663 = vcvt.s32.f32 %v407
    %v664 = vcvt.s32.f32 %v408
    %v665 = vcvt.s32.f32 %v409
    %v666 = vcvt.s32.f32 %v410
    %v667 = vcvt.s32.f32 %v411
    %v668 = vcvt.s32.f32 %v412
    %v669 = vcvt.s32.f32 %v413
    %v670 = vcvt.s32.f32 %v414
    %v671 = vcvt.s32.f32 %v415
    %v672 = vcvt.s32.f32 %v416
    %v673 = vcvt.s32.f32 %v417
    %v674 = vcvt.s32.f32 %v418
    %v675 = vcvt.s32.f32 %v419
    %v676 = vcvt.s32.f32 %v420
    %v677 = vcvt.s32.f32 %v421
    %v678 = vcvt.s32.f32 %v422
    %v679 = vcvt.s32.f32 %v423
    %v680 = vcvt.s32.f32 %v424
    %v681 = vcvt.s32.f32 %v425
    %v682 = vcvt.s32.f32 %v426
    %v683 = vcvt.s32.f32 %v427
    %v684 = vcvt.s32.f32 %v428
    %v685 = vcvt.s32.f32 %v429
    %v686 = vcvt.s32.f32 %v430
    %v687 = vcvt.s32.f32 %v431
    %v688 = vcvt.s32.f32 %v432
    %v689 = vcvt.s32.f32 %v433
    %v690 = vcvt.s32.f32 %v434
    %v691 = vcvt.s32.f32 %v435
    %v692 = vcvt.s32.f32 %v436
    %v693 = vcvt.s32.f32 %v437
    %v694 = vcvt.s32.f32 %v438
    %v695 = vcvt.s32.f32 %v439
    %v696 = vcvt.s32.f32 %v440
    %v697 = vcvt.s32.f32 %v441
    %v698 = vpack.c.bf16 %v446, %v442
    %v699 = vpack.c.bf16 %v447, %v443
    %v700 = vpack.c.bf16 %v448, %v444
    %v701 = vpack.c.bf16 %v449, %v445
    %v702 = vpack.c.bf16 %v454, %v450
    %v703 = vpack.c.bf16 %v455, %v451
    %v704 = vpack.c.bf16 %v456, %v452
    %v705 = vpack.c.bf16 %v457, %v453
    %v706 = vpack.c.bf16 %v462, %v458
    %v707 = vpack.c.bf16 %v463, %v459
    %v708 = vpack.c.bf16 %v464, %v460
    %v709 = vpack.c.bf16 %v465, %v461
    %v710 = vpack.c.bf16 %v470, %v466
    %v711 = vpack.c.bf16 %v471, %v467
    %v712 = vpack.c.bf16 %v472, %v468
    %v713 = vpack.c.bf16 %v473, %v469
    %v714 = vpack.c.bf16 %v478, %v474
    %v715 = vpack.c.bf16 %v479, %v475
    %v716 = vpack.c.bf16 %v480, %v476
    %v717 = vpack.c.bf16 %v481, %v477
    %v718 = vpack.c.bf16 %v486, %v482
    %v719 = vpack.c.bf16 %v487, %v483
    %v720 = vpack.c.bf16 %v488, %v484
    %v721 = vpack.c.bf16 %v489, %v485
    %v722 = vpack.c.bf16 %v494, %v490
    %v723 = vpack.c.bf16 %v495, %v491
    %v724 = vpack.c.bf16 %v496, %v492
    %v725 = vpack.c.bf16 %v497, %v493
    %v726 = vpack.c.bf16 %v502, %v498
    %v727 = vpack.c.bf16 %v503, %v499
    %v728 = vpack.c.bf16 %v504, %v500
    %v729 = vpack.c.bf16 %v505, %v501
    %v730 = vpack.c.bf16 %v510, %v506
    %v731 = vpack.c.bf16 %v511, %v507
    %v732 = vpack.c.bf16 %v512, %v508
    %v733 = vpack.c.bf16 %v513, %v509
    %v734 = vpack.c.bf16 %v518, %v514
    %v735 = vpack.c.bf16 %v519, %v515
    %v736 = vpack.c.bf16 %v520, %v516
    %v737 = vpack.c.bf16 %v521, %v517
    %v738 = vpack.c.bf16 %v526, %v522
    %v739 = vpack.c.bf16 %v527, %v523
    %v740 = vpack.c.bf16 %v528, %v524
    %v741 = vpack.c.bf16 %v529, %v525
    %v742 = vpack.c.bf16 %v534, %v530
    %v743 = vpack.c.bf16 %v535, %v531
    %v744 = vpack.c.bf16 %v536, %v532
    %v745 = vpack.c.bf16 %v537, %v533
    %v746 = vpack.c.bf16 %v542, %v538
    %v747 = vpack.c.bf16 %v543, %v539
    %v748 = vpack.c.bf16 %v544, %v540
    %v749 = vpack.c.bf16 %v545, %v541
    %v750 = vpack.c.bf16 %v550, %v546
    %v751 = vpack.c.bf16 %v551, %v547
    %v752 = vpack.c.bf16 %v552, %v548
    %v753 = vpack.c.bf16 %v553, %v549
    %v754 = vpack.c.bf16 %v558, %v554
    %v755 = vpack.c.bf16 %v559, %v555
    %v756 = vpack.c.bf16 %v560, %v556
    %v757 = vpack.c.bf16 %v561, %v557
    %v758 = vpack.c.bf16 %v566, %v562
    %v759 = vpack.c.bf16 %v567, %v563
    %v760 = vpack.c.bf16 %v568, %v564
    %v761 = vpack.c.bf16 %v569, %v565
    %v762 = vpack.c.bf16 %v574, %v570
    %v763 = vpack.c.bf16 %v575, %v571
    %v764 = vpack.c.bf16 %v576, %v572
    %v765 = vpack.c.bf16 %v577, %v573
    %v766 = vpack.c.bf16 %v582, %v578
    %v767 = vpack.c.bf16 %v583, %v579
    %v768 = vpack.c.bf16 %v584, %v580
    %v769 = vpack.c.bf16 %v585, %v581
    %v770 = vpack.c.bf16 %v590, %v586
    %v771 = vpack.c.bf16 %v591, %v587
    %v772 = vpack.c.bf16 %v592, %v588
    %v773 = vpack.c.bf16 %v593, %v589
    %v774 = vpack.c.bf16 %v598, %v594
    %v775 = vpack.c.bf16 %v599, %v595
    %v776 = vpack.c.bf16 %v600, %v596
    %v777 = vpack.c.bf16 %v601, %v597
    %v778 = vpack.c.bf16 %v606, %v602
    %v779 = vpack.c.bf16 %v607, %v603
    %v780 = vpack.c.bf16 %v608, %v604
    %v781 = vpack.c.bf16 %v609, %v605
    %v782 = vpack.c.bf16 %v614, %v610
    %v783 = vpack.c.bf16 %v615, %v611
    %v784 = vpack.c.bf16 %v616, %v612
    %v785 = vpack.c.bf16 %v617, %v613
    %v786 = vpack.c.bf16 %v622, %v618
    %v787 = vpack.c.bf16 %v623, %v619
    %v788 = vpack.c.bf16 %v624, %v620
    %v789 = vpack.c.bf16 %v625, %v621
    %v790 = vpack.c.bf16 %v630, %v626
    %v791 = vpack.c.bf16 %v631, %v627
    %v792 = vpack.c.bf16 %v632, %v628
    %v793 = vpack.c.bf16 %v633, %v629
    %v794 = vpack.c.bf16 %v638, %v634
    %v795 = vpack.c.bf16 %v639, %v635
    %v796 = vpack.c.bf16 %v640, %v636
    %v797 = vpack.c.bf16 %v641, %v637
    %v798 = vpack.c.bf16 %v646, %v642
    %v799 = vpack.c.bf16 %v647, %v643
    %v800 = vpack.c.bf16 %v648, %v644
    %v801 = vpack.c.bf16 %v649, %v645
    %v802 = vpack.c.bf16 %v654, %v650
    %v803 = vpack.c.bf16 %v655, %v651
    %v804 = vpack.c.bf16 %v656, %v652
    %v805 = vpack.c.bf16 %v657, %v653
    %v806 = vpack.c.bf16 %v662, %v658
    %v807 = vpack.c.bf16 %v663, %v659
    %v808 = vpack.c.bf16 %v664, %v660
    %v809 = vpack.c.bf16 %v665, %v661
    %v810 = vpack.c.bf16 %v670, %v666
    %v811 = vpack.c.bf16 %v671, %v667
    %v812 = vpack.c.bf16 %v672, %v668
    %v813 = vpack.c.bf16 %v673, %v669
    %v814 = vpack.c.bf16 %v678, %v674
    %v815 = vpack.c.bf16 %v679, %v675
    %v816 = vpack.c.bf16 %v680, %v676
    %v817 = vpack.c.bf16 %v681, %v677
    %v818 = vpack.c.bf16 %v686, %v682
    %v819 = vpack.c.bf16 %v687, %v683
    %v820 = vpack.c.bf16 %v688, %v684
    %v821 = vpack.c.bf16 %v689, %v685
    %v822 = vpack.c.bf16 %v694, %v690
    %v823 = vpack.c.bf16 %v695, %v691
    %v824 = vpack.c.bf16 %v696, %v692
    %v825 = vpack.c.bf16 %v697, %v693
    %v826 = vld [vmem:[#allocation2] sm:$0xff]
    %v827 = vld [vmem:[#allocation2 + $0x8] sm:$0xff]
    %v828 = vld [vmem:[#allocation2 + $0x10] sm:$0xff]
    %v829 = vld [vmem:[#allocation2 + $0x18] sm:$0xff]
    %v830 = vld [vmem:[#allocation2 + $0x20] sm:$0xff]
    %v831 = vld [vmem:[#allocation2 + $0x28] sm:$0xff]
    %v832 = vld [vmem:[#allocation2 + $0x30] sm:$0xff]
    %v833 = vld [vmem:[#allocation2 + $0x38] sm:$0xff]
    %v834 = vld [vmem:[#allocation2 + $0x40] sm:$0xff]
    %v835 = vld [vmem:[#allocation2 + $0x48] sm:$0xff]
    %v836 = vld [vmem:[#allocation2 + $0x50] sm:$0xff]
    %v837 = vld [vmem:[#allocation2 + $0x58] sm:$0xff]
    %v838 = vld [vmem:[#allocation2 + $0x60] sm:$0xff]
    %v839 = vld [vmem:[#allocation2 + $0x68] sm:$0xff]
    %v840 = vld [vmem:[#allocation2 + $0x70] sm:$0xff]
    %v841 = vld [vmem:[#allocation2 + $0x78] sm:$0xff]
    %v842 = vld [vmem:[#allocation2 + $0x80] sm:$0xff]
    %v843 = vld [vmem:[#allocation2 + $0x88] sm:$0xff]
    %v844 = vld [vmem:[#allocation2 + $0x90] sm:$0xff]
    %v845 = vld [vmem:[#allocation2 + $0x98] sm:$0xff]
    %v846 = vld [vmem:[#allocation2 + $0xa0] sm:$0xff]
    %v847 = vld [vmem:[#allocation2 + $0xa8] sm:$0xff]
    %v848 = vld [vmem:[#allocation2 + $0xb0] sm:$0xff]
    %v849 = vld [vmem:[#allocation2 + $0xb8] sm:$0xff]
    %v850 = vld [vmem:[#allocation2 + $0xc0] sm:$0xff]
    %v851 = vld [vmem:[#allocation2 + $0xc8] sm:$0xff]
    %v852 = vld [vmem:[#allocation2 + $0xd0] sm:$0xff]
    %v853 = vld [vmem:[#allocation2 + $0xd8] sm:$0xff]
    %v854 = vld [vmem:[#allocation2 + $0xe0] sm:$0xff]
    %v855 = vld [vmem:[#allocation2 + $0xe8] sm:$0xff]
    %v856 = vld [vmem:[#allocation2 + $0xf0] sm:$0xff]
    %v857 = vld [vmem:[#allocation2 + $0xf8] sm:$0xff]
    %v858 = vld [vmem:[#allocation2 + $0x100] sm:$0xff]
    %v859 = vld [vmem:[#allocation2 + $0x108] sm:$0xff]
    %v860 = vld [vmem:[#allocation2 + $0x110] sm:$0xff]
    %v861 = vld [vmem:[#allocation2 + $0x118] sm:$0xff]
    %v862 = vld [vmem:[#allocation2 + $0x120] sm:$0xff]
    %v863 = vld [vmem:[#allocation2 + $0x128] sm:$0xff]
    %v864 = vld [vmem:[#allocation2 + $0x130] sm:$0xff]
    %v865 = vld [vmem:[#allocation2 + $0x138] sm:$0xff]
    %v866 = vld [vmem:[#allocation2 + $0x140] sm:$0xff]
    %v867 = vld [vmem:[#allocation2 + $0x148] sm:$0xff]
    %v868 = vld [vmem:[#allocation2 + $0x150] sm:$0xff]
    %v869 = vld [vmem:[#allocation2 + $0x158] sm:$0xff]
    %v870 = vld [vmem:[#allocation2 + $0x160] sm:$0xff]
    %v871 = vld [vmem:[#allocation2 + $0x168] sm:$0xff]
    %v872 = vld [vmem:[#allocation2 + $0x170] sm:$0xff]
    %v873 = vld [vmem:[#allocation2 + $0x178] sm:$0xff]
    %v874 = vld [vmem:[#allocation2 + $0x180] sm:$0xff]
    %v875 = vld [vmem:[#allocation2 + $0x188] sm:$0xff]
    %v876 = vld [vmem:[#allocation2 + $0x190] sm:$0xff]
    %v877 = vld [vmem:[#allocation2 + $0x198] sm:$0xff]
    %v878 = vld [vmem:[#allocation2 + $0x1a0] sm:$0xff]
    %v879 = vld [vmem:[#allocation2 + $0x1a8] sm:$0xff]
    %v880 = vld [vmem:[#allocation2 + $0x1b0] sm:$0xff]
    %v881 = vld [vmem:[#allocation2 + $0x1b8] sm:$0xff]
    %v882 = vld [vmem:[#allocation2 + $0x1c0] sm:$0xff]
    %v883 = vld [vmem:[#allocation2 + $0x1c8] sm:$0xff]
    %v884 = vld [vmem:[#allocation2 + $0x1d0] sm:$0xff]
    %v885 = vld [vmem:[#allocation2 + $0x1d8] sm:$0xff]
    %v886 = vld [vmem:[#allocation2 + $0x1e0] sm:$0xff]
    %v887 = vld [vmem:[#allocation2 + $0x1e8] sm:$0xff]
    %v888 = vld [vmem:[#allocation2 + $0x1f0] sm:$0xff]
    %v889 = vld [vmem:[#allocation2 + $0x1f8] sm:$0xff]
    %s890 = sshra.s32 %s121, 3
    %s891 = sand.u32 %s121, 7
    %s892 = smul.addr %s890, 4
    %s893 = scalar_lea.vmem [#allocation3], %s892
    %v894 = vld [vmem:[%s893] sm:$0xf]
    %v895 = vld [vmem:[%s893 + $0x4] sm:$0xf]
    %v896 = vld [vmem:[%s893 + $0x8] sm:$0xf]
    %v897 = vld [vmem:[%s893 + $0xc] sm:$0xf]
    %v898 = vld [vmem:[%s893 + $0x10] sm:$0xf]
    %v899 = vld [vmem:[%s893 + $0x14] sm:$0xf]
    %v900 = vld [vmem:[%s893 + $0x18] sm:$0xf]
    %v901 = vld [vmem:[%s893 + $0x1c] sm:$0xf]
    %v902 = vld [vmem:[%s893 + $0x20] sm:$0xf]
    %v903 = vld [vmem:[%s893 + $0x24] sm:$0xf]
    %v904 = vld [vmem:[%s893 + $0x28] sm:$0xf]
    %v905 = vld [vmem:[%s893 + $0x2c] sm:$0xf]
    %v906 = vld [vmem:[%s893 + $0x30] sm:$0xf]
    %v907 = vld [vmem:[%s893 + $0x34] sm:$0xf]
    %v908 = vld [vmem:[%s893 + $0x38] sm:$0xf]
    %v909 = vld [vmem:[%s893 + $0x3c] sm:$0xf]
    %v910 = vld [vmem:[%s893 + $0x40] sm:$0xf]
    %v911 = vld [vmem:[%s893 + $0x44] sm:$0xf]
    %v912 = vld [vmem:[%s893 + $0x48] sm:$0xf]
    %v913 = vld [vmem:[%s893 + $0x4c] sm:$0xf]
    %v914 = vld [vmem:[%s893 + $0x50] sm:$0xf]
    %v915 = vld [vmem:[%s893 + $0x54] sm:$0xf]
    %v916 = vld [vmem:[%s893 + $0x58] sm:$0xf]
    %v917 = vld [vmem:[%s893 + $0x5c] sm:$0xf]
    %v918 = vld [vmem:[%s893 + $0x60] sm:$0xf]
    %v919 = vld [vmem:[%s893 + $0x64] sm:$0xf]
    %v920 = vld [vmem:[%s893 + $0x68] sm:$0xf]
    %v921 = vld [vmem:[%s893 + $0x6c] sm:$0xf]
    %v922 = vld [vmem:[%s893 + $0x70] sm:$0xf]
    %v923 = vld [vmem:[%s893 + $0x74] sm:$0xf]
    %v924 = vld [vmem:[%s893 + $0x78] sm:$0xf]
    %v925 = vld [vmem:[%s893 + $0x7c] sm:$0xf]
    %v926 = vld [vmem:[%s893 + $0x80] sm:$0xf]
    %v927 = vld [vmem:[%s893 + $0x84] sm:$0xf]
    %v928 = vld [vmem:[%s893 + $0x88] sm:$0xf]
    %v929 = vld [vmem:[%s893 + $0x8c] sm:$0xf]
    %v930 = vld [vmem:[%s893 + $0x90] sm:$0xf]
    %v931 = vld [vmem:[%s893 + $0x94] sm:$0xf]
    %v932 = vld [vmem:[%s893 + $0x98] sm:$0xf]
    %v933 = vld [vmem:[%s893 + $0x9c] sm:$0xf]
    %v934 = vld [vmem:[%s893 + $0xa0] sm:$0xf]
    %v935 = vld [vmem:[%s893 + $0xa4] sm:$0xf]
    %v936 = vld [vmem:[%s893 + $0xa8] sm:$0xf]
    %v937 = vld [vmem:[%s893 + $0xac] sm:$0xf]
    %v938 = vld [vmem:[%s893 + $0xb0] sm:$0xf]
    %v939 = vld [vmem:[%s893 + $0xb4] sm:$0xf]
    %v940 = vld [vmem:[%s893 + $0xb8] sm:$0xf]
    %v941 = vld [vmem:[%s893 + $0xbc] sm:$0xf]
    %v942 = vld [vmem:[%s893 + $0xc0] sm:$0xf]
    %v943 = vld [vmem:[%s893 + $0xc4] sm:$0xf]
    %v944 = vld [vmem:[%s893 + $0xc8] sm:$0xf]
    %v945 = vld [vmem:[%s893 + $0xcc] sm:$0xf]
    %v946 = vld [vmem:[%s893 + $0xd0] sm:$0xf]
    %v947 = vld [vmem:[%s893 + $0xd4] sm:$0xf]
    %v948 = vld [vmem:[%s893 + $0xd8] sm:$0xf]
    %v949 = vld [vmem:[%s893 + $0xdc] sm:$0xf]
    %v950 = vld [vmem:[%s893 + $0xe0] sm:$0xf]
    %v951 = vld [vmem:[%s893 + $0xe4] sm:$0xf]
    %v952 = vld [vmem:[%s893 + $0xe8] sm:$0xf]
    %v953 = vld [vmem:[%s893 + $0xec] sm:$0xf]
    %v954 = vld [vmem:[%s893 + $0xf0] sm:$0xf]
    %v955 = vld [vmem:[%s893 + $0xf4] sm:$0xf]
    %v956 = vld [vmem:[%s893 + $0xf8] sm:$0xf]
    %v957 = vld [vmem:[%s893 + $0xfc] sm:$0xf]
    %v1022 = vunpack.c.l.b16 %v894
    %v1023 = vunpack.c.l.b16 %v895
    %v1024 = vunpack.c.l.b16 %v896
    %v1025 = vunpack.c.l.b16 %v897
    %v1026 = vunpack.c.l.b16 %v898
    %v1027 = vunpack.c.l.b16 %v899
    %v1028 = vunpack.c.l.b16 %v900
    %v1029 = vunpack.c.l.b16 %v901
    %v1030 = vunpack.c.l.b16 %v902
    %v1031 = vunpack.c.l.b16 %v903
    %v1032 = vunpack.c.l.b16 %v904
    %v1033 = vunpack.c.l.b16 %v905
    %v1034 = vunpack.c.l.b16 %v906
    %v1035 = vunpack.c.l.b16 %v907
    %v1036 = vunpack.c.l.b16 %v908
    %v1037 = vunpack.c.l.b16 %v909
    %v1038 = vunpack.c.l.b16 %v910
    %v1039 = vunpack.c.l.b16 %v911
    %v1040 = vunpack.c.l.b16 %v912
    %v1041 = vunpack.c.l.b16 %v913
    %v1042 = vunpack.c.l.b16 %v914
    %v1043 = vunpack.c.l.b16 %v915
    %v1044 = vunpack.c.l.b16 %v916
    %v1045 = vunpack.c.l.b16 %v917
    %v1046 = vunpack.c.l.b16 %v918
    %v1047 = vunpack.c.l.b16 %v919
    %v1048 = vunpack.c.l.b16 %v920
    %v1049 = vunpack.c.l.b16 %v921
    %v1050 = vunpack.c.l.b16 %v922
    %v1051 = vunpack.c.l.b16 %v923
    %v1052 = vunpack.c.l.b16 %v924
    %v1053 = vunpack.c.l.b16 %v925
    %v1054 = vunpack.c.l.b16 %v926
    %v1055 = vunpack.c.l.b16 %v927
    %v1056 = vunpack.c.l.b16 %v928
    %v1057 = vunpack.c.l.b16 %v929
    %v1058 = vunpack.c.l.b16 %v930
    %v1059 = vunpack.c.l.b16 %v931
    %v1060 = vunpack.c.l.b16 %v932
    %v1061 = vunpack.c.l.b16 %v933
    %v1062 = vunpack.c.l.b16 %v934
    %v1063 = vunpack.c.l.b16 %v935
    %v1064 = vunpack.c.l.b16 %v936
    %v1065 = vunpack.c.l.b16 %v937
    %v1066 = vunpack.c.l.b16 %v938
    %v1067 = vunpack.c.l.b16 %v939
    %v1068 = vunpack.c.l.b16 %v940
    %v1069 = vunpack.c.l.b16 %v941
    %v1070 = vunpack.c.l.b16 %v942
    %v1071 = vunpack.c.l.b16 %v943
    %v1072 = vunpack.c.l.b16 %v944
    %v1073 = vunpack.c.l.b16 %v945
    %v1074 = vunpack.c.l.b16 %v946
    %v1075 = vunpack.c.l.b16 %v947
    %v1076 = vunpack.c.l.b16 %v948
    %v1077 = vunpack.c.l.b16 %v949
    %v1078 = vunpack.c.l.b16 %v950
    %v1079 = vunpack.c.l.b16 %v951
    %v1080 = vunpack.c.l.b16 %v952
    %v1081 = vunpack.c.l.b16 %v953
    %v1082 = vunpack.c.l.b16 %v954
    %v1083 = vunpack.c.l.b16 %v955
    %v1084 = vunpack.c.l.b16 %v956
    %v1085 = vunpack.c.l.b16 %v957
    %v1086 = vpack.c.b16 %v1023, %v1022
    %v1087 = vpack.c.b16 %v1025, %v1024
    %v1088 = vpack.c.b16 %v1027, %v1026
    %v1089 = vpack.c.b16 %v1029, %v1028
    %v1090 = vpack.c.b16 %v1031, %v1030
    %v1091 = vpack.c.b16 %v1033, %v1032
    %v1092 = vpack.c.b16 %v1035, %v1034
    %v1093 = vpack.c.b16 %v1037, %v1036
    %v1094 = vpack.c.b16 %v1039, %v1038
    %v1095 = vpack.c.b16 %v1041, %v1040
    %v1096 = vpack.c.b16 %v1043, %v1042
    %v1097 = vpack.c.b16 %v1045, %v1044
    %v1098 = vpack.c.b16 %v1047, %v1046
    %v1099 = vpack.c.b16 %v1049, %v1048
    %v1100 = vpack.c.b16 %v1051, %v1050
    %v1101 = vpack.c.b16 %v1053, %v1052
    %v1102 = vpack.c.b16 %v1055, %v1054
    %v1103 = vpack.c.b16 %v1057, %v1056
    %v1104 = vpack.c.b16 %v1059, %v1058
    %v1105 = vpack.c.b16 %v1061, %v1060
    %v1106 = vpack.c.b16 %v1063, %v1062
    %v1107 = vpack.c.b16 %v1065, %v1064
    %v1108 = vpack.c.b16 %v1067, %v1066
    %v1109 = vpack.c.b16 %v1069, %v1068
    %v1110 = vpack.c.b16 %v1071, %v1070
    %v1111 = vpack.c.b16 %v1073, %v1072
    %v1112 = vpack.c.b16 %v1075, %v1074
    %v1113 = vpack.c.b16 %v1077, %v1076
    %v1114 = vpack.c.b16 %v1079, %v1078
    %v1115 = vpack.c.b16 %v1081, %v1080
    %v1116 = vpack.c.b16 %v1083, %v1082
    %v1117 = vpack.c.b16 %v1085, %v1084
    %1150 = vmatpush.bf16.msra.mxu0 %v1093
    %1151 = vmatpush.bf16.msra.mxu0 %v1092
    %1152 = vmatpush.bf16.msra.mxu0 %v1091
    %1153 = vmatpush.bf16.msra.mxu0 %v1090
    %1154 = vmatpush.bf16.msra.mxu0 %v1089
    %1155 = vmatpush.bf16.msra.mxu0 %v1088
    %1156 = vmatpush.bf16.msra.mxu0 %v1087
    %1157 = vmatpush.bf16.msra.mxu0 %v1086
    %1158 = vmatmul.bf16.gmra.mxu0 %v698
    %v1159 = vpop.f32.mrf.mxu0
    %v1160 = vadd.f32 0.0, %v1159
    %v1161 = vpop.f32.mrf.mxu0
    %v1162 = vadd.f32 0.0, %v1161
    %1163 = vmatmul.bf16.gmra.mxu0 %v702
    %v1164 = vpop.f32.mrf.mxu0
    %v1165 = vadd.f32 0.0, %v1164
    %v1166 = vpop.f32.mrf.mxu0
    %v1167 = vadd.f32 0.0, %v1166
    %1168 = vmatmul.bf16.gmra.mxu0 %v706
    %v1169 = vpop.f32.mrf.mxu0
    %v1170 = vadd.f32 0.0, %v1169
    %v1171 = vpop.f32.mrf.mxu0
    %v1172 = vadd.f32 0.0, %v1171
    %1173 = vmatmul.bf16.gmra.mxu0 %v710
    %v1174 = vpop.f32.mrf.mxu0
    %v1175 = vadd.f32 0.0, %v1174
    %v1176 = vpop.f32.mrf.mxu0
    %v1177 = vadd.f32 0.0, %v1176
    %1178 = vmatmul.bf16.gmra.mxu0 %v714
    %v1179 = vpop.f32.mrf.mxu0
    %v1180 = vadd.f32 0.0, %v1179
    %v1181 = vpop.f32.mrf.mxu0
    %v1182 = vadd.f32 0.0, %v1181
    %1183 = vmatmul.bf16.gmra.mxu0 %v718
    %v1184 = vpop.f32.mrf.mxu0
    %v1185 = vadd.f32 0.0, %v1184
    %v1186 = vpop.f32.mrf.mxu0
    %v1187 = vadd.f32 0.0, %v1186
    %1188 = vmatmul.bf16.gmra.mxu0 %v722
    %v1189 = vpop.f32.mrf.mxu0
    %v1190 = vadd.f32 0.0, %v1189
    %v1191 = vpop.f32.mrf.mxu0
    %v1192 = vadd.f32 0.0, %v1191
    %1193 = vmatmul.bf16.gmra.mxu0 %v726
    %v1194 = vpop.f32.mrf.mxu0
    %v1195 = vadd.f32 0.0, %v1194
    %v1196 = vpop.f32.mrf.mxu0
    %v1197 = vadd.f32 0.0, %v1196
    %1198 = vmatmul.bf16.gmra.mxu0 %v730
    %v1199 = vpop.f32.mrf.mxu0
    %v1200 = vadd.f32 0.0, %v1199
    %v1201 = vpop.f32.mrf.mxu0
    %v1202 = vadd.f32 0.0, %v1201
    %1203 = vmatmul.bf16.gmra.mxu0 %v734
    %v1204 = vpop.f32.mrf.mxu0
    %v1205 = vadd.f32 0.0, %v1204
    %v1206 = vpop.f32.mrf.mxu0
    %v1207 = vadd.f32 0.0, %v1206
    %1208 = vmatmul.bf16.gmra.mxu0 %v738
    %v1209 = vpop.f32.mrf.mxu0
    %v1210 = vadd.f32 0.0, %v1209
    %v1211 = vpop.f32.mrf.mxu0
    %v1212 = vadd.f32 0.0, %v1211
    %1213 = vmatmul.bf16.gmra.mxu0 %v742
    %v1214 = vpop.f32.mrf.mxu0
    %v1215 = vadd.f32 0.0, %v1214
    %v1216 = vpop.f32.mrf.mxu0
    %v1217 = vadd.f32 0.0, %v1216
    %1218 = vmatmul.bf16.gmra.mxu0 %v746
    %v1219 = vpop.f32.mrf.mxu0
    %v1220 = vadd.f32 0.0, %v1219
    %v1221 = vpop.f32.mrf.mxu0
    %v1222 = vadd.f32 0.0, %v1221
    %1223 = vmatmul.bf16.gmra.mxu0 %v750
    %v1224 = vpop.f32.mrf.mxu0
    %v1225 = vadd.f32 0.0, %v1224
    %v1226 = vpop.f32.mrf.mxu0
    %v1227 = vadd.f32 0.0, %v1226
    %1228 = vmatmul.bf16.gmra.mxu0 %v754
    %v1229 = vpop.f32.mrf.mxu0
    %v1230 = vadd.f32 0.0, %v1229
    %v1231 = vpop.f32.mrf.mxu0
    %v1232 = vadd.f32 0.0, %v1231
    %1233 = vmatmul.bf16.gmra.mxu0 %v758
    %v1234 = vpop.f32.mrf.mxu0
    %v1235 = vadd.f32 0.0, %v1234
    %v1236 = vpop.f32.mrf.mxu0
    %v1237 = vadd.f32 0.0, %v1236
    %1238 = vmatmul.bf16.gmra.mxu0 %v762
    %v1239 = vpop.f32.mrf.mxu0
    %v1240 = vadd.f32 0.0, %v1239
    %v1241 = vpop.f32.mrf.mxu0
    %v1242 = vadd.f32 0.0, %v1241
    %1243 = vmatmul.bf16.gmra.mxu0 %v766
    %v1244 = vpop.f32.mrf.mxu0
    %v1245 = vadd.f32 0.0, %v1244
    %v1246 = vpop.f32.mrf.mxu0
    %v1247 = vadd.f32 0.0, %v1246
    %1248 = vmatmul.bf16.gmra.mxu0 %v770
    %v1249 = vpop.f32.mrf.mxu0
    %v1250 = vadd.f32 0.0, %v1249
    %v1251 = vpop.f32.mrf.mxu0
    %v1252 = vadd.f32 0.0, %v1251
    %1253 = vmatmul.bf16.gmra.mxu0 %v774
    %v1254 = vpop.f32.mrf.mxu0
    %v1255 = vadd.f32 0.0, %v1254
    %v1256 = vpop.f32.mrf.mxu0
    %v1257 = vadd.f32 0.0, %v1256
    %1258 = vmatmul.bf16.gmra.mxu0 %v778
    %v1259 = vpop.f32.mrf.mxu0
    %v1260 = vadd.f32 0.0, %v1259
    %v1261 = vpop.f32.mrf.mxu0
    %v1262 = vadd.f32 0.0, %v1261
    %1263 = vmatmul.bf16.gmra.mxu0 %v782
    %v1264 = vpop.f32.mrf.mxu0
    %v1265 = vadd.f32 0.0, %v1264
    %v1266 = vpop.f32.mrf.mxu0
    %v1267 = vadd.f32 0.0, %v1266
    %1268 = vmatmul.bf16.gmra.mxu0 %v786
    %v1269 = vpop.f32.mrf.mxu0
    %v1270 = vadd.f32 0.0, %v1269
    %v1271 = vpop.f32.mrf.mxu0
    %v1272 = vadd.f32 0.0, %v1271
    %1273 = vmatmul.bf16.gmra.mxu0 %v790
    %v1274 = vpop.f32.mrf.mxu0
    %v1275 = vadd.f32 0.0, %v1274
    %v1276 = vpop.f32.mrf.mxu0
    %v1277 = vadd.f32 0.0, %v1276
    %1278 = vmatmul.bf16.gmra.mxu0 %v794
    %v1279 = vpop.f32.mrf.mxu0
    %v1280 = vadd.f32 0.0, %v1279
    %v1281 = vpop.f32.mrf.mxu0
    %v1282 = vadd.f32 0.0, %v1281
    %1283 = vmatmul.bf16.gmra.mxu0 %v798
    %v1284 = vpop.f32.mrf.mxu0
    %v1285 = vadd.f32 0.0, %v1284
    %v1286 = vpop.f32.mrf.mxu0
    %v1287 = vadd.f32 0.0, %v1286
    %1288 = vmatmul.bf16.gmra.mxu0 %v802
    %v1289 = vpop.f32.mrf.mxu0
    %v1290 = vadd.f32 0.0, %v1289
    %v1291 = vpop.f32.mrf.mxu0
    %v1292 = vadd.f32 0.0, %v1291
    %1293 = vmatmul.bf16.gmra.mxu0 %v806
    %v1294 = vpop.f32.mrf.mxu0
    %v1295 = vadd.f32 0.0, %v1294
    %v1296 = vpop.f32.mrf.mxu0
    %v1297 = vadd.f32 0.0, %v1296
    %1298 = vmatmul.bf16.gmra.mxu0 %v810
    %v1299 = vpop.f32.mrf.mxu0
    %v1300 = vadd.f32 0.0, %v1299
    %v1301 = vpop.f32.mrf.mxu0
    %v1302 = vadd.f32 0.0, %v1301
    %1303 = vmatmul.bf16.gmra.mxu0 %v814
    %v1304 = vpop.f32.mrf.mxu0
    %v1305 = vadd.f32 0.0, %v1304
    %v1306 = vpop.f32.mrf.mxu0
    %v1307 = vadd.f32 0.0, %v1306
    %1308 = vmatmul.bf16.gmra.mxu0 %v818
    %v1309 = vpop.f32.mrf.mxu0
    %v1310 = vadd.f32 0.0, %v1309
    %v1311 = vpop.f32.mrf.mxu0
    %v1312 = vadd.f32 0.0, %v1311
    %1313 = vmatmul.bf16.gmra.mxu0 %v822
    %v1314 = vpop.f32.mrf.mxu0
    %v1315 = vadd.f32 0.0, %v1314
    %v1316 = vpop.f32.mrf.mxu0
    %v1317 = vadd.f32 0.0, %v1316
    %1318 = vdwg.mxu0
    %1319 = vmatpush.bf16.msra.mxu0 %v1101
    %1320 = vmatpush.bf16.msra.mxu0 %v1100
    %1321 = vmatpush.bf16.msra.mxu0 %v1099
    %1322 = vmatpush.bf16.msra.mxu0 %v1098
    %1323 = vmatpush.bf16.msra.mxu0 %v1097
    %1324 = vmatpush.bf16.msra.mxu0 %v1096
    %1325 = vmatpush.bf16.msra.mxu0 %v1095
    %1326 = vmatpush.bf16.msra.mxu0 %v1094
    %1327 = vmatmul.bf16.gmra.mxu0 %v699
    %v1328 = vpop.f32.mrf.mxu0
    %v1329 = vadd.f32 %v1160, %v1328
    %v1330 = vpop.f32.mrf.mxu0
    %v1331 = vadd.f32 %v1162, %v1330
    %1332 = vmatmul.bf16.gmra.mxu0 %v703
    %v1333 = vpop.f32.mrf.mxu0
    %v1334 = vadd.f32 %v1165, %v1333
    %v1335 = vpop.f32.mrf.mxu0
    %v1336 = vadd.f32 %v1167, %v1335
    %1337 = vmatmul.bf16.gmra.mxu0 %v707
    %v1338 = vpop.f32.mrf.mxu0
    %v1339 = vadd.f32 %v1170, %v1338
    %v1340 = vpop.f32.mrf.mxu0
    %v1341 = vadd.f32 %v1172, %v1340
    %1342 = vmatmul.bf16.gmra.mxu0 %v711
    %v1343 = vpop.f32.mrf.mxu0
    %v1344 = vadd.f32 %v1175, %v1343
    %v1345 = vpop.f32.mrf.mxu0
    %v1346 = vadd.f32 %v1177, %v1345
    %1347 = vmatmul.bf16.gmra.mxu0 %v715
    %v1348 = vpop.f32.mrf.mxu0
    %v1349 = vadd.f32 %v1180, %v1348
    %v1350 = vpop.f32.mrf.mxu0
    %v1351 = vadd.f32 %v1182, %v1350
    %1352 = vmatmul.bf16.gmra.mxu0 %v719
    %v1353 = vpop.f32.mrf.mxu0
    %v1354 = vadd.f32 %v1185, %v1353
    %v1355 = vpop.f32.mrf.mxu0
    %v1356 = vadd.f32 %v1187, %v1355
    %1357 = vmatmul.bf16.gmra.mxu0 %v723
    %v1358 = vpop.f32.mrf.mxu0
    %v1359 = vadd.f32 %v1190, %v1358
    %v1360 = vpop.f32.mrf.mxu0
    %v1361 = vadd.f32 %v1192, %v1360
    %1362 = vmatmul.bf16.gmra.mxu0 %v727
    %v1363 = vpop.f32.mrf.mxu0
    %v1364 = vadd.f32 %v1195, %v1363
    %v1365 = vpop.f32.mrf.mxu0
    %v1366 = vadd.f32 %v1197, %v1365
    %1367 = vmatmul.bf16.gmra.mxu0 %v731
    %v1368 = vpop.f32.mrf.mxu0
    %v1369 = vadd.f32 %v1200, %v1368
    %v1370 = vpop.f32.mrf.mxu0
    %v1371 = vadd.f32 %v1202, %v1370
    %1372 = vmatmul.bf16.gmra.mxu0 %v735
    %v1373 = vpop.f32.mrf.mxu0
    %v1374 = vadd.f32 %v1205, %v1373
    %v1375 = vpop.f32.mrf.mxu0
    %v1376 = vadd.f32 %v1207, %v1375
    %1377 = vmatmul.bf16.gmra.mxu0 %v739
    %v1378 = vpop.f32.mrf.mxu0
    %v1379 = vadd.f32 %v1210, %v1378
    %v1380 = vpop.f32.mrf.mxu0
    %v1381 = vadd.f32 %v1212, %v1380
    %1382 = vmatmul.bf16.gmra.mxu0 %v743
    %v1383 = vpop.f32.mrf.mxu0
    %v1384 = vadd.f32 %v1215, %v1383
    %v1385 = vpop.f32.mrf.mxu0
    %v1386 = vadd.f32 %v1217, %v1385
    %1387 = vmatmul.bf16.gmra.mxu0 %v747
    %v1388 = vpop.f32.mrf.mxu0
    %v1389 = vadd.f32 %v1220, %v1388
    %v1390 = vpop.f32.mrf.mxu0
    %v1391 = vadd.f32 %v1222, %v1390
    %1392 = vmatmul.bf16.gmra.mxu0 %v751
    %v1393 = vpop.f32.mrf.mxu0
    %v1394 = vadd.f32 %v1225, %v1393
    %v1395 = vpop.f32.mrf.mxu0
    %v1396 = vadd.f32 %v1227, %v1395
    %1397 = vmatmul.bf16.gmra.mxu0 %v755
    %v1398 = vpop.f32.mrf.mxu0
    %v1399 = vadd.f32 %v1230, %v1398
    %v1400 = vpop.f32.mrf.mxu0
    %v1401 = vadd.f32 %v1232, %v1400
    %1402 = vmatmul.bf16.gmra.mxu0 %v759
    %v1403 = vpop.f32.mrf.mxu0
    %v1404 = vadd.f32 %v1235, %v1403
    %v1405 = vpop.f32.mrf.mxu0
    %v1406 = vadd.f32 %v1237, %v1405
    %1407 = vmatmul.bf16.gmra.mxu0 %v763
    %v1408 = vpop.f32.mrf.mxu0
    %v1409 = vadd.f32 %v1240, %v1408
    %v1410 = vpop.f32.mrf.mxu0
    %v1411 = vadd.f32 %v1242, %v1410
    %1412 = vmatmul.bf16.gmra.mxu0 %v767
    %v1413 = vpop.f32.mrf.mxu0
    %v1414 = vadd.f32 %v1245, %v1413
    %v1415 = vpop.f32.mrf.mxu0
    %v1416 = vadd.f32 %v1247, %v1415
    %1417 = vmatmul.bf16.gmra.mxu0 %v771
    %v1418 = vpop.f32.mrf.mxu0
    %v1419 = vadd.f32 %v1250, %v1418
    %v1420 = vpop.f32.mrf.mxu0
    %v1421 = vadd.f32 %v1252, %v1420
    %1422 = vmatmul.bf16.gmra.mxu0 %v775
    %v1423 = vpop.f32.mrf.mxu0
    %v1424 = vadd.f32 %v1255, %v1423
    %v1425 = vpop.f32.mrf.mxu0
    %v1426 = vadd.f32 %v1257, %v1425
    %1427 = vmatmul.bf16.gmra.mxu0 %v779
    %v1428 = vpop.f32.mrf.mxu0
    %v1429 = vadd.f32 %v1260, %v1428
    %v1430 = vpop.f32.mrf.mxu0
    %v1431 = vadd.f32 %v1262, %v1430
    %1432 = vmatmul.bf16.gmra.mxu0 %v783
    %v1433 = vpop.f32.mrf.mxu0
    %v1434 = vadd.f32 %v1265, %v1433
    %v1435 = vpop.f32.mrf.mxu0
    %v1436 = vadd.f32 %v1267, %v1435
    %1437 = vmatmul.bf16.gmra.mxu0 %v787
    %v1438 = vpop.f32.mrf.mxu0
    %v1439 = vadd.f32 %v1270, %v1438
    %v1440 = vpop.f32.mrf.mxu0
    %v1441 = vadd.f32 %v1272, %v1440
    %1442 = vmatmul.bf16.gmra.mxu0 %v791
    %v1443 = vpop.f32.mrf.mxu0
    %v1444 = vadd.f32 %v1275, %v1443
    %v1445 = vpop.f32.mrf.mxu0
    %v1446 = vadd.f32 %v1277, %v1445
    %1447 = vmatmul.bf16.gmra.mxu0 %v795
    %v1448 = vpop.f32.mrf.mxu0
    %v1449 = vadd.f32 %v1280, %v1448
    %v1450 = vpop.f32.mrf.mxu0
    %v1451 = vadd.f32 %v1282, %v1450
    %1452 = vmatmul.bf16.gmra.mxu0 %v799
    %v1453 = vpop.f32.mrf.mxu0
    %v1454 = vadd.f32 %v1285, %v1453
    %v1455 = vpop.f32.mrf.mxu0
    %v1456 = vadd.f32 %v1287, %v1455
    %1457 = vmatmul.bf16.gmra.mxu0 %v803
    %v1458 = vpop.f32.mrf.mxu0
    %v1459 = vadd.f32 %v1290, %v1458
    %v1460 = vpop.f32.mrf.mxu0
    %v1461 = vadd.f32 %v1292, %v1460
    %1462 = vmatmul.bf16.gmra.mxu0 %v807
    %v1463 = vpop.f32.mrf.mxu0
    %v1464 = vadd.f32 %v1295, %v1463
    %v1465 = vpop.f32.mrf.mxu0
    %v1466 = vadd.f32 %v1297, %v1465
    %1467 = vmatmul.bf16.gmra.mxu0 %v811
    %v1468 = vpop.f32.mrf.mxu0
    %v1469 = vadd.f32 %v1300, %v1468
    %v1470 = vpop.f32.mrf.mxu0
    %v1471 = vadd.f32 %v1302, %v1470
    %1472 = vmatmul.bf16.gmra.mxu0 %v815
    %v1473 = vpop.f32.mrf.mxu0
    %v1474 = vadd.f32 %v1305, %v1473
    %v1475 = vpop.f32.mrf.mxu0
    %v1476 = vadd.f32 %v1307, %v1475
    %1477 = vmatmul.bf16.gmra.mxu0 %v819
    %v1478 = vpop.f32.mrf.mxu0
    %v1479 = vadd.f32 %v1310, %v1478
    %v1480 = vpop.f32.mrf.mxu0
    %v1481 = vadd.f32 %v1312, %v1480
    %1482 = vmatmul.bf16.gmra.mxu0 %v823
    %v1483 = vpop.f32.mrf.mxu0
    %v1484 = vadd.f32 %v1315, %v1483
    %v1485 = vpop.f32.mrf.mxu0
    %v1486 = vadd.f32 %v1317, %v1485
    %1487 = vdwg.mxu0
    %1488 = vmatpush.bf16.msra.mxu0 %v1109
    %1489 = vmatpush.bf16.msra.mxu0 %v1108
    %1490 = vmatpush.bf16.msra.mxu0 %v1107
    %1491 = vmatpush.bf16.msra.mxu0 %v1106
    %1492 = vmatpush.bf16.msra.mxu0 %v1105
    %1493 = vmatpush.bf16.msra.mxu0 %v1104
    %1494 = vmatpush.bf16.msra.mxu0 %v1103
    %1495 = vmatpush.bf16.msra.mxu0 %v1102
    %1496 = vmatmul.bf16.gmra.mxu0 %v700
    %v1497 = vpop.f32.mrf.mxu0
    %v1498 = vadd.f32 %v1329, %v1497
    %v1499 = vpop.f32.mrf.mxu0
    %v1500 = vadd.f32 %v1331, %v1499
    %1501 = vmatmul.bf16.gmra.mxu0 %v704
    %v1502 = vpop.f32.mrf.mxu0
    %v1503 = vadd.f32 %v1334, %v1502
    %v1504 = vpop.f32.mrf.mxu0
    %v1505 = vadd.f32 %v1336, %v1504
    %1506 = vmatmul.bf16.gmra.mxu0 %v708
    %v1507 = vpop.f32.mrf.mxu0
    %v1508 = vadd.f32 %v1339, %v1507
    %v1509 = vpop.f32.mrf.mxu0
    %v1510 = vadd.f32 %v1341, %v1509
    %1511 = vmatmul.bf16.gmra.mxu0 %v712
    %v1512 = vpop.f32.mrf.mxu0
    %v1513 = vadd.f32 %v1344, %v1512
    %v1514 = vpop.f32.mrf.mxu0
    %v1515 = vadd.f32 %v1346, %v1514
    %1516 = vmatmul.bf16.gmra.mxu0 %v716
    %v1517 = vpop.f32.mrf.mxu0
    %v1518 = vadd.f32 %v1349, %v1517
    %v1519 = vpop.f32.mrf.mxu0
    %v1520 = vadd.f32 %v1351, %v1519
    %1521 = vmatmul.bf16.gmra.mxu0 %v720
    %v1522 = vpop.f32.mrf.mxu0
    %v1523 = vadd.f32 %v1354, %v1522
    %v1524 = vpop.f32.mrf.mxu0
    %v1525 = vadd.f32 %v1356, %v1524
    %1526 = vmatmul.bf16.gmra.mxu0 %v724
    %v1527 = vpop.f32.mrf.mxu0
    %v1528 = vadd.f32 %v1359, %v1527
    %v1529 = vpop.f32.mrf.mxu0
    %v1530 = vadd.f32 %v1361, %v1529
    %1531 = vmatmul.bf16.gmra.mxu0 %v728
    %v1532 = vpop.f32.mrf.mxu0
    %v1533 = vadd.f32 %v1364, %v1532
    %v1534 = vpop.f32.mrf.mxu0
    %v1535 = vadd.f32 %v1366, %v1534
    %1536 = vmatmul.bf16.gmra.mxu0 %v732
    %v1537 = vpop.f32.mrf.mxu0
    %v1538 = vadd.f32 %v1369, %v1537
    %v1539 = vpop.f32.mrf.mxu0
    %v1540 = vadd.f32 %v1371, %v1539
    %1541 = vmatmul.bf16.gmra.mxu0 %v736
    %v1542 = vpop.f32.mrf.mxu0
    %v1543 = vadd.f32 %v1374, %v1542
    %v1544 = vpop.f32.mrf.mxu0
    %v1545 = vadd.f32 %v1376, %v1544
    %1546 = vmatmul.bf16.gmra.mxu0 %v740
    %v1547 = vpop.f32.mrf.mxu0
    %v1548 = vadd.f32 %v1379, %v1547
    %v1549 = vpop.f32.mrf.mxu0
    %v1550 = vadd.f32 %v1381, %v1549
    %1551 = vmatmul.bf16.gmra.mxu0 %v744
    %v1552 = vpop.f32.mrf.mxu0
    %v1553 = vadd.f32 %v1384, %v1552
    %v1554 = vpop.f32.mrf.mxu0
    %v1555 = vadd.f32 %v1386, %v1554
    %1556 = vmatmul.bf16.gmra.mxu0 %v748
    %v1557 = vpop.f32.mrf.mxu0
    %v1558 = vadd.f32 %v1389, %v1557
    %v1559 = vpop.f32.mrf.mxu0
    %v1560 = vadd.f32 %v1391, %v1559
    %1561 = vmatmul.bf16.gmra.mxu0 %v752
    %v1562 = vpop.f32.mrf.mxu0
    %v1563 = vadd.f32 %v1394, %v1562
    %v1564 = vpop.f32.mrf.mxu0
    %v1565 = vadd.f32 %v1396, %v1564
    %1566 = vmatmul.bf16.gmra.mxu0 %v756
    %v1567 = vpop.f32.mrf.mxu0
    %v1568 = vadd.f32 %v1399, %v1567
    %v1569 = vpop.f32.mrf.mxu0
    %v1570 = vadd.f32 %v1401, %v1569
    %1571 = vmatmul.bf16.gmra.mxu0 %v760
    %v1572 = vpop.f32.mrf.mxu0
    %v1573 = vadd.f32 %v1404, %v1572
    %v1574 = vpop.f32.mrf.mxu0
    %v1575 = vadd.f32 %v1406, %v1574
    %1576 = vmatmul.bf16.gmra.mxu0 %v764
    %v1577 = vpop.f32.mrf.mxu0
    %v1578 = vadd.f32 %v1409, %v1577
    %v1579 = vpop.f32.mrf.mxu0
    %v1580 = vadd.f32 %v1411, %v1579
    %1581 = vmatmul.bf16.gmra.mxu0 %v768
    %v1582 = vpop.f32.mrf.mxu0
    %v1583 = vadd.f32 %v1414, %v1582
    %v1584 = vpop.f32.mrf.mxu0
    %v1585 = vadd.f32 %v1416, %v1584
    %1586 = vmatmul.bf16.gmra.mxu0 %v772
    %v1587 = vpop.f32.mrf.mxu0
    %v1588 = vadd.f32 %v1419, %v1587
    %v1589 = vpop.f32.mrf.mxu0
    %v1590 = vadd.f32 %v1421, %v1589
    %1591 = vmatmul.bf16.gmra.mxu0 %v776
    %v1592 = vpop.f32.mrf.mxu0
    %v1593 = vadd.f32 %v1424, %v1592
    %v1594 = vpop.f32.mrf.mxu0
    %v1595 = vadd.f32 %v1426, %v1594
    %1596 = vmatmul.bf16.gmra.mxu0 %v780
    %v1597 = vpop.f32.mrf.mxu0
    %v1598 = vadd.f32 %v1429, %v1597
    %v1599 = vpop.f32.mrf.mxu0
    %v1600 = vadd.f32 %v1431, %v1599
    %1601 = vmatmul.bf16.gmra.mxu0 %v784
    %v1602 = vpop.f32.mrf.mxu0
    %v1603 = vadd.f32 %v1434, %v1602
    %v1604 = vpop.f32.mrf.mxu0
    %v1605 = vadd.f32 %v1436, %v1604
    %1606 = vmatmul.bf16.gmra.mxu0 %v788
    %v1607 = vpop.f32.mrf.mxu0
    %v1608 = vadd.f32 %v1439, %v1607
    %v1609 = vpop.f32.mrf.mxu0
    %v1610 = vadd.f32 %v1441, %v1609
    %1611 = vmatmul.bf16.gmra.mxu0 %v792
    %v1612 = vpop.f32.mrf.mxu0
    %v1613 = vadd.f32 %v1444, %v1612
    %v1614 = vpop.f32.mrf.mxu0
    %v1615 = vadd.f32 %v1446, %v1614
    %1616 = vmatmul.bf16.gmra.mxu0 %v796
    %v1617 = vpop.f32.mrf.mxu0
    %v1618 = vadd.f32 %v1449, %v1617
    %v1619 = vpop.f32.mrf.mxu0
    %v1620 = vadd.f32 %v1451, %v1619
    %1621 = vmatmul.bf16.gmra.mxu0 %v800
    %v1622 = vpop.f32.mrf.mxu0
    %v1623 = vadd.f32 %v1454, %v1622
    %v1624 = vpop.f32.mrf.mxu0
    %v1625 = vadd.f32 %v1456, %v1624
    %1626 = vmatmul.bf16.gmra.mxu0 %v804
    %v1627 = vpop.f32.mrf.mxu0
    %v1628 = vadd.f32 %v1459, %v1627
    %v1629 = vpop.f32.mrf.mxu0
    %v1630 = vadd.f32 %v1461, %v1629
    %1631 = vmatmul.bf16.gmra.mxu0 %v808
    %v1632 = vpop.f32.mrf.mxu0
    %v1633 = vadd.f32 %v1464, %v1632
    %v1634 = vpop.f32.mrf.mxu0
    %v1635 = vadd.f32 %v1466, %v1634
    %1636 = vmatmul.bf16.gmra.mxu0 %v812
    %v1637 = vpop.f32.mrf.mxu0
    %v1638 = vadd.f32 %v1469, %v1637
    %v1639 = vpop.f32.mrf.mxu0
    %v1640 = vadd.f32 %v1471, %v1639
    %1641 = vmatmul.bf16.gmra.mxu0 %v816
    %v1642 = vpop.f32.mrf.mxu0
    %v1643 = vadd.f32 %v1474, %v1642
    %v1644 = vpop.f32.mrf.mxu0
    %v1645 = vadd.f32 %v1476, %v1644
    %1646 = vmatmul.bf16.gmra.mxu0 %v820
    %v1647 = vpop.f32.mrf.mxu0
    %v1648 = vadd.f32 %v1479, %v1647
    %v1649 = vpop.f32.mrf.mxu0
    %v1650 = vadd.f32 %v1481, %v1649
    %1651 = vmatmul.bf16.gmra.mxu0 %v824
    %v1652 = vpop.f32.mrf.mxu0
    %v1653 = vadd.f32 %v1484, %v1652
    %v1654 = vpop.f32.mrf.mxu0
    %v1655 = vadd.f32 %v1486, %v1654
    %1656 = vdwg.mxu0
    %1657 = vmatpush.bf16.msra.mxu0 %v1117
    %1658 = vmatpush.bf16.msra.mxu0 %v1116
    %1659 = vmatpush.bf16.msra.mxu0 %v1115
    %1660 = vmatpush.bf16.msra.mxu0 %v1114
    %1661 = vmatpush.bf16.msra.mxu0 %v1113
    %1662 = vmatpush.bf16.msra.mxu0 %v1112
    %1663 = vmatpush.bf16.msra.mxu0 %v1111
    %1664 = vmatpush.bf16.msra.mxu0 %v1110
    %1665 = vmatmul.bf16.gmra.mxu0 %v701
    %v1666 = vpop.f32.mrf.mxu0
    %v1667 = vadd.f32 %v1498, %v1666
    %v1668 = vpop.f32.mrf.mxu0
    %v1669 = vadd.f32 %v1500, %v1668
    %1670 = vmatmul.bf16.gmra.mxu0 %v705
    %v1671 = vpop.f32.mrf.mxu0
    %v1672 = vadd.f32 %v1503, %v1671
    %v1673 = vpop.f32.mrf.mxu0
    %v1674 = vadd.f32 %v1505, %v1673
    %1675 = vmatmul.bf16.gmra.mxu0 %v709
    %v1676 = vpop.f32.mrf.mxu0
    %v1677 = vadd.f32 %v1508, %v1676
    %v1678 = vpop.f32.mrf.mxu0
    %v1679 = vadd.f32 %v1510, %v1678
    %1680 = vmatmul.bf16.gmra.mxu0 %v713
    %v1681 = vpop.f32.mrf.mxu0
    %v1682 = vadd.f32 %v1513, %v1681
    %v1683 = vpop.f32.mrf.mxu0
    %v1684 = vadd.f32 %v1515, %v1683
    %1685 = vmatmul.bf16.gmra.mxu0 %v717
    %v1686 = vpop.f32.mrf.mxu0
    %v1687 = vadd.f32 %v1518, %v1686
    %v1688 = vpop.f32.mrf.mxu0
    %v1689 = vadd.f32 %v1520, %v1688
    %1690 = vmatmul.bf16.gmra.mxu0 %v721
    %v1691 = vpop.f32.mrf.mxu0
    %v1692 = vadd.f32 %v1523, %v1691
    %v1693 = vpop.f32.mrf.mxu0
    %v1694 = vadd.f32 %v1525, %v1693
    %1695 = vmatmul.bf16.gmra.mxu0 %v725
    %v1696 = vpop.f32.mrf.mxu0
    %v1697 = vadd.f32 %v1528, %v1696
    %v1698 = vpop.f32.mrf.mxu0
    %v1699 = vadd.f32 %v1530, %v1698
    %1700 = vmatmul.bf16.gmra.mxu0 %v729
    %v1701 = vpop.f32.mrf.mxu0
    %v1702 = vadd.f32 %v1533, %v1701
    %v1703 = vpop.f32.mrf.mxu0
    %v1704 = vadd.f32 %v1535, %v1703
    %1705 = vmatmul.bf16.gmra.mxu0 %v733
    %v1706 = vpop.f32.mrf.mxu0
    %v1707 = vadd.f32 %v1538, %v1706
    %v1708 = vpop.f32.mrf.mxu0
    %v1709 = vadd.f32 %v1540, %v1708
    %1710 = vmatmul.bf16.gmra.mxu0 %v737
    %v1711 = vpop.f32.mrf.mxu0
    %v1712 = vadd.f32 %v1543, %v1711
    %v1713 = vpop.f32.mrf.mxu0
    %v1714 = vadd.f32 %v1545, %v1713
    %1715 = vmatmul.bf16.gmra.mxu0 %v741
    %v1716 = vpop.f32.mrf.mxu0
    %v1717 = vadd.f32 %v1548, %v1716
    %v1718 = vpop.f32.mrf.mxu0
    %v1719 = vadd.f32 %v1550, %v1718
    %1720 = vmatmul.bf16.gmra.mxu0 %v745
    %v1721 = vpop.f32.mrf.mxu0
    %v1722 = vadd.f32 %v1553, %v1721
    %v1723 = vpop.f32.mrf.mxu0
    %v1724 = vadd.f32 %v1555, %v1723
    %1725 = vmatmul.bf16.gmra.mxu0 %v749
    %v1726 = vpop.f32.mrf.mxu0
    %v1727 = vadd.f32 %v1558, %v1726
    %v1728 = vpop.f32.mrf.mxu0
    %v1729 = vadd.f32 %v1560, %v1728
    %1730 = vmatmul.bf16.gmra.mxu0 %v753
    %v1731 = vpop.f32.mrf.mxu0
    %v1732 = vadd.f32 %v1563, %v1731
    %v1733 = vpop.f32.mrf.mxu0
    %v1734 = vadd.f32 %v1565, %v1733
    %1735 = vmatmul.bf16.gmra.mxu0 %v757
    %v1736 = vpop.f32.mrf.mxu0
    %v1737 = vadd.f32 %v1568, %v1736
    %v1738 = vpop.f32.mrf.mxu0
    %v1739 = vadd.f32 %v1570, %v1738
    %1740 = vmatmul.bf16.gmra.mxu0 %v761
    %v1741 = vpop.f32.mrf.mxu0
    %v1742 = vadd.f32 %v1573, %v1741
    %v1743 = vpop.f32.mrf.mxu0
    %v1744 = vadd.f32 %v1575, %v1743
    %1745 = vmatmul.bf16.gmra.mxu0 %v765
    %v1746 = vpop.f32.mrf.mxu0
    %v1747 = vadd.f32 %v1578, %v1746
    %v1748 = vpop.f32.mrf.mxu0
    %v1749 = vadd.f32 %v1580, %v1748
    %1750 = vmatmul.bf16.gmra.mxu0 %v769
    %v1751 = vpop.f32.mrf.mxu0
    %v1752 = vadd.f32 %v1583, %v1751
    %v1753 = vpop.f32.mrf.mxu0
    %v1754 = vadd.f32 %v1585, %v1753
    %1755 = vmatmul.bf16.gmra.mxu0 %v773
    %v1756 = vpop.f32.mrf.mxu0
    %v1757 = vadd.f32 %v1588, %v1756
    %v1758 = vpop.f32.mrf.mxu0
    %v1759 = vadd.f32 %v1590, %v1758
    %1760 = vmatmul.bf16.gmra.mxu0 %v777
    %v1761 = vpop.f32.mrf.mxu0
    %v1762 = vadd.f32 %v1593, %v1761
    %v1763 = vpop.f32.mrf.mxu0
    %v1764 = vadd.f32 %v1595, %v1763
    %1765 = vmatmul.bf16.gmra.mxu0 %v781
    %v1766 = vpop.f32.mrf.mxu0
    %v1767 = vadd.f32 %v1598, %v1766
    %v1768 = vpop.f32.mrf.mxu0
    %v1769 = vadd.f32 %v1600, %v1768
    %1770 = vmatmul.bf16.gmra.mxu0 %v785
    %v1771 = vpop.f32.mrf.mxu0
    %v1772 = vadd.f32 %v1603, %v1771
    %v1773 = vpop.f32.mrf.mxu0
    %v1774 = vadd.f32 %v1605, %v1773
    %1775 = vmatmul.bf16.gmra.mxu0 %v789
    %v1776 = vpop.f32.mrf.mxu0
    %v1777 = vadd.f32 %v1608, %v1776
    %v1778 = vpop.f32.mrf.mxu0
    %v1779 = vadd.f32 %v1610, %v1778
    %1780 = vmatmul.bf16.gmra.mxu0 %v793
    %v1781 = vpop.f32.mrf.mxu0
    %v1782 = vadd.f32 %v1613, %v1781
    %v1783 = vpop.f32.mrf.mxu0
    %v1784 = vadd.f32 %v1615, %v1783
    %1785 = vmatmul.bf16.gmra.mxu0 %v797
    %v1786 = vpop.f32.mrf.mxu0
    %v1787 = vadd.f32 %v1618, %v1786
    %v1788 = vpop.f32.mrf.mxu0
    %v1789 = vadd.f32 %v1620, %v1788
    %1790 = vmatmul.bf16.gmra.mxu0 %v801
    %v1791 = vpop.f32.mrf.mxu0
    %v1792 = vadd.f32 %v1623, %v1791
    %v1793 = vpop.f32.mrf.mxu0
    %v1794 = vadd.f32 %v1625, %v1793
    %1795 = vmatmul.bf16.gmra.mxu0 %v805
    %v1796 = vpop.f32.mrf.mxu0
    %v1797 = vadd.f32 %v1628, %v1796
    %v1798 = vpop.f32.mrf.mxu0
    %v1799 = vadd.f32 %v1630, %v1798
    %1800 = vmatmul.bf16.gmra.mxu0 %v809
    %v1801 = vpop.f32.mrf.mxu0
    %v1802 = vadd.f32 %v1633, %v1801
    %v1803 = vpop.f32.mrf.mxu0
    %v1804 = vadd.f32 %v1635, %v1803
    %1805 = vmatmul.bf16.gmra.mxu0 %v813
    %v1806 = vpop.f32.mrf.mxu0
    %v1807 = vadd.f32 %v1638, %v1806
    %v1808 = vpop.f32.mrf.mxu0
    %v1809 = vadd.f32 %v1640, %v1808
    %1810 = vmatmul.bf16.gmra.mxu0 %v817
    %v1811 = vpop.f32.mrf.mxu0
    %v1812 = vadd.f32 %v1643, %v1811
    %v1813 = vpop.f32.mrf.mxu0
    %v1814 = vadd.f32 %v1645, %v1813
    %1815 = vmatmul.bf16.gmra.mxu0 %v821
    %v1816 = vpop.f32.mrf.mxu0
    %v1817 = vadd.f32 %v1648, %v1816
    %v1818 = vpop.f32.mrf.mxu0
    %v1819 = vadd.f32 %v1650, %v1818
    %1820 = vmatmul.bf16.gmra.mxu0 %v825
    %v1821 = vpop.f32.mrf.mxu0
    %v1822 = vadd.f32 %v1653, %v1821
    %v1823 = vpop.f32.mrf.mxu0
    %v1824 = vadd.f32 %v1655, %v1823
    %1825 = vdwg.mxu0
    %v1826 = vadd.f32 %v826, %v1667
    %v1827 = vadd.f32 %v827, %v1669
    %v1828 = vadd.f32 %v828, %v1672
    %v1829 = vadd.f32 %v829, %v1674
    %v1830 = vadd.f32 %v830, %v1677
    %v1831 = vadd.f32 %v831, %v1679
    %v1832 = vadd.f32 %v832, %v1682
    %v1833 = vadd.f32 %v833, %v1684
    %v1834 = vadd.f32 %v834, %v1687
    %v1835 = vadd.f32 %v835, %v1689
    %v1836 = vadd.f32 %v836, %v1692
    %v1837 = vadd.f32 %v837, %v1694
    %v1838 = vadd.f32 %v838, %v1697
    %v1839 = vadd.f32 %v839, %v1699
    %v1840 = vadd.f32 %v840, %v1702
    %v1841 = vadd.f32 %v841, %v1704
    %v1842 = vadd.f32 %v842, %v1707
    %v1843 = vadd.f32 %v843, %v1709
    %v1844 = vadd.f32 %v844, %v1712
    %v1845 = vadd.f32 %v845, %v1714
    %v1846 = vadd.f32 %v846, %v1717
    %v1847 = vadd.f32 %v847, %v1719
    %v1848 = vadd.f32 %v848, %v1722
    %v1849 = vadd.f32 %v849, %v1724
    %v1850 = vadd.f32 %v850, %v1727
    %v1851 = vadd.f32 %v851, %v1729
    %v1852 = vadd.f32 %v852, %v1732
    %v1853 = vadd.f32 %v853, %v1734
    %v1854 = vadd.f32 %v854, %v1737
    %v1855 = vadd.f32 %v855, %v1739
    %v1856 = vadd.f32 %v856, %v1742
    %v1857 = vadd.f32 %v857, %v1744
    %v1858 = vadd.f32 %v858, %v1747
    %v1859 = vadd.f32 %v859, %v1749
    %v1860 = vadd.f32 %v860, %v1752
    %v1861 = vadd.f32 %v861, %v1754
    %v1862 = vadd.f32 %v862, %v1757
    %v1863 = vadd.f32 %v863, %v1759
    %v1864 = vadd.f32 %v864, %v1762
    %v1865 = vadd.f32 %v865, %v1764
    %v1866 = vadd.f32 %v866, %v1767
    %v1867 = vadd.f32 %v867, %v1769
    %v1868 = vadd.f32 %v868, %v1772
    %v1869 = vadd.f32 %v869, %v1774
    %v1870 = vadd.f32 %v870, %v1777
    %v1871 = vadd.f32 %v871, %v1779
    %v1872 = vadd.f32 %v872, %v1782
    %v1873 = vadd.f32 %v873, %v1784
    %v1874 = vadd.f32 %v874, %v1787
    %v1875 = vadd.f32 %v875, %v1789
    %v1876 = vadd.f32 %v876, %v1792
    %v1877 = vadd.f32 %v877, %v1794
    %v1878 = vadd.f32 %v878, %v1797
    %v1879 = vadd.f32 %v879, %v1799
    %v1880 = vadd.f32 %v880, %v1802
    %v1881 = vadd.f32 %v881, %v1804
    %v1882 = vadd.f32 %v882, %v1807
    %v1883 = vadd.f32 %v883, %v1809
    %v1884 = vadd.f32 %v884, %v1812
    %v1885 = vadd.f32 %v885, %v1814
    %v1886 = vadd.f32 %v886, %v1817
    %v1887 = vadd.f32 %v887, %v1819
    %v1888 = vadd.f32 %v888, %v1822
    %v1889 = vadd.f32 %v889, %v1824
    %1890 = vst [vmem:[#allocation2] sm:$0xff] %v1826
    %1891 = vst [vmem:[#allocation2 + $0x8] sm:$0xff] %v1827
    %1892 = vst [vmem:[#allocation2 + $0x10] sm:$0xff] %v1828
    %1893 = vst [vmem:[#allocation2 + $0x18] sm:$0xff] %v1829
    %1894 = vst [vmem:[#allocation2 + $0x20] sm:$0xff] %v1830
    %1895 = vst [vmem:[#allocation2 + $0x28] sm:$0xff] %v1831
    %1896 = vst [vmem:[#allocation2 + $0x30] sm:$0xff] %v1832
    %1897 = vst [vmem:[#allocation2 + $0x38] sm:$0xff] %v1833
    %1898 = vst [vmem:[#allocation2 + $0x40] sm:$0xff] %v1834
    %1899 = vst [vmem:[#allocation2 + $0x48] sm:$0xff] %v1835
    %1900 = vst [vmem:[#allocation2 + $0x50] sm:$0xff] %v1836
    %1901 = vst [vmem:[#allocation2 + $0x58] sm:$0xff] %v1837
    %1902 = vst [vmem:[#allocation2 + $0x60] sm:$0xff] %v1838
    %1903 = vst [vmem:[#allocation2 + $0x68] sm:$0xff] %v1839
    %1904 = vst [vmem:[#allocation2 + $0x70] sm:$0xff] %v1840
    %1905 = vst [vmem:[#allocation2 + $0x78] sm:$0xff] %v1841
    %1906 = vst [vmem:[#allocation2 + $0x80] sm:$0xff] %v1842
    %1907 = vst [vmem:[#allocation2 + $0x88] sm:$0xff] %v1843
    %1908 = vst [vmem:[#allocation2 + $0x90] sm:$0xff] %v1844
    %1909 = vst [vmem:[#allocation2 + $0x98] sm:$0xff] %v1845
    %1910 = vst [vmem:[#allocation2 + $0xa0] sm:$0xff] %v1846
    %1911 = vst [vmem:[#allocation2 + $0xa8] sm:$0xff] %v1847
    %1912 = vst [vmem:[#allocation2 + $0xb0] sm:$0xff] %v1848
    %1913 = vst [vmem:[#allocation2 + $0xb8] sm:$0xff] %v1849
    %1914 = vst [vmem:[#allocation2 + $0xc0] sm:$0xff] %v1850
    %1915 = vst [vmem:[#allocation2 + $0xc8] sm:$0xff] %v1851
    %1916 = vst [vmem:[#allocation2 + $0xd0] sm:$0xff] %v1852
    %1917 = vst [vmem:[#allocation2 + $0xd8] sm:$0xff] %v1853
    %1918 = vst [vmem:[#allocation2 + $0xe0] sm:$0xff] %v1854
    %1919 = vst [vmem:[#allocation2 + $0xe8] sm:$0xff] %v1855
    %1920 = vst [vmem:[#allocation2 + $0xf0] sm:$0xff] %v1856
    %1921 = vst [vmem:[#allocation2 + $0xf8] sm:$0xff] %v1857
    %1922 = vst [vmem:[#allocation2 + $0x100] sm:$0xff] %v1858
    %1923 = vst [vmem:[#allocation2 + $0x108] sm:$0xff] %v1859
    %1924 = vst [vmem:[#allocation2 + $0x110] sm:$0xff] %v1860
    %1925 = vst [vmem:[#allocation2 + $0x118] sm:$0xff] %v1861
    %1926 = vst [vmem:[#allocation2 + $0x120] sm:$0xff] %v1862
    %1927 = vst [vmem:[#allocation2 + $0x128] sm:$0xff] %v1863
    %1928 = vst [vmem:[#allocation2 + $0x130] sm:$0xff] %v1864
    %1929 = vst [vmem:[#allocation2 + $0x138] sm:$0xff] %v1865
    %1930 = vst [vmem:[#allocation2 + $0x140] sm:$0xff] %v1866
    %1931 = vst [vmem:[#allocation2 + $0x148] sm:$0xff] %v1867
    %1932 = vst [vmem:[#allocation2 + $0x150] sm:$0xff] %v1868
    %1933 = vst [vmem:[#allocation2 + $0x158] sm:$0xff] %v1869
    %1934 = vst [vmem:[#allocation2 + $0x160] sm:$0xff] %v1870
    %1935 = vst [vmem:[#allocation2 + $0x168] sm:$0xff] %v1871
    %1936 = vst [vmem:[#allocation2 + $0x170] sm:$0xff] %v1872
    %1937 = vst [vmem:[#allocation2 + $0x178] sm:$0xff] %v1873
    %1938 = vst [vmem:[#allocation2 + $0x180] sm:$0xff] %v1874
    %1939 = vst [vmem:[#allocation2 + $0x188] sm:$0xff] %v1875
    %1940 = vst [vmem:[#allocation2 + $0x190] sm:$0xff] %v1876
    %1941 = vst [vmem:[#allocation2 + $0x198] sm:$0xff] %v1877
    %1942 = vst [vmem:[#allocation2 + $0x1a0] sm:$0xff] %v1878
    %1943 = vst [vmem:[#allocation2 + $0x1a8] sm:$0xff] %v1879
    %1944 = vst [vmem:[#allocation2 + $0x1b0] sm:$0xff] %v1880
    %1945 = vst [vmem:[#allocation2 + $0x1b8] sm:$0xff] %v1881
    %1946 = vst [vmem:[#allocation2 + $0x1c0] sm:$0xff] %v1882
    %1947 = vst [vmem:[#allocation2 + $0x1c8] sm:$0xff] %v1883
    %1948 = vst [vmem:[#allocation2 + $0x1d0] sm:$0xff] %v1884
    %1949 = vst [vmem:[#allocation2 + $0x1d8] sm:$0xff] %v1885
    %1950 = vst [vmem:[#allocation2 + $0x1e0] sm:$0xff] %v1886
    %1951 = vst [vmem:[#allocation2 + $0x1e8] sm:$0xff] %v1887
    %1952 = vst [vmem:[#allocation2 + $0x1f0] sm:$0xff] %v1888
    %1953 = vst [vmem:[#allocation2 + $0x1f8] sm:$0xff] %v1889
    // Predicated region
    $region34: #{tpu_custom_call.1} parent=1 // pred_check
      %p1954 = pneg %p53
    $region35: #{tpu_custom_call.1} parent=1 // pred_check_branch
      %1956 = sbr.rel (%p1954) target = $region37
    $region36: #{tpu_custom_call.1} parent=1 // pred_region
      %v1957 = vld [vmem:[%s4] sm:$0xff]
      %v1958 = vld [vmem:[%s4 + $0x8] sm:$0xff]
      %v1959 = vld [vmem:[%s4 + $0x10] sm:$0xff]
      %v1960 = vld [vmem:[%s4 + $0x18] sm:$0xff]
      %v1961 = vld [vmem:[%s4 + $0x20] sm:$0xff]
      %v1962 = vld [vmem:[%s4 + $0x28] sm:$0xff]
      %v1963 = vld [vmem:[%s4 + $0x30] sm:$0xff]
      %v1964 = vld [vmem:[%s4 + $0x38] sm:$0xff]
      %v1965 = vld [vmem:[%s4 + $0x40] sm:$0xff]
      %v1966 = vld [vmem:[%s4 + $0x48] sm:$0xff]
      %v1967 = vld [vmem:[%s4 + $0x50] sm:$0xff]
      %v1968 = vld [vmem:[%s4 + $0x58] sm:$0xff]
      %v1969 = vld [vmem:[%s4 + $0x60] sm:$0xff]
      %v1970 = vld [vmem:[%s4 + $0x68] sm:$0xff]
      %v1971 = vld [vmem:[%s4 + $0x70] sm:$0xff]
      %v1972 = vld [vmem:[%s4 + $0x78] sm:$0xff]
      %v1973 = vld [vmem:[%s4 + $0x80] sm:$0xff]
      %v1974 = vld [vmem:[%s4 + $0x88] sm:$0xff]
      %v1975 = vld [vmem:[%s4 + $0x90] sm:$0xff]
      %v1976 = vld [vmem:[%s4 + $0x98] sm:$0xff]
      %v1977 = vld [vmem:[%s4 + $0xa0] sm:$0xff]
      %v1978 = vld [vmem:[%s4 + $0xa8] sm:$0xff]
      %v1979 = vld [vmem:[%s4 + $0xb0] sm:$0xff]
      %v1980 = vld [vmem:[%s4 + $0xb8] sm:$0xff]
      %v1981 = vld [vmem:[%s4 + $0xc0] sm:$0xff]
      %v1982 = vld [vmem:[%s4 + $0xc8] sm:$0xff]
      %v1983 = vld [vmem:[%s4 + $0xd0] sm:$0xff]
      %v1984 = vld [vmem:[%s4 + $0xd8] sm:$0xff]
      %v1985 = vld [vmem:[%s4 + $0xe0] sm:$0xff]
      %v1986 = vld [vmem:[%s4 + $0xe8] sm:$0xff]
      %v1987 = vld [vmem:[%s4 + $0xf0] sm:$0xff]
      %v1988 = vld [vmem:[%s4 + $0xf8] sm:$0xff]
      %v1989 = vld [vmem:[%s4 + $0x100] sm:$0xff]
      %v1990 = vld [vmem:[%s4 + $0x108] sm:$0xff]
      %v1991 = vld [vmem:[%s4 + $0x110] sm:$0xff]
      %v1992 = vld [vmem:[%s4 + $0x118] sm:$0xff]
      %v1993 = vld [vmem:[%s4 + $0x120] sm:$0xff]
      %v1994 = vld [vmem:[%s4 + $0x128] sm:$0xff]
      %v1995 = vld [vmem:[%s4 + $0x130] sm:$0xff]
      %v1996 = vld [vmem:[%s4 + $0x138] sm:$0xff]
      %v1997 = vld [vmem:[%s4 + $0x140] sm:$0xff]
      %v1998 = vld [vmem:[%s4 + $0x148] sm:$0xff]
      %v1999 = vld [vmem:[%s4 + $0x150] sm:$0xff]
      %v2000 = vld [vmem:[%s4 + $0x158] sm:$0xff]
      %v2001 = vld [vmem:[%s4 + $0x160] sm:$0xff]
      %v2002 = vld [vmem:[%s4 + $0x168] sm:$0xff]
      %v2003 = vld [vmem:[%s4 + $0x170] sm:$0xff]
      %v2004 = vld [vmem:[%s4 + $0x178] sm:$0xff]
      %v2005 = vld [vmem:[%s4 + $0x180] sm:$0xff]
      %v2006 = vld [vmem:[%s4 + $0x188] sm:$0xff]
      %v2007 = vld [vmem:[%s4 + $0x190] sm:$0xff]
      %v2008 = vld [vmem:[%s4 + $0x198] sm:$0xff]
      %v2009 = vld [vmem:[%s4 + $0x1a0] sm:$0xff]
      %v2010 = vld [vmem:[%s4 + $0x1a8] sm:$0xff]
      %v2011 = vld [vmem:[%s4 + $0x1b0] sm:$0xff]
      %v2012 = vld [vmem:[%s4 + $0x1b8] sm:$0xff]
      %v2013 = vld [vmem:[%s4 + $0x1c0] sm:$0xff]
      %v2014 = vld [vmem:[%s4 + $0x1c8] sm:$0xff]
      %v2015 = vld [vmem:[%s4 + $0x1d0] sm:$0xff]
      %v2016 = vld [vmem:[%s4 + $0x1d8] sm:$0xff]
      %v2017 = vld [vmem:[%s4 + $0x1e0] sm:$0xff]
      %v2018 = vld [vmem:[%s4 + $0x1e8] sm:$0xff]
      %v2019 = vld [vmem:[%s4 + $0x1f0] sm:$0xff]
      %v2020 = vld [vmem:[%s4 + $0x1f8] sm:$0xff]
      %v2021 = vld [vmem:[#allocation2] sm:$0xff]
      %v2022 = vld [vmem:[#allocation2 + $0x8] sm:$0xff]
      %v2023 = vld [vmem:[#allocation2 + $0x10] sm:$0xff]
      %v2024 = vld [vmem:[#allocation2 + $0x18] sm:$0xff]
      %v2025 = vld [vmem:[#allocation2 + $0x20] sm:$0xff]
      %v2026 = vld [vmem:[#allocation2 + $0x28] sm:$0xff]
      %v2027 = vld [vmem:[#allocation2 + $0x30] sm:$0xff]
      %v2028 = vld [vmem:[#allocation2 + $0x38] sm:$0xff]
      %v2029 = vld [vmem:[#allocation2 + $0x40] sm:$0xff]
      %v2030 = vld [vmem:[#allocation2 + $0x48] sm:$0xff]
      %v2031 = vld [vmem:[#allocation2 + $0x50] sm:$0xff]
      %v2032 = vld [vmem:[#allocation2 + $0x58] sm:$0xff]
      %v2033 = vld [vmem:[#allocation2 + $0x60] sm:$0xff]
      %v2034 = vld [vmem:[#allocation2 + $0x68] sm:$0xff]
      %v2035 = vld [vmem:[#allocation2 + $0x70] sm:$0xff]
      %v2036 = vld [vmem:[#allocation2 + $0x78] sm:$0xff]
      %v2037 = vld [vmem:[#allocation2 + $0x80] sm:$0xff]
      %v2038 = vld [vmem:[#allocation2 + $0x88] sm:$0xff]
      %v2039 = vld [vmem:[#allocation2 + $0x90] sm:$0xff]
      %v2040 = vld [vmem:[#allocation2 + $0x98] sm:$0xff]
      %v2041 = vld [vmem:[#allocation2 + $0xa0] sm:$0xff]
      %v2042 = vld [vmem:[#allocation2 + $0xa8] sm:$0xff]
      %v2043 = vld [vmem:[#allocation2 + $0xb0] sm:$0xff]
      %v2044 = vld [vmem:[#allocation2 + $0xb8] sm:$0xff]
      %v2045 = vld [vmem:[#allocation2 + $0xc0] sm:$0xff]
      %v2046 = vld [vmem:[#allocation2 + $0xc8] sm:$0xff]
      %v2047 = vld [vmem:[#allocation2 + $0xd0] sm:$0xff]
      %v2048 = vld [vmem:[#allocation2 + $0xd8] sm:$0xff]
      %v2049 = vld [vmem:[#allocation2 + $0xe0] sm:$0xff]
      %v2050 = vld [vmem:[#allocation2 + $0xe8] sm:$0xff]
      %v2051 = vld [vmem:[#allocation2 + $0xf0] sm:$0xff]
      %v2052 = vld [vmem:[#allocation2 + $0xf8] sm:$0xff]
      %v2053 = vld [vmem:[#allocation2 + $0x100] sm:$0xff]
      %v2054 = vld [vmem:[#allocation2 + $0x108] sm:$0xff]
      %v2055 = vld [vmem:[#allocation2 + $0x110] sm:$0xff]
      %v2056 = vld [vmem:[#allocation2 + $0x118] sm:$0xff]
      %v2057 = vld [vmem:[#allocation2 + $0x120] sm:$0xff]
      %v2058 = vld [vmem:[#allocation2 + $0x128] sm:$0xff]
      %v2059 = vld [vmem:[#allocation2 + $0x130] sm:$0xff]
      %v2060 = vld [vmem:[#allocation2 + $0x138] sm:$0xff]
      %v2061 = vld [vmem:[#allocation2 + $0x140] sm:$0xff]
      %v2062 = vld [vmem:[#allocation2 + $0x148] sm:$0xff]
      %v2063 = vld [vmem:[#allocation2 + $0x150] sm:$0xff]
      %v2064 = vld [vmem:[#allocation2 + $0x158] sm:$0xff]
      %v2065 = vld [vmem:[#allocation2 + $0x160] sm:$0xff]
      %v2066 = vld [vmem:[#allocation2 + $0x168] sm:$0xff]
      %v2067 = vld [vmem:[#allocation2 + $0x170] sm:$0xff]
      %v2068 = vld [vmem:[#allocation2 + $0x178] sm:$0xff]
      %v2069 = vld [vmem:[#allocation2 + $0x180] sm:$0xff]
      %v2070 = vld [vmem:[#allocation2 + $0x188] sm:$0xff]
      %v2071 = vld [vmem:[#allocation2 + $0x190] sm:$0xff]
      %v2072 = vld [vmem:[#allocation2 + $0x198] sm:$0xff]
      %v2073 = vld [vmem:[#allocation2 + $0x1a0] sm:$0xff]
      %v2074 = vld [vmem:[#allocation2 + $0x1a8] sm:$0xff]
      %v2075 = vld [vmem:[#allocation2 + $0x1b0] sm:$0xff]
      %v2076 = vld [vmem:[#allocation2 + $0x1b8] sm:$0xff]
      %v2077 = vld [vmem:[#allocation2 + $0x1c0] sm:$0xff]
      %v2078 = vld [vmem:[#allocation2 + $0x1c8] sm:$0xff]
      %v2079 = vld [vmem:[#allocation2 + $0x1d0] sm:$0xff]
      %v2080 = vld [vmem:[#allocation2 + $0x1d8] sm:$0xff]
      %v2081 = vld [vmem:[#allocation2 + $0x1e0] sm:$0xff]
      %v2082 = vld [vmem:[#allocation2 + $0x1e8] sm:$0xff]
      %v2083 = vld [vmem:[#allocation2 + $0x1f0] sm:$0xff]
      %v2084 = vld [vmem:[#allocation2 + $0x1f8] sm:$0xff]
      %2086 = vset.pattern.permute.xlu0 0
      %2087 = vperm.xlu0 %2086, %v1957
      %v2088 = vpop.permute.xlu0 %2087
      %2091 = vset.pattern.permute.xlu0 0
      %2092 = vperm.xlu0 %2091, %v1958
      %v2093 = vpop.permute.xlu0 %2092
      %2096 = vset.pattern.permute.xlu0 0
      %2097 = vperm.xlu0 %2096, %v1959
      %v2098 = vpop.permute.xlu0 %2097
      %2101 = vset.pattern.permute.xlu0 0
      %2102 = vperm.xlu0 %2101, %v1960
      %v2103 = vpop.permute.xlu0 %2102
      %2106 = vset.pattern.permute.xlu0 0
      %2107 = vperm.xlu0 %2106, %v1961
      %v2108 = vpop.permute.xlu0 %2107
      %2111 = vset.pattern.permute.xlu0 0
      %2112 = vperm.xlu0 %2111, %v1962
      %v2113 = vpop.permute.xlu0 %2112
      %2116 = vset.pattern.permute.xlu0 0
      %2117 = vperm.xlu0 %2116, %v1963
      %v2118 = vpop.permute.xlu0 %2117
      %2121 = vset.pattern.permute.xlu0 0
      %2122 = vperm.xlu0 %2121, %v1964
      %v2123 = vpop.permute.xlu0 %2122
      %2126 = vset.pattern.permute.xlu0 0
      %2127 = vperm.xlu0 %2126, %v1965
      %v2128 = vpop.permute.xlu0 %2127
      %2131 = vset.pattern.permute.xlu0 0
      %2132 = vperm.xlu0 %2131, %v1966
      %v2133 = vpop.permute.xlu0 %2132
      %2136 = vset.pattern.permute.xlu0 0
      %2137 = vperm.xlu0 %2136, %v1967
      %v2138 = vpop.permute.xlu0 %2137
      %2141 = vset.pattern.permute.xlu0 0
      %2142 = vperm.xlu0 %2141, %v1968
      %v2143 = vpop.permute.xlu0 %2142
      %2146 = vset.pattern.permute.xlu0 0
      %2147 = vperm.xlu0 %2146, %v1969
      %v2148 = vpop.permute.xlu0 %2147
      %2151 = vset.pattern.permute.xlu0 0
      %2152 = vperm.xlu0 %2151, %v1970
      %v2153 = vpop.permute.xlu0 %2152
      %2156 = vset.pattern.permute.xlu0 0
      %2157 = vperm.xlu0 %2156, %v1971
      %v2158 = vpop.permute.xlu0 %2157
      %2161 = vset.pattern.permute.xlu0 0
      %2162 = vperm.xlu0 %2161, %v1972
      %v2163 = vpop.permute.xlu0 %2162
      %2166 = vset.pattern.permute.xlu0 0
      %2167 = vperm.xlu0 %2166, %v1973
      %v2168 = vpop.permute.xlu0 %2167
      %2171 = vset.pattern.permute.xlu0 0
      %2172 = vperm.xlu0 %2171, %v1974
      %v2173 = vpop.permute.xlu0 %2172
      %2176 = vset.pattern.permute.xlu0 0
      %2177 = vperm.xlu0 %2176, %v1975
      %v2178 = vpop.permute.xlu0 %2177
      %2181 = vset.pattern.permute.xlu0 0
      %2182 = vperm.xlu0 %2181, %v1976
      %v2183 = vpop.permute.xlu0 %2182
      %2186 = vset.pattern.permute.xlu0 0
      %2187 = vperm.xlu0 %2186, %v1977
      %v2188 = vpop.permute.xlu0 %2187
      %2191 = vset.pattern.permute.xlu0 0
      %2192 = vperm.xlu0 %2191, %v1978
      %v2193 = vpop.permute.xlu0 %2192
      %2196 = vset.pattern.permute.xlu0 0
      %2197 = vperm.xlu0 %2196, %v1979
      %v2198 = vpop.permute.xlu0 %2197
      %2201 = vset.pattern.permute.xlu0 0
      %2202 = vperm.xlu0 %2201, %v1980
      %v2203 = vpop.permute.xlu0 %2202
      %2206 = vset.pattern.permute.xlu0 0
      %2207 = vperm.xlu0 %2206, %v1981
      %v2208 = vpop.permute.xlu0 %2207
      %2211 = vset.pattern.permute.xlu0 0
      %2212 = vperm.xlu0 %2211, %v1982
      %v2213 = vpop.permute.xlu0 %2212
      %2216 = vset.pattern.permute.xlu0 0
      %2217 = vperm.xlu0 %2216, %v1983
      %v2218 = vpop.permute.xlu0 %2217
      %2221 = vset.pattern.permute.xlu0 0
      %2222 = vperm.xlu0 %2221, %v1984
      %v2223 = vpop.permute.xlu0 %2222
      %2226 = vset.pattern.permute.xlu0 0
      %2227 = vperm.xlu0 %2226, %v1985
      %v2228 = vpop.permute.xlu0 %2227
      %2231 = vset.pattern.permute.xlu0 0
      %2232 = vperm.xlu0 %2231, %v1986
      %v2233 = vpop.permute.xlu0 %2232
      %2236 = vset.pattern.permute.xlu0 0
      %2237 = vperm.xlu0 %2236, %v1987
      %v2238 = vpop.permute.xlu0 %2237
      %2241 = vset.pattern.permute.xlu0 0
      %2242 = vperm.xlu0 %2241, %v1988
      %v2243 = vpop.permute.xlu0 %2242
      %2246 = vset.pattern.permute.xlu0 0
      %2247 = vperm.xlu0 %2246, %v1989
      %v2248 = vpop.permute.xlu0 %2247
      %2251 = vset.pattern.permute.xlu0 0
      %2252 = vperm.xlu0 %2251, %v1990
      %v2253 = vpop.permute.xlu0 %2252
      %2256 = vset.pattern.permute.xlu0 0
      %2257 = vperm.xlu0 %2256, %v1991
      %v2258 = vpop.permute.xlu0 %2257
      %2261 = vset.pattern.permute.xlu0 0
      %2262 = vperm.xlu0 %2261, %v1992
      %v2263 = vpop.permute.xlu0 %2262
      %2266 = vset.pattern.permute.xlu0 0
      %2267 = vperm.xlu0 %2266, %v1993
      %v2268 = vpop.permute.xlu0 %2267
      %2271 = vset.pattern.permute.xlu0 0
      %2272 = vperm.xlu0 %2271, %v1994
      %v2273 = vpop.permute.xlu0 %2272
      %2276 = vset.pattern.permute.xlu0 0
      %2277 = vperm.xlu0 %2276, %v1995
      %v2278 = vpop.permute.xlu0 %2277
      %2281 = vset.pattern.permute.xlu0 0
      %2282 = vperm.xlu0 %2281, %v1996
      %v2283 = vpop.permute.xlu0 %2282
      %2286 = vset.pattern.permute.xlu0 0
      %2287 = vperm.xlu0 %2286, %v1997
      %v2288 = vpop.permute.xlu0 %2287
      %2291 = vset.pattern.permute.xlu0 0
      %2292 = vperm.xlu0 %2291, %v1998
      %v2293 = vpop.permute.xlu0 %2292
      %2296 = vset.pattern.permute.xlu0 0
      %2297 = vperm.xlu0 %2296, %v1999
      %v2298 = vpop.permute.xlu0 %2297
      %2301 = vset.pattern.permute.xlu0 0
      %2302 = vperm.xlu0 %2301, %v2000
      %v2303 = vpop.permute.xlu0 %2302
      %2306 = vset.pattern.permute.xlu0 0
      %2307 = vperm.xlu0 %2306, %v2001
      %v2308 = vpop.permute.xlu0 %2307
      %2311 = vset.pattern.permute.xlu0 0
      %2312 = vperm.xlu0 %2311, %v2002
      %v2313 = vpop.permute.xlu0 %2312
      %2316 = vset.pattern.permute.xlu0 0
      %2317 = vperm.xlu0 %2316, %v2003
      %v2318 = vpop.permute.xlu0 %2317
      %2321 = vset.pattern.permute.xlu0 0
      %2322 = vperm.xlu0 %2321, %v2004
      %v2323 = vpop.permute.xlu0 %2322
      %2326 = vset.pattern.permute.xlu0 0
      %2327 = vperm.xlu0 %2326, %v2005
      %v2328 = vpop.permute.xlu0 %2327
      %2331 = vset.pattern.permute.xlu0 0
      %2332 = vperm.xlu0 %2331, %v2006
      %v2333 = vpop.permute.xlu0 %2332
      %2336 = vset.pattern.permute.xlu0 0
      %2337 = vperm.xlu0 %2336, %v2007
      %v2338 = vpop.permute.xlu0 %2337
      %2341 = vset.pattern.permute.xlu0 0
      %2342 = vperm.xlu0 %2341, %v2008
      %v2343 = vpop.permute.xlu0 %2342
      %2346 = vset.pattern.permute.xlu0 0
      %2347 = vperm.xlu0 %2346, %v2009
      %v2348 = vpop.permute.xlu0 %2347
      %2351 = vset.pattern.permute.xlu0 0
      %2352 = vperm.xlu0 %2351, %v2010
      %v2353 = vpop.permute.xlu0 %2352
      %2356 = vset.pattern.permute.xlu0 0
      %2357 = vperm.xlu0 %2356, %v2011
      %v2358 = vpop.permute.xlu0 %2357
      %2361 = vset.pattern.permute.xlu0 0
      %2362 = vperm.xlu0 %2361, %v2012
      %v2363 = vpop.permute.xlu0 %2362
      %2366 = vset.pattern.permute.xlu0 0
      %2367 = vperm.xlu0 %2366, %v2013
      %v2368 = vpop.permute.xlu0 %2367
      %2371 = vset.pattern.permute.xlu0 0
      %2372 = vperm.xlu0 %2371, %v2014
      %v2373 = vpop.permute.xlu0 %2372
      %2376 = vset.pattern.permute.xlu0 0
      %2377 = vperm.xlu0 %2376, %v2015
      %v2378 = vpop.permute.xlu0 %2377
      %2381 = vset.pattern.permute.xlu0 0
      %2382 = vperm.xlu0 %2381, %v2016
      %v2383 = vpop.permute.xlu0 %2382
      %2386 = vset.pattern.permute.xlu0 0
      %2387 = vperm.xlu0 %2386, %v2017
      %v2388 = vpop.permute.xlu0 %2387
      %2391 = vset.pattern.permute.xlu0 0
      %2392 = vperm.xlu0 %2391, %v2018
      %v2393 = vpop.permute.xlu0 %2392
      %2396 = vset.pattern.permute.xlu0 0
      %2397 = vperm.xlu0 %2396, %v2019
      %v2398 = vpop.permute.xlu0 %2397
      %2401 = vset.pattern.permute.xlu0 0
      %2402 = vperm.xlu0 %2401, %v2020
      %v2403 = vpop.permute.xlu0 %2402
      %v2405 = vmul.f32 %v2088, %v2021
      %v2406 = vmul.f32 %v2093, %v2022
      %v2407 = vmul.f32 %v2098, %v2023
      %v2408 = vmul.f32 %v2103, %v2024
      %v2409 = vmul.f32 %v2108, %v2025
      %v2410 = vmul.f32 %v2113, %v2026
      %v2411 = vmul.f32 %v2118, %v2027
      %v2412 = vmul.f32 %v2123, %v2028
      %v2413 = vmul.f32 %v2128, %v2029
      %v2414 = vmul.f32 %v2133, %v2030
      %v2415 = vmul.f32 %v2138, %v2031
      %v2416 = vmul.f32 %v2143, %v2032
      %v2417 = vmul.f32 %v2148, %v2033
      %v2418 = vmul.f32 %v2153, %v2034
      %v2419 = vmul.f32 %v2158, %v2035
      %v2420 = vmul.f32 %v2163, %v2036
      %v2421 = vmul.f32 %v2168, %v2037
      %v2422 = vmul.f32 %v2173, %v2038
      %v2423 = vmul.f32 %v2178, %v2039
      %v2424 = vmul.f32 %v2183, %v2040
      %v2425 = vmul.f32 %v2188, %v2041
      %v2426 = vmul.f32 %v2193, %v2042
      %v2427 = vmul.f32 %v2198, %v2043
      %v2428 = vmul.f32 %v2203, %v2044
      %v2429 = vmul.f32 %v2208, %v2045
      %v2430 = vmul.f32 %v2213, %v2046
      %v2431 = vmul.f32 %v2218, %v2047
      %v2432 = vmul.f32 %v2223, %v2048
      %v2433 = vmul.f32 %v2228, %v2049
      %v2434 = vmul.f32 %v2233, %v2050
      %v2435 = vmul.f32 %v2238, %v2051
      %v2436 = vmul.f32 %v2243, %v2052
      %v2437 = vmul.f32 %v2248, %v2053
      %v2438 = vmul.f32 %v2253, %v2054
      %v2439 = vmul.f32 %v2258, %v2055
      %v2440 = vmul.f32 %v2263, %v2056
      %v2441 = vmul.f32 %v2268, %v2057
      %v2442 = vmul.f32 %v2273, %v2058
      %v2443 = vmul.f32 %v2278, %v2059
      %v2444 = vmul.f32 %v2283, %v2060
      %v2445 = vmul.f32 %v2288, %v2061
      %v2446 = vmul.f32 %v2293, %v2062
      %v2447 = vmul.f32 %v2298, %v2063
      %v2448 = vmul.f32 %v2303, %v2064
      %v2449 = vmul.f32 %v2308, %v2065
      %v2450 = vmul.f32 %v2313, %v2066
      %v2451 = vmul.f32 %v2318, %v2067
      %v2452 = vmul.f32 %v2323, %v2068
      %v2453 = vmul.f32 %v2328, %v2069
      %v2454 = vmul.f32 %v2333, %v2070
      %v2455 = vmul.f32 %v2338, %v2071
      %v2456 = vmul.f32 %v2343, %v2072
      %v2457 = vmul.f32 %v2348, %v2073
      %v2458 = vmul.f32 %v2353, %v2074
      %v2459 = vmul.f32 %v2358, %v2075
      %v2460 = vmul.f32 %v2363, %v2076
      %v2461 = vmul.f32 %v2368, %v2077
      %v2462 = vmul.f32 %v2373, %v2078
      %v2463 = vmul.f32 %v2378, %v2079
      %v2464 = vmul.f32 %v2383, %v2080
      %v2465 = vmul.f32 %v2388, %v2081
      %v2466 = vmul.f32 %v2393, %v2082
      %v2467 = vmul.f32 %v2398, %v2083
      %v2468 = vmul.f32 %v2403, %v2084
      %v2469 = vld [vmem:[%s3] sm:$0x1]
      %v2471 = vperm.slane %v2469, 0
      %v2473 = vadd.f32 %v2405, %v2471
      %v2474 = vadd.f32 %v2406, %v2471
      %v2475 = vadd.f32 %v2407, %v2471
      %v2476 = vadd.f32 %v2408, %v2471
      %v2477 = vadd.f32 %v2409, %v2471
      %v2478 = vadd.f32 %v2410, %v2471
      %v2479 = vadd.f32 %v2411, %v2471
      %v2480 = vadd.f32 %v2412, %v2471
      %v2481 = vadd.f32 %v2413, %v2471
      %v2482 = vadd.f32 %v2414, %v2471
      %v2483 = vadd.f32 %v2415, %v2471
      %v2484 = vadd.f32 %v2416, %v2471
      %v2485 = vadd.f32 %v2417, %v2471
      %v2486 = vadd.f32 %v2418, %v2471
      %v2487 = vadd.f32 %v2419, %v2471
      %v2488 = vadd.f32 %v2420, %v2471
      %v2489 = vadd.f32 %v2421, %v2471
      %v2490 = vadd.f32 %v2422, %v2471
      %v2491 = vadd.f32 %v2423, %v2471
      %v2492 = vadd.f32 %v2424, %v2471
      %v2493 = vadd.f32 %v2425, %v2471
      %v2494 = vadd.f32 %v2426, %v2471
      %v2495 = vadd.f32 %v2427, %v2471
      %v2496 = vadd.f32 %v2428, %v2471
      %v2497 = vadd.f32 %v2429, %v2471
      %v2498 = vadd.f32 %v2430, %v2471
      %v2499 = vadd.f32 %v2431, %v2471
      %v2500 = vadd.f32 %v2432, %v2471
      %v2501 = vadd.f32 %v2433, %v2471
      %v2502 = vadd.f32 %v2434, %v2471
      %v2503 = vadd.f32 %v2435, %v2471
      %v2504 = vadd.f32 %v2436, %v2471
      %v2505 = vadd.f32 %v2437, %v2471
      %v2506 = vadd.f32 %v2438, %v2471
      %v2507 = vadd.f32 %v2439, %v2471
      %v2508 = vadd.f32 %v2440, %v2471
      %v2509 = vadd.f32 %v2441, %v2471
      %v2510 = vadd.f32 %v2442, %v2471
      %v2511 = vadd.f32 %v2443, %v2471
      %v2512 = vadd.f32 %v2444, %v2471
      %v2513 = vadd.f32 %v2445, %v2471
      %v2514 = vadd.f32 %v2446, %v2471
      %v2515 = vadd.f32 %v2447, %v2471
      %v2516 = vadd.f32 %v2448, %v2471
      %v2517 = vadd.f32 %v2449, %v2471
      %v2518 = vadd.f32 %v2450, %v2471
      %v2519 = vadd.f32 %v2451, %v2471
      %v2520 = vadd.f32 %v2452, %v2471
      %v2521 = vadd.f32 %v2453, %v2471
      %v2522 = vadd.f32 %v2454, %v2471
      %v2523 = vadd.f32 %v2455, %v2471
      %v2524 = vadd.f32 %v2456, %v2471
      %v2525 = vadd.f32 %v2457, %v2471
      %v2526 = vadd.f32 %v2458, %v2471
      %v2527 = vadd.f32 %v2459, %v2471
      %v2528 = vadd.f32 %v2460, %v2471
      %v2529 = vadd.f32 %v2461, %v2471
      %v2530 = vadd.f32 %v2462, %v2471
      %v2531 = vadd.f32 %v2463, %v2471
      %v2532 = vadd.f32 %v2464, %v2471
      %v2533 = vadd.f32 %v2465, %v2471
      %v2534 = vadd.f32 %v2466, %v2471
      %v2535 = vadd.f32 %v2467, %v2471
      %v2536 = vadd.f32 %v2468, %v2471
      %v2537 = vmax.f32 %v2473, 0.0
      %v2538 = vmax.f32 %v2474, 0.0
      %v2539 = vmax.f32 %v2475, 0.0
      %v2540 = vmax.f32 %v2476, 0.0
      %v2541 = vmax.f32 %v2477, 0.0
      %v2542 = vmax.f32 %v2478, 0.0
      %v2543 = vmax.f32 %v2479, 0.0
      %v2544 = vmax.f32 %v2480, 0.0
      %v2545 = vmax.f32 %v2481, 0.0
      %v2546 = vmax.f32 %v2482, 0.0
      %v2547 = vmax.f32 %v2483, 0.0
      %v2548 = vmax.f32 %v2484, 0.0
      %v2549 = vmax.f32 %v2485, 0.0
      %v2550 = vmax.f32 %v2486, 0.0
      %v2551 = vmax.f32 %v2487, 0.0
      %v2552 = vmax.f32 %v2488, 0.0
      %v2553 = vmax.f32 %v2489, 0.0
      %v2554 = vmax.f32 %v2490, 0.0
      %v2555 = vmax.f32 %v2491, 0.0
      %v2556 = vmax.f32 %v2492, 0.0
      %v2557 = vmax.f32 %v2493, 0.0
      %v2558 = vmax.f32 %v2494, 0.0
      %v2559 = vmax.f32 %v2495, 0.0
      %v2560 = vmax.f32 %v2496, 0.0
      %v2561 = vmax.f32 %v2497, 0.0
      %v2562 = vmax.f32 %v2498, 0.0
      %v2563 = vmax.f32 %v2499, 0.0
      %v2564 = vmax.f32 %v2500, 0.0
      %v2565 = vmax.f32 %v2501, 0.0
      %v2566 = vmax.f32 %v2502, 0.0
      %v2567 = vmax.f32 %v2503, 0.0
      %v2568 = vmax.f32 %v2504, 0.0
      %v2569 = vmax.f32 %v2505, 0.0
      %v2570 = vmax.f32 %v2506, 0.0
      %v2571 = vmax.f32 %v2507, 0.0
      %v2572 = vmax.f32 %v2508, 0.0
      %v2573 = vmax.f32 %v2509, 0.0
      %v2574 = vmax.f32 %v2510, 0.0
      %v2575 = vmax.f32 %v2511, 0.0
      %v2576 = vmax.f32 %v2512, 0.0
      %v2577 = vmax.f32 %v2513, 0.0
      %v2578 = vmax.f32 %v2514, 0.0
      %v2579 = vmax.f32 %v2515, 0.0
      %v2580 = vmax.f32 %v2516, 0.0
      %v2581 = vmax.f32 %v2517, 0.0
      %v2582 = vmax.f32 %v2518, 0.0
      %v2583 = vmax.f32 %v2519, 0.0
      %v2584 = vmax.f32 %v2520, 0.0
      %v2585 = vmax.f32 %v2521, 0.0
      %v2586 = vmax.f32 %v2522, 0.0
      %v2587 = vmax.f32 %v2523, 0.0
      %v2588 = vmax.f32 %v2524, 0.0
      %v2589 = vmax.f32 %v2525, 0.0
      %v2590 = vmax.f32 %v2526, 0.0
      %v2591 = vmax.f32 %v2527, 0.0
      %v2592 = vmax.f32 %v2528, 0.0
      %v2593 = vmax.f32 %v2529, 0.0
      %v2594 = vmax.f32 %v2530, 0.0
      %v2595 = vmax.f32 %v2531, 0.0
      %v2596 = vmax.f32 %v2532, 0.0
      %v2597 = vmax.f32 %v2533, 0.0
      %v2598 = vmax.f32 %v2534, 0.0
      %v2599 = vmax.f32 %v2535, 0.0
      %v2600 = vmax.f32 %v2536, 0.0
      %v2601 = vpack.c.bf16 %v2538, %v2537
      %v2602 = vpack.c.bf16 %v2540, %v2539
      %v2603 = vpack.c.bf16 %v2542, %v2541
      %v2604 = vpack.c.bf16 %v2544, %v2543
      %v2605 = vpack.c.bf16 %v2546, %v2545
      %v2606 = vpack.c.bf16 %v2548, %v2547
      %v2607 = vpack.c.bf16 %v2550, %v2549
      %v2608 = vpack.c.bf16 %v2552, %v2551
      %v2609 = vpack.c.bf16 %v2554, %v2553
      %v2610 = vpack.c.bf16 %v2556, %v2555
      %v2611 = vpack.c.bf16 %v2558, %v2557
      %v2612 = vpack.c.bf16 %v2560, %v2559
      %v2613 = vpack.c.bf16 %v2562, %v2561
      %v2614 = vpack.c.bf16 %v2564, %v2563
      %v2615 = vpack.c.bf16 %v2566, %v2565
      %v2616 = vpack.c.bf16 %v2568, %v2567
      %v2617 = vpack.c.bf16 %v2570, %v2569
      %v2618 = vpack.c.bf16 %v2572, %v2571
      %v2619 = vpack.c.bf16 %v2574, %v2573
      %v2620 = vpack.c.bf16 %v2576, %v2575
      %v2621 = vpack.c.bf16 %v2578, %v2577
      %v2622 = vpack.c.bf16 %v2580, %v2579
      %v2623 = vpack.c.bf16 %v2582, %v2581
      %v2624 = vpack.c.bf16 %v2584, %v2583
      %v2625 = vpack.c.bf16 %v2586, %v2585
      %v2626 = vpack.c.bf16 %v2588, %v2587
      %v2627 = vpack.c.bf16 %v2590, %v2589
      %v2628 = vpack.c.bf16 %v2592, %v2591
      %v2629 = vpack.c.bf16 %v2594, %v2593
      %v2630 = vpack.c.bf16 %v2596, %v2595
      %v2631 = vpack.c.bf16 %v2598, %v2597
      %v2632 = vpack.c.bf16 %v2600, %v2599
      %v2633 = vld [vmem:[#allocation6] sm:$0xf]
      %v2634 = vld [vmem:[#allocation6 + $0x4] sm:$0xf]
      %v2635 = vld [vmem:[#allocation6 + $0x8] sm:$0xf]
      %v2636 = vld [vmem:[#allocation6 + $0xc] sm:$0xf]
      %v2637 = vld [vmem:[#allocation6 + $0x10] sm:$0xf]
      %v2638 = vld [vmem:[#allocation6 + $0x14] sm:$0xf]
      %v2639 = vld [vmem:[#allocation6 + $0x18] sm:$0xf]
      %v2640 = vld [vmem:[#allocation6 + $0x1c] sm:$0xf]
      %v2641 = vld [vmem:[#allocation6 + $0x20] sm:$0xf]
      %v2642 = vld [vmem:[#allocation6 + $0x24] sm:$0xf]
      %v2643 = vld [vmem:[#allocation6 + $0x28] sm:$0xf]
      %v2644 = vld [vmem:[#allocation6 + $0x2c] sm:$0xf]
      %v2645 = vld [vmem:[#allocation6 + $0x30] sm:$0xf]
      %v2646 = vld [vmem:[#allocation6 + $0x34] sm:$0xf]
      %v2647 = vld [vmem:[#allocation6 + $0x38] sm:$0xf]
      %v2648 = vld [vmem:[#allocation6 + $0x3c] sm:$0xf]
      %v2665 = vunpack.c.l.b16 %v2633
      %v2666 = vunpack.c.l.b16 %v2634
      %v2667 = vunpack.c.l.b16 %v2635
      %v2668 = vunpack.c.l.b16 %v2636
      %v2669 = vunpack.c.l.b16 %v2637
      %v2670 = vunpack.c.l.b16 %v2638
      %v2671 = vunpack.c.l.b16 %v2639
      %v2672 = vunpack.c.l.b16 %v2640
      %v2673 = vunpack.c.l.b16 %v2641
      %v2674 = vunpack.c.l.b16 %v2642
      %v2675 = vunpack.c.l.b16 %v2643
      %v2676 = vunpack.c.l.b16 %v2644
      %v2677 = vunpack.c.l.b16 %v2645
      %v2678 = vunpack.c.l.b16 %v2646
      %v2679 = vunpack.c.l.b16 %v2647
      %v2680 = vunpack.c.l.b16 %v2648
      %v2681 = vpack.c.b16 %v2666, %v2665
      %v2682 = vpack.c.b16 %v2668, %v2667
      %v2683 = vpack.c.b16 %v2670, %v2669
      %v2684 = vpack.c.b16 %v2672, %v2671
      %v2685 = vpack.c.b16 %v2674, %v2673
      %v2686 = vpack.c.b16 %v2676, %v2675
      %v2687 = vpack.c.b16 %v2678, %v2677
      %v2688 = vpack.c.b16 %v2680, %v2679
      %2697 = vmatpush.bf16.msra.mxu0 %v2688
      %2698 = vmatpush.bf16.msra.mxu0 %v2687
      %2699 = vmatpush.bf16.msra.mxu0 %v2686
      %2700 = vmatpush.bf16.msra.mxu0 %v2685
      %2701 = vmatpush.bf16.msra.mxu0 %v2684
      %2702 = vmatpush.bf16.msra.mxu0 %v2683
      %2703 = vmatpush.bf16.msra.mxu0 %v2682
      %2704 = vmatpush.bf16.msra.mxu0 %v2681
      %2705 = vmatmul.bf16.gmra.mxu0 %v2601
      %v2706 = vpop.f32.mrf.mxu0
      %v2707 = vadd.f32 0.0, %v2706
      %v2708 = vpop.f32.mrf.mxu0
      %v2709 = vadd.f32 0.0, %v2708
      %2710 = vmatmul.bf16.gmra.mxu0 %v2602
      %v2711 = vpop.f32.mrf.mxu0
      %v2712 = vadd.f32 0.0, %v2711
      %v2713 = vpop.f32.mrf.mxu0
      %v2714 = vadd.f32 0.0, %v2713
      %2715 = vmatmul.bf16.gmra.mxu0 %v2603
      %v2716 = vpop.f32.mrf.mxu0
      %v2717 = vadd.f32 0.0, %v2716
      %v2718 = vpop.f32.mrf.mxu0
      %v2719 = vadd.f32 0.0, %v2718
      %2720 = vmatmul.bf16.gmra.mxu0 %v2604
      %v2721 = vpop.f32.mrf.mxu0
      %v2722 = vadd.f32 0.0, %v2721
      %v2723 = vpop.f32.mrf.mxu0
      %v2724 = vadd.f32 0.0, %v2723
      %2725 = vmatmul.bf16.gmra.mxu0 %v2605
      %v2726 = vpop.f32.mrf.mxu0
      %v2727 = vadd.f32 0.0, %v2726
      %v2728 = vpop.f32.mrf.mxu0
      %v2729 = vadd.f32 0.0, %v2728
      %2730 = vmatmul.bf16.gmra.mxu0 %v2606
      %v2731 = vpop.f32.mrf.mxu0
      %v2732 = vadd.f32 0.0, %v2731
      %v2733 = vpop.f32.mrf.mxu0
      %v2734 = vadd.f32 0.0, %v2733
      %2735 = vmatmul.bf16.gmra.mxu0 %v2607
      %v2736 = vpop.f32.mrf.mxu0
      %v2737 = vadd.f32 0.0, %v2736
      %v2738 = vpop.f32.mrf.mxu0
      %v2739 = vadd.f32 0.0, %v2738
      %2740 = vmatmul.bf16.gmra.mxu0 %v2608
      %v2741 = vpop.f32.mrf.mxu0
      %v2742 = vadd.f32 0.0, %v2741
      %v2743 = vpop.f32.mrf.mxu0
      %v2744 = vadd.f32 0.0, %v2743
      %2745 = vmatmul.bf16.gmra.mxu0 %v2609
      %v2746 = vpop.f32.mrf.mxu0
      %v2747 = vadd.f32 0.0, %v2746
      %v2748 = vpop.f32.mrf.mxu0
      %v2749 = vadd.f32 0.0, %v2748
      %2750 = vmatmul.bf16.gmra.mxu0 %v2610
      %v2751 = vpop.f32.mrf.mxu0
      %v2752 = vadd.f32 0.0, %v2751
      %v2753 = vpop.f32.mrf.mxu0
      %v2754 = vadd.f32 0.0, %v2753
      %2755 = vmatmul.bf16.gmra.mxu0 %v2611
      %v2756 = vpop.f32.mrf.mxu0
      %v2757 = vadd.f32 0.0, %v2756
      %v2758 = vpop.f32.mrf.mxu0
      %v2759 = vadd.f32 0.0, %v2758
      %2760 = vmatmul.bf16.gmra.mxu0 %v2612
      %v2761 = vpop.f32.mrf.mxu0
      %v2762 = vadd.f32 0.0, %v2761
      %v2763 = vpop.f32.mrf.mxu0
      %v2764 = vadd.f32 0.0, %v2763
      %2765 = vmatmul.bf16.gmra.mxu0 %v2613
      %v2766 = vpop.f32.mrf.mxu0
      %v2767 = vadd.f32 0.0, %v2766
      %v2768 = vpop.f32.mrf.mxu0
      %v2769 = vadd.f32 0.0, %v2768
      %2770 = vmatmul.bf16.gmra.mxu0 %v2614
      %v2771 = vpop.f32.mrf.mxu0
      %v2772 = vadd.f32 0.0, %v2771
      %v2773 = vpop.f32.mrf.mxu0
      %v2774 = vadd.f32 0.0, %v2773
      %2775 = vmatmul.bf16.gmra.mxu0 %v2615
      %v2776 = vpop.f32.mrf.mxu0
      %v2777 = vadd.f32 0.0, %v2776
      %v2778 = vpop.f32.mrf.mxu0
      %v2779 = vadd.f32 0.0, %v2778
      %2780 = vmatmul.bf16.gmra.mxu0 %v2616
      %v2781 = vpop.f32.mrf.mxu0
      %v2782 = vadd.f32 0.0, %v2781
      %v2783 = vpop.f32.mrf.mxu0
      %v2784 = vadd.f32 0.0, %v2783
      %2785 = vmatmul.bf16.gmra.mxu0 %v2617
      %v2786 = vpop.f32.mrf.mxu0
      %v2787 = vadd.f32 0.0, %v2786
      %v2788 = vpop.f32.mrf.mxu0
      %v2789 = vadd.f32 0.0, %v2788
      %2790 = vmatmul.bf16.gmra.mxu0 %v2618
      %v2791 = vpop.f32.mrf.mxu0
      %v2792 = vadd.f32 0.0, %v2791
      %v2793 = vpop.f32.mrf.mxu0
      %v2794 = vadd.f32 0.0, %v2793
      %2795 = vmatmul.bf16.gmra.mxu0 %v2619
      %v2796 = vpop.f32.mrf.mxu0
      %v2797 = vadd.f32 0.0, %v2796
      %v2798 = vpop.f32.mrf.mxu0
      %v2799 = vadd.f32 0.0, %v2798
      %2800 = vmatmul.bf16.gmra.mxu0 %v2620
      %v2801 = vpop.f32.mrf.mxu0
      %v2802 = vadd.f32 0.0, %v2801
      %v2803 = vpop.f32.mrf.mxu0
      %v2804 = vadd.f32 0.0, %v2803
      %2805 = vmatmul.bf16.gmra.mxu0 %v2621
      %v2806 = vpop.f32.mrf.mxu0
      %v2807 = vadd.f32 0.0, %v2806
      %v2808 = vpop.f32.mrf.mxu0
      %v2809 = vadd.f32 0.0, %v2808
      %2810 = vmatmul.bf16.gmra.mxu0 %v2622
      %v2811 = vpop.f32.mrf.mxu0
      %v2812 = vadd.f32 0.0, %v2811
      %v2813 = vpop.f32.mrf.mxu0
      %v2814 = vadd.f32 0.0, %v2813
      %2815 = vmatmul.bf16.gmra.mxu0 %v2623
      %v2816 = vpop.f32.mrf.mxu0
      %v2817 = vadd.f32 0.0, %v2816
      %v2818 = vpop.f32.mrf.mxu0
      %v2819 = vadd.f32 0.0, %v2818
      %2820 = vmatmul.bf16.gmra.mxu0 %v2624
      %v2821 = vpop.f32.mrf.mxu0
      %v2822 = vadd.f32 0.0, %v2821
      %v2823 = vpop.f32.mrf.mxu0
      %v2824 = vadd.f32 0.0, %v2823
      %2825 = vmatmul.bf16.gmra.mxu0 %v2625
      %v2826 = vpop.f32.mrf.mxu0
      %v2827 = vadd.f32 0.0, %v2826
      %v2828 = vpop.f32.mrf.mxu0
      %v2829 = vadd.f32 0.0, %v2828
      %2830 = vmatmul.bf16.gmra.mxu0 %v2626
      %v2831 = vpop.f32.mrf.mxu0
      %v2832 = vadd.f32 0.0, %v2831
      %v2833 = vpop.f32.mrf.mxu0
      %v2834 = vadd.f32 0.0, %v2833
      %2835 = vmatmul.bf16.gmra.mxu0 %v2627
      %v2836 = vpop.f32.mrf.mxu0
      %v2837 = vadd.f32 0.0, %v2836
      %v2838 = vpop.f32.mrf.mxu0
      %v2839 = vadd.f32 0.0, %v2838
      %2840 = vmatmul.bf16.gmra.mxu0 %v2628
      %v2841 = vpop.f32.mrf.mxu0
      %v2842 = vadd.f32 0.0, %v2841
      %v2843 = vpop.f32.mrf.mxu0
      %v2844 = vadd.f32 0.0, %v2843
      %2845 = vmatmul.bf16.gmra.mxu0 %v2629
      %v2846 = vpop.f32.mrf.mxu0
      %v2847 = vadd.f32 0.0, %v2846
      %v2848 = vpop.f32.mrf.mxu0
      %v2849 = vadd.f32 0.0, %v2848
      %2850 = vmatmul.bf16.gmra.mxu0 %v2630
      %v2851 = vpop.f32.mrf.mxu0
      %v2852 = vadd.f32 0.0, %v2851
      %v2853 = vpop.f32.mrf.mxu0
      %v2854 = vadd.f32 0.0, %v2853
      %2855 = vmatmul.bf16.gmra.mxu0 %v2631
      %v2856 = vpop.f32.mrf.mxu0
      %v2857 = vadd.f32 0.0, %v2856
      %v2858 = vpop.f32.mrf.mxu0
      %v2859 = vadd.f32 0.0, %v2858
      %2860 = vmatmul.bf16.gmra.mxu0 %v2632
      %v2861 = vpop.f32.mrf.mxu0
      %v2862 = vadd.f32 0.0, %v2861
      %v2863 = vpop.f32.mrf.mxu0
      %v2864 = vadd.f32 0.0, %v2863
      %2865 = vdwg.mxu0
      %v2866 = vmul.f32 %v2088, %v2707
      %v2867 = vmul.f32 %v2093, %v2709
      %v2868 = vmul.f32 %v2098, %v2712
      %v2869 = vmul.f32 %v2103, %v2714
      %v2870 = vmul.f32 %v2108, %v2717
      %v2871 = vmul.f32 %v2113, %v2719
      %v2872 = vmul.f32 %v2118, %v2722
      %v2873 = vmul.f32 %v2123, %v2724
      %v2874 = vmul.f32 %v2128, %v2727
      %v2875 = vmul.f32 %v2133, %v2729
      %v2876 = vmul.f32 %v2138, %v2732
      %v2877 = vmul.f32 %v2143, %v2734
      %v2878 = vmul.f32 %v2148, %v2737
      %v2879 = vmul.f32 %v2153, %v2739
      %v2880 = vmul.f32 %v2158, %v2742
      %v2881 = vmul.f32 %v2163, %v2744
      %v2882 = vmul.f32 %v2168, %v2747
      %v2883 = vmul.f32 %v2173, %v2749
      %v2884 = vmul.f32 %v2178, %v2752
      %v2885 = vmul.f32 %v2183, %v2754
      %v2886 = vmul.f32 %v2188, %v2757
      %v2887 = vmul.f32 %v2193, %v2759
      %v2888 = vmul.f32 %v2198, %v2762
      %v2889 = vmul.f32 %v2203, %v2764
      %v2890 = vmul.f32 %v2208, %v2767
      %v2891 = vmul.f32 %v2213, %v2769
      %v2892 = vmul.f32 %v2218, %v2772
      %v2893 = vmul.f32 %v2223, %v2774
      %v2894 = vmul.f32 %v2228, %v2777
      %v2895 = vmul.f32 %v2233, %v2779
      %v2896 = vmul.f32 %v2238, %v2782
      %v2897 = vmul.f32 %v2243, %v2784
      %v2898 = vmul.f32 %v2248, %v2787
      %v2899 = vmul.f32 %v2253, %v2789
      %v2900 = vmul.f32 %v2258, %v2792
      %v2901 = vmul.f32 %v2263, %v2794
      %v2902 = vmul.f32 %v2268, %v2797
      %v2903 = vmul.f32 %v2273, %v2799
      %v2904 = vmul.f32 %v2278, %v2802
      %v2905 = vmul.f32 %v2283, %v2804
      %v2906 = vmul.f32 %v2288, %v2807
      %v2907 = vmul.f32 %v2293, %v2809
      %v2908 = vmul.f32 %v2298, %v2812
      %v2909 = vmul.f32 %v2303, %v2814
      %v2910 = vmul.f32 %v2308, %v2817
      %v2911 = vmul.f32 %v2313, %v2819
      %v2912 = vmul.f32 %v2318, %v2822
      %v2913 = vmul.f32 %v2323, %v2824
      %v2914 = vmul.f32 %v2328, %v2827
      %v2915 = vmul.f32 %v2333, %v2829
      %v2916 = vmul.f32 %v2338, %v2832
      %v2917 = vmul.f32 %v2343, %v2834
      %v2918 = vmul.f32 %v2348, %v2837
      %v2919 = vmul.f32 %v2353, %v2839
      %v2920 = vmul.f32 %v2358, %v2842
      %v2921 = vmul.f32 %v2363, %v2844
      %v2922 = vmul.f32 %v2368, %v2847
      %v2923 = vmul.f32 %v2373, %v2849
      %v2924 = vmul.f32 %v2378, %v2852
      %v2925 = vmul.f32 %v2383, %v2854
      %v2926 = vmul.f32 %v2388, %v2857
      %v2927 = vmul.f32 %v2393, %v2859
      %v2928 = vmul.f32 %v2398, %v2862
      %v2929 = vmul.f32 %v2403, %v2864
      %v2930 = vpack.c.bf16 %v2866, %v2866
      %v2931 = vpack.c.bf16 %v2867, %v2867
      %v2932 = vpack.c.bf16 %v2868, %v2868
      %v2933 = vpack.c.bf16 %v2869, %v2869
      %v2934 = vpack.c.bf16 %v2870, %v2870
      %v2935 = vpack.c.bf16 %v2871, %v2871
      %v2936 = vpack.c.bf16 %v2872, %v2872
      %v2937 = vpack.c.bf16 %v2873, %v2873
      %v2938 = vpack.c.bf16 %v2874, %v2874
      %v2939 = vpack.c.bf16 %v2875, %v2875
      %v2940 = vpack.c.bf16 %v2876, %v2876
      %v2941 = vpack.c.bf16 %v2877, %v2877
      %v2942 = vpack.c.bf16 %v2878, %v2878
      %v2943 = vpack.c.bf16 %v2879, %v2879
      %v2944 = vpack.c.bf16 %v2880, %v2880
      %v2945 = vpack.c.bf16 %v2881, %v2881
      %v2946 = vpack.c.bf16 %v2882, %v2882
      %v2947 = vpack.c.bf16 %v2883, %v2883
      %v2948 = vpack.c.bf16 %v2884, %v2884
      %v2949 = vpack.c.bf16 %v2885, %v2885
      %v2950 = vpack.c.bf16 %v2886, %v2886
      %v2951 = vpack.c.bf16 %v2887, %v2887
      %v2952 = vpack.c.bf16 %v2888, %v2888
      %v2953 = vpack.c.bf16 %v2889, %v2889
      %v2954 = vpack.c.bf16 %v2890, %v2890
      %v2955 = vpack.c.bf16 %v2891, %v2891
      %v2956 = vpack.c.bf16 %v2892, %v2892
      %v2957 = vpack.c.bf16 %v2893, %v2893
      %v2958 = vpack.c.bf16 %v2894, %v2894
      %v2959 = vpack.c.bf16 %v2895, %v2895
      %v2960 = vpack.c.bf16 %v2896, %v2896
      %v2961 = vpack.c.bf16 %v2897, %v2897
      %v2962 = vpack.c.bf16 %v2898, %v2898
      %v2963 = vpack.c.bf16 %v2899, %v2899
      %v2964 = vpack.c.bf16 %v2900, %v2900
      %v2965 = vpack.c.bf16 %v2901, %v2901
      %v2966 = vpack.c.bf16 %v2902, %v2902
      %v2967 = vpack.c.bf16 %v2903, %v2903
      %v2968 = vpack.c.bf16 %v2904, %v2904
      %v2969 = vpack.c.bf16 %v2905, %v2905
      %v2970 = vpack.c.bf16 %v2906, %v2906
      %v2971 = vpack.c.bf16 %v2907, %v2907
      %v2972 = vpack.c.bf16 %v2908, %v2908
      %v2973 = vpack.c.bf16 %v2909, %v2909
      %v2974 = vpack.c.bf16 %v2910, %v2910
      %v2975 = vpack.c.bf16 %v2911, %v2911
      %v2976 = vpack.c.bf16 %v2912, %v2912
      %v2977 = vpack.c.bf16 %v2913, %v2913
      %v2978 = vpack.c.bf16 %v2914, %v2914
      %v2979 = vpack.c.bf16 %v2915, %v2915
      %v2980 = vpack.c.bf16 %v2916, %v2916
      %v2981 = vpack.c.bf16 %v2917, %v2917
      %v2982 = vpack.c.bf16 %v2918, %v2918
      %v2983 = vpack.c.bf16 %v2919, %v2919
      %v2984 = vpack.c.bf16 %v2920, %v2920
      %v2985 = vpack.c.bf16 %v2921, %v2921
      %v2986 = vpack.c.bf16 %v2922, %v2922
      %v2987 = vpack.c.bf16 %v2923, %v2923
      %v2988 = vpack.c.bf16 %v2924, %v2924
      %v2989 = vpack.c.bf16 %v2925, %v2925
      %v2990 = vpack.c.bf16 %v2926, %v2926
      %v2991 = vpack.c.bf16 %v2927, %v2927
      %v2992 = vpack.c.bf16 %v2928, %v2928
      %v2993 = vpack.c.bf16 %v2929, %v2929
      %2994 = vst [vmem:[#allocation8] sm:$0xf] %v2930
      %2995 = vst [vmem:[#allocation8 + $0x4] sm:$0xf] %v2931
      %2996 = vst [vmem:[#allocation8 + $0x8] sm:$0xf] %v2932
      %2997 = vst [vmem:[#allocation8 + $0xc] sm:$0xf] %v2933
      %2998 = vst [vmem:[#allocation8 + $0x10] sm:$0xf] %v2934
      %2999 = vst [vmem:[#allocation8 + $0x14] sm:$0xf] %v2935
      %3000 = vst [vmem:[#allocation8 + $0x18] sm:$0xf] %v2936
      %3001 = vst [vmem:[#allocation8 + $0x1c] sm:$0xf] %v2937
      %3002 = vst [vmem:[#allocation8 + $0x20] sm:$0xf] %v2938
      %3003 = vst [vmem:[#allocation8 + $0x24] sm:$0xf] %v2939
      %3004 = vst [vmem:[#allocation8 + $0x28] sm:$0xf] %v2940
      %3005 = vst [vmem:[#allocation8 + $0x2c] sm:$0xf] %v2941
      %3006 = vst [vmem:[#allocation8 + $0x30] sm:$0xf] %v2942
      %3007 = vst [vmem:[#allocation8 + $0x34] sm:$0xf] %v2943
      %3008 = vst [vmem:[#allocation8 + $0x38] sm:$0xf] %v2944
      %3009 = vst [vmem:[#allocation8 + $0x3c] sm:$0xf] %v2945
      %3010 = vst [vmem:[#allocation8 + $0x40] sm:$0xf] %v2946
      %3011 = vst [vmem:[#allocation8 + $0x44] sm:$0xf] %v2947
      %3012 = vst [vmem:[#allocation8 + $0x48] sm:$0xf] %v2948
      %3013 = vst [vmem:[#allocation8 + $0x4c] sm:$0xf] %v2949
      %3014 = vst [vmem:[#allocation8 + $0x50] sm:$0xf] %v2950
      %3015 = vst [vmem:[#allocation8 + $0x54] sm:$0xf] %v2951
      %3016 = vst [vmem:[#allocation8 + $0x58] sm:$0xf] %v2952
      %3017 = vst [vmem:[#allocation8 + $0x5c] sm:$0xf] %v2953
      %3018 = vst [vmem:[#allocation8 + $0x60] sm:$0xf] %v2954
      %3019 = vst [vmem:[#allocation8 + $0x64] sm:$0xf] %v2955
      %3020 = vst [vmem:[#allocation8 + $0x68] sm:$0xf] %v2956
      %3021 = vst [vmem:[#allocation8 + $0x6c] sm:$0xf] %v2957
      %3022 = vst [vmem:[#allocation8 + $0x70] sm:$0xf] %v2958
      %3023 = vst [vmem:[#allocation8 + $0x74] sm:$0xf] %v2959
      %3024 = vst [vmem:[#allocation8 + $0x78] sm:$0xf] %v2960
      %3025 = vst [vmem:[#allocation8 + $0x7c] sm:$0xf] %v2961
      %3026 = vst [vmem:[#allocation8 + $0x80] sm:$0xf] %v2962
      %3027 = vst [vmem:[#allocation8 + $0x84] sm:$0xf] %v2963
      %3028 = vst [vmem:[#allocation8 + $0x88] sm:$0xf] %v2964
      %3029 = vst [vmem:[#allocation8 + $0x8c] sm:$0xf] %v2965
      %3030 = vst [vmem:[#allocation8 + $0x90] sm:$0xf] %v2966
      %3031 = vst [vmem:[#allocation8 + $0x94] sm:$0xf] %v2967
      %3032 = vst [vmem:[#allocation8 + $0x98] sm:$0xf] %v2968
      %3033 = vst [vmem:[#allocation8 + $0x9c] sm:$0xf] %v2969
      %3034 = vst [vmem:[#allocation8 + $0xa0] sm:$0xf] %v2970
      %3035 = vst [vmem:[#allocation8 + $0xa4] sm:$0xf] %v2971
      %3036 = vst [vmem:[#allocation8 + $0xa8] sm:$0xf] %v2972
      %3037 = vst [vmem:[#allocation8 + $0xac] sm:$0xf] %v2973
      %3038 = vst [vmem:[#allocation8 + $0xb0] sm:$0xf] %v2974
      %3039 = vst [vmem:[#allocation8 + $0xb4] sm:$0xf] %v2975
      %3040 = vst [vmem:[#allocation8 + $0xb8] sm:$0xf] %v2976
      %3041 = vst [vmem:[#allocation8 + $0xbc] sm:$0xf] %v2977
      %3042 = vst [vmem:[#allocation8 + $0xc0] sm:$0xf] %v2978
      %3043 = vst [vmem:[#allocation8 + $0xc4] sm:$0xf] %v2979
      %3044 = vst [vmem:[#allocation8 + $0xc8] sm:$0xf] %v2980
      %3045 = vst [vmem:[#allocation8 + $0xcc] sm:$0xf] %v2981
      %3046 = vst [vmem:[#allocation8 + $0xd0] sm:$0xf] %v2982
      %3047 = vst [vmem:[#allocation8 + $0xd4] sm:$0xf] %v2983
      %3048 = vst [vmem:[#allocation8 + $0xd8] sm:$0xf] %v2984
      %3049 = vst [vmem:[#allocation8 + $0xdc] sm:$0xf] %v2985
      %3050 = vst [vmem:[#allocation8 + $0xe0] sm:$0xf] %v2986
      %3051 = vst [vmem:[#allocation8 + $0xe4] sm:$0xf] %v2987
      %3052 = vst [vmem:[#allocation8 + $0xe8] sm:$0xf] %v2988
      %3053 = vst [vmem:[#allocation8 + $0xec] sm:$0xf] %v2989
      %3054 = vst [vmem:[#allocation8 + $0xf0] sm:$0xf] %v2990
      %3055 = vst [vmem:[#allocation8 + $0xf4] sm:$0xf] %v2991
      %3056 = vst [vmem:[#allocation8 + $0xf8] sm:$0xf] %v2992
      %3057 = vst [vmem:[#allocation8 + $0xfc] sm:$0xf] %v2993
    $region37: #{tpu_custom_call.1} parent=1 // pred_fallthru
      _
    // Predicated region
    $region38: #{tpu_custom_call.1} parent=1 // pred_check
      _
    $region39: #{tpu_custom_call.1} parent=1 // pred_check_branch
      %3059 = sbr.rel (0) target = $region41
    $region40: #{tpu_custom_call.1} parent=1 // pred_region
      %3061 = vsyncadd [#allocation5], 0
      %s3062 = sshll.u32 [#allocation8], 4
      %s3063 = int_to_ptr.vmem [resolvable:$true] %s3062
      %s3064 = sshll.u32 %s5, 4
      %s3065 = int_to_ptr.hbm [resolvable:$true] %s3064
      %3070 = dma.vmem_to_hbm [thread:$0]  %s3063, 4096, %s3065, [#allocation5], 64, 64, 4
    $region41: #{tpu_custom_call.1} parent=1 // pred_fallthru
      _
    // Predicated region
    $region42: #{tpu_custom_call.1} parent=1 // pred_check
      _
    $region43: #{tpu_custom_call.1} parent=1 // pred_check_branch
      %3072 = sbr.rel (0) target = $region45
    $region44: #{tpu_custom_call.1} parent=1 // pred_region
      %3074 = dma.done [#allocation5], 4096
    $region45: #{tpu_custom_call.1} parent=1 // pred_fallthru
      _
    %3075 = vsyncpa [#allocation4], 1
    %3076 = vsyncpa [#allocation7], 1
    %3077 = vsyncpa [#allocation5], 1

</llo_original>
